<compile_context>
chip_gen: v7x
topology: tpu7x:2x2x1
jax: 0.10.0
libtpu: 0.0.40
codegen_flags: <defaults>
</compile_context>

<pallas_src>
import jax
import jax.numpy as jnp
from jax import lax
from jax.experimental import pallas as pl
from jax.experimental.pallas import tpu as pltpu  # noqa: F401  (TPU backend)

F32 = jnp.float32


def _dot(a, b):
    # Default matmul precision: lets the MXU use its native passes instead of the
    # multi-pass f32 emulation forced by precision=HIGHEST.
    return jnp.dot(a, b, preferred_element_type=jnp.float32)


# ---------------------------------------------------------------------------
# Encoder: single pallas_call (no grid). Whole (T,B,E) input is VMEM-resident,
# time loop runs inside the kernel (fully unrolled for short T). Fused gates:
# one x@Wx and one h@Wh per step. Only the final hidden state is written out.
# ---------------------------------------------------------------------------
def _gru_encoder_kernel(x_ref, wx_ref, wh_ref, bi_ref, bh_ref, hfin_ref):
    T, B, _ = x_ref.shape
    H = wh_ref.shape[0]
    wx = wx_ref[...]        # (E, 3H) — loaded once, loop-invariant
    wh = wh_ref[...]        # (H, 3H)
    bi = bi_ref[...]        # (1, 3H)
    bh = bh_ref[...]        # (1, 3H)

    def step(t, h):
        x = x_ref[t]                                   # (B, E)
        gi = _dot(x, wx) + bi                          # (B, 3H) fused input gates
        gh = _dot(h, wh) + bh                          # (B, 3H) fused hidden gates
        r = jax.nn.sigmoid(gi[:, :H] + gh[:, :H])
        z = jax.nn.sigmoid(gi[:, H:2 * H] + gh[:, H:2 * H])
        n = jnp.tanh(gi[:, 2 * H:] + r * gh[:, 2 * H:])
        return (1.0 - z) * n + z * h

    h0 = jnp.zeros((B, H), F32)
    hfin_ref[...] = lax.fori_loop(0, T, step, h0, unroll=True)


def gru_encoder_pallas(emb_tbe, p):
    B = emb_tbe.shape[1]
    H = p["wh"].shape[0]
    return pl.pallas_call(
        _gru_encoder_kernel,
        out_shape=jax.ShapeDtypeStruct((B, H), F32),
    )(emb_tbe, p["wx"], p["wh"], p["bi"], p["bh"])


# ---------------------------------------------------------------------------
# Decoder: GRU whose per-step input is [embedding ; context]. The context term
# (c @ Wc + b_i) is constant over time -> computed once before the loop.
# Emits the full hidden-state sequence (T, B, H); the vocab head is applied
# outside as one large matmul.
# ---------------------------------------------------------------------------
def _gru_decoder_kernel(x_ref, ctx_ref, we_ref, wc_ref, wh_ref,
                        bi_ref, bh_ref, hseq_ref):
    T = x_ref.shape[0]
    H = wh_ref.shape[0]
    we = we_ref[...]        # (E, 3H)
    wh = wh_ref[...]        # (H, 3H)
    bh = bh_ref[...]        # (1, 3H)
    ctx = ctx_ref[...]      # (B, H)   encoder final hidden == initial state
    gc = _dot(ctx, wc_ref[...]) + bi_ref[...]          # (B, 3H) hoisted out of loop

    def step(t, h):
        x = x_ref[t]                                   # (B, E)
        gi = _dot(x, we) + gc                          # (B, 3H)
        gh = _dot(h, wh) + bh                          # (B, 3H)
        r = jax.nn.sigmoid(gi[:, :H] + gh[:, :H])
        z = jax.nn.sigmoid(gi[:, H:2 * H] + gh[:, H:2 * H])
        n = jnp.tanh(gi[:, 2 * H:] + r * gh[:, 2 * H:])
        h_new = (1.0 - z) * n + z * h
        hseq_ref[t] = h_new
        return h_new

    lax.fori_loop(0, T, step, ctx, unroll=True)


def gru_decoder_pallas(emb_tbe, ctx_bh, p):
    T, B, _ = emb_tbe.shape
    H = ctx_bh.shape[-1]
    return pl.pallas_call(
        _gru_decoder_kernel,
        out_shape=jax.ShapeDtypeStruct((T, B, H), F32),
    )(emb_tbe, ctx_bh, p["we"], p["wc"], p["wh"], p["bi"], p["bh"])


# ---------------------------------------------------------------------------
# Vocab head: one big (B*T, H) @ (H, V) matmul, lane-dense output.
# (For production-sized V this should be tiled over V with a grid/BlockSpec to
#  respect v7x's 64 MiB VMEM; unnecessary at these sizes.)
# ---------------------------------------------------------------------------
def _vocab_proj_kernel(h_ref, w_ref, b_ref, out_ref):
    out_ref[...] = _dot(h_ref[...], w_ref[...]) + b_ref[...]


def vocab_proj_pallas(h_2d, wout, bout):
    N = h_2d.shape[0]
    V = wout.shape[1]
    return pl.pallas_call(
        _vocab_proj_kernel,
        out_shape=jax.ShapeDtypeStruct((N, V), F32),
    )(h_2d, wout, bout)


# ---------------------------------------------------------------------------
# EncoderDecoder.forward equivalent
# ---------------------------------------------------------------------------
def encoder_decoder_forward(src_tokens, tgt_tokens, params):
    # encoder_outputs = self.encoder(input): embed directly time-major (gather on
    # transposed ids — no separate transpose op on the embedded tensor).
    src_emb = params["enc_emb"][src_tokens.T]          # (T, B, E)
    enc_h = gru_encoder_pallas(src_emb, params["enc"])  # (B, H)

    # state = self.decoder.init_state(encoder_outputs) -> final encoder hidden;
    # it is also the decoder context.
    tgt_emb = params["dec_emb"][tgt_tokens.T]           # (T, B, E)
    h_seq = gru_decoder_pallas(tgt_emb, enc_h, params["dec"])   # (T, B, H)

    B, T = tgt_tokens.shape
    H = h_seq.shape[-1]
    V = params["dec"]["wout"].shape[1]
    # Batch-major flatten of the small hidden tensor (H << V, so this relayout is
    # cheap) -> one MXU-friendly projection -> free reshape to (B, T, V).
    h_bt = jnp.transpose(h_seq, (1, 0, 2)).reshape(B * T, H)
    logits = vocab_proj_pallas(h_bt, params["dec"]["wout"], params["dec"]["bout"])
    return logits.reshape(B, T, V)


# ---------------------------------------------------------------------------
# Pure-JAX reference (lax.scan) for correctness checking
# ---------------------------------------------------------------------------
def _ref_forward(src_tokens, tgt_tokens, params):
    e, d = params["enc"], params["dec"]
    src_emb = params["enc_emb"][src_tokens.T]
    tgt_emb = params["dec_emb"][tgt_tokens.T]
    B = src_tokens.shape[0]
    H = e["wh"].shape[0]

    def cell(h, gi, gh):
        r = jax.nn.sigmoid(gi[:, :H] + gh[:, :H])
        z = jax.nn.sigmoid(gi[:, H:2 * H] + gh[:, H:2 * H])
        n = jnp.tanh(gi[:, 2 * H:] + r * gh[:, 2 * H:])
        return (1.0 - z) * n + z * h

    def enc_step(h, x):
        h = cell(h, _dot(x, e["wx"]) + e["bi"], _dot(h, e["wh"]) + e["bh"])
        return h, None

    h_enc, _ = lax.scan(enc_step, jnp.zeros((B, H), F32), src_emb)

    gc = _dot(h_enc, d["wc"]) + d["bi"]

    def dec_step(h, x):
        h = cell(h, _dot(x, d["we"]) + gc, _dot(h, d["wh"]) + d["bh"])
        return h, h

    _, hs = lax.scan(dec_step, h_enc, tgt_emb)           # (T, B, H)
    logits = jnp.einsum("tbh,hv->btv", hs, d["wout"],
                        preferred_element_type=jnp.float32) + d["bout"]
    return logits


# ---------------------------------------------------------------------------
# Deterministic parameter init (fused-gate layout)
# ---------------------------------------------------------------------------
def init_params(key, vocab_src, vocab_tgt, embed, hidden):
    ks = iter(jax.random.split(key, 16))
    nrm = lambda shape: (0.1 * jax.random.normal(next(ks), shape)).astype(F32)

    enc = dict(
        wx=nrm((embed, 3 * hidden)), wh=nrm((hidden, 3 * hidden)),
        bi=nrm((1, 3 * hidden)), bh=nrm((1, 3 * hidden)),
    )
    dec = dict(
        we=nrm((embed, 3 * hidden)), wc=nrm((hidden, 3 * hidden)),
        wh=nrm((hidden, 3 * hidden)),
        bi=nrm((1, 3 * hidden)), bh=nrm((1, 3 * hidden)),
        wout=nrm((hidden, vocab_tgt)), bout=nrm((1, vocab_tgt)),
    )
    return dict(
        enc_emb=nrm((vocab_src, embed)),
        dec_emb=nrm((vocab_tgt, embed)),
        enc=enc,
        dec=dec,
    )


if __name__ == "__main__":
    B, T_SRC, T_TGT = 4, 8, 8
    VOCAB_SRC, VOCAB_TGT, EMBED, HIDDEN = 16, 16, 32, 32

    key = jax.random.PRNGKey(0)
    k_par, k_src, k_tgt = jax.random.split(key, 3)

    params = init_params(k_par, VOCAB_SRC, VOCAB_TGT, EMBED, HIDDEN)
    src_tokens = jax.random.randint(k_src, (B, T_SRC), 0, VOCAB_SRC, dtype=jnp.int32)
    tgt_tokens = jax.random.randint(k_tgt, (B, T_TGT), 0, VOCAB_TGT, dtype=jnp.int32)

    fwd = jax.jit(encoder_decoder_forward)
    out = jax.block_until_ready(fwd(src_tokens, tgt_tokens, params))

    ref = jax.block_until_ready(_ref_forward(src_tokens, tgt_tokens, params))
    assert out.shape == (B, T_TGT, VOCAB_TGT), out.shape
    max_err = float(jnp.max(jnp.abs(out - ref)))
    assert max_err < 1e-2, f"mismatch vs reference: {max_err}"

    print("KERNEL_OK")
</pallas_src>

<mosaic_0001>
module attributes {stable_mosaic.version = 11 : i64} {
  func.func @_gru_encoder_kernel(%arg0: memref<8x4x32xf32, #tpu.memory_space<vmem>>, %arg1: memref<32x96xf32, #tpu.memory_space<vmem>>, %arg2: memref<32x96xf32, #tpu.memory_space<vmem>>, %arg3: memref<1x96xf32, #tpu.memory_space<vmem>>, %arg4: memref<1x96xf32, #tpu.memory_space<vmem>>, %arg5: memref<4x32xf32, #tpu.memory_space<vmem>>) attributes {dimension_semantics = [], scalar_prefetch = 0 : i64, scratch_operands = 0 : i64, tpu.core_type = #tpu.core_type<tc>} {
    %c0 = arith.constant 0 : index
    %c0_0 = arith.constant 0 : index
    %0 = vector.load %arg1[%c0, %c0_0] : memref<32x96xf32, #tpu.memory_space<vmem>>, vector<32x96xf32>
    %c0_1 = arith.constant 0 : index
    %c0_2 = arith.constant 0 : index
    %1 = vector.load %arg2[%c0_1, %c0_2] : memref<32x96xf32, #tpu.memory_space<vmem>>, vector<32x96xf32>
    %c0_3 = arith.constant 0 : index
    %c0_4 = arith.constant 0 : index
    %2 = vector.load %arg3[%c0_3, %c0_4] : memref<1x96xf32, #tpu.memory_space<vmem>>, vector<1x96xf32>
    %c0_5 = arith.constant 0 : index
    %c0_6 = arith.constant 0 : index
    %3 = vector.load %arg4[%c0_5, %c0_6] : memref<1x96xf32, #tpu.memory_space<vmem>>, vector<1x96xf32>
    %cst = arith.constant 0.000000e+00 : f32
    %4 = vector.broadcast %cst : f32 to vector<4x32xf32>
    %c0_i32 = arith.constant 0 : i32
    %5 = arith.index_cast %c0_i32 : i32 to index
    %c0_7 = arith.constant 0 : index
    %c0_8 = arith.constant 0 : index
    %6 = vector.load %arg0[%5, %c0_7, %c0_8] : memref<8x4x32xf32, #tpu.memory_space<vmem>>, vector<1x4x32xf32>
    %7 = vector.shape_cast %6 : vector<1x4x32xf32> to vector<4x32xf32>
    %cst_9 = arith.constant dense<0.000000e+00> : vector<4x96xf32>
    %8 = tpu.matmul %7, %0, %cst_9 {dimension_numbers = #tpu.dot_dimension_numbers<[1], [0], [0], [1], [0, 0, 1, 1], [], []>} : vector<4x32xf32>, vector<32x96xf32>, vector<4x96xf32> -> vector<4x96xf32>
    %9 = vector.broadcast %2 : vector<1x96xf32> to vector<4x96xf32>
    %10 = arith.addf %8, %9 : vector<4x96xf32>
    %cst_10 = arith.constant dense<0.000000e+00> : vector<4x96xf32>
    %11 = tpu.matmul %4, %1, %cst_10 {dimension_numbers = #tpu.dot_dimension_numbers<[1], [0], [0], [1], [0, 0, 1, 1], [], []>} : vector<4x32xf32>, vector<32x96xf32>, vector<4x96xf32> -> vector<4x96xf32>
    %12 = vector.broadcast %3 : vector<1x96xf32> to vector<4x96xf32>
    %13 = arith.addf %11, %12 : vector<4x96xf32>
    %14 = vector.extract_strided_slice %10 {offsets = [0, 0], sizes = [4, 32], strides = [1, 1]} : vector<4x96xf32> to vector<4x32xf32>
    %15 = vector.extract_strided_slice %13 {offsets = [0, 0], sizes = [4, 32], strides = [1, 1]} : vector<4x96xf32> to vector<4x32xf32>
    %16 = arith.addf %14, %15 : vector<4x32xf32>
    %17 = arith.negf %16 : vector<4x32xf32>
    %18 = math.exp %17 : vector<4x32xf32>
    %cst_11 = arith.constant 1.000000e+00 : f32
    %19 = vector.broadcast %cst_11 : f32 to vector<4x32xf32>
    %20 = arith.addf %19, %18 : vector<4x32xf32>
    %21 = arith.divf %19, %20 : vector<4x32xf32>
    %22 = vector.extract_strided_slice %10 {offsets = [0, 32], sizes = [4, 32], strides = [1, 1]} : vector<4x96xf32> to vector<4x32xf32>
    %23 = vector.extract_strided_slice %13 {offsets = [0, 32], sizes = [4, 32], strides = [1, 1]} : vector<4x96xf32> to vector<4x32xf32>
    %24 = arith.addf %22, %23 : vector<4x32xf32>
    %25 = arith.negf %24 : vector<4x32xf32>
    %26 = math.exp %25 : vector<4x32xf32>
    %cst_12 = arith.constant 1.000000e+00 : f32
    %27 = vector.broadcast %cst_12 : f32 to vector<4x32xf32>
    %28 = arith.addf %27, %26 : vector<4x32xf32>
    %29 = arith.divf %27, %28 : vector<4x32xf32>
    %30 = vector.extract_strided_slice %10 {offsets = [0, 64], sizes = [4, 32], strides = [1, 1]} : vector<4x96xf32> to vector<4x32xf32>
    %31 = vector.extract_strided_slice %13 {offsets = [0, 64], sizes = [4, 32], strides = [1, 1]} : vector<4x96xf32> to vector<4x32xf32>
    %32 = arith.mulf %21, %31 : vector<4x32xf32>
    %33 = arith.addf %30, %32 : vector<4x32xf32>
    %34 = math.tanh %33 : vector<4x32xf32>
    %cst_13 = arith.constant 1.000000e+00 : f32
    %35 = vector.broadcast %cst_13 : f32 to vector<4x32xf32>
    %36 = arith.subf %35, %29 : vector<4x32xf32>
    %37 = arith.mulf %36, %34 : vector<4x32xf32>
    %38 = arith.mulf %29, %4 : vector<4x32xf32>
    %39 = arith.addf %37, %38 : vector<4x32xf32>
    %c1_i32 = arith.constant 1 : i32
    %40 = arith.index_cast %c1_i32 : i32 to index
    %c0_14 = arith.constant 0 : index
    %c0_15 = arith.constant 0 : index
    %41 = vector.load %arg0[%40, %c0_14, %c0_15] : memref<8x4x32xf32, #tpu.memory_space<vmem>>, vector<1x4x32xf32>
    %42 = vector.shape_cast %41 : vector<1x4x32xf32> to vector<4x32xf32>
    %cst_16 = arith.constant dense<0.000000e+00> : vector<4x96xf32>
    %43 = tpu.matmul %42, %0, %cst_16 {dimension_numbers = #tpu.dot_dimension_numbers<[1], [0], [0], [1], [0, 0, 1, 1], [], []>} : vector<4x32xf32>, vector<32x96xf32>, vector<4x96xf32> -> vector<4x96xf32>
    %44 = vector.broadcast %2 : vector<1x96xf32> to vector<4x96xf32>
    %45 = arith.addf %43, %44 : vector<4x96xf32>
    %cst_17 = arith.constant dense<0.000000e+00> : vector<4x96xf32>
    %46 = tpu.matmul %39, %1, %cst_17 {dimension_numbers = #tpu.dot_dimension_numbers<[1], [0], [0], [1], [0, 0, 1, 1], [], []>} : vector<4x32xf32>, vector<32x96xf32>, vector<4x96xf32> -> vector<4x96xf32>
    %47 = vector.broadcast %3 : vector<1x96xf32> to vector<4x96xf32>
    %48 = arith.addf %46, %47 : vector<4x96xf32>
    %49 = vector.extract_strided_slice %45 {offsets = [0, 0], sizes = [4, 32], strides = [1, 1]} : vector<4x96xf32> to vector<4x32xf32>
    %50 = vector.extract_strided_slice %48 {offsets = [0, 0], sizes = [4, 32], strides = [1, 1]} : vector<4x96xf32> to vector<4x32xf32>
    %51 = arith.addf %49, %50 : vector<4x32xf32>
    %52 = arith.negf %51 : vector<4x32xf32>
    %53 = math.exp %52 : vector<4x32xf32>
    %cst_18 = arith.constant 1.000000e+00 : f32
    %54 = vector.broadcast %cst_18 : f32 to vector<4x32xf32>
    %55 = arith.addf %54, %53 : vector<4x32xf32>
    %56 = arith.divf %54, %55 : vector<4x32xf32>
    %57 = vector.extract_strided_slice %45 {offsets = [0, 32], sizes = [4, 32], strides = [1, 1]} : vector<4x96xf32> to vector<4x32xf32>
    %58 = vector.extract_strided_slice %48 {offsets = [0, 32], sizes = [4, 32], strides = [1, 1]} : vector<4x96xf32> to vector<4x32xf32>
    %59 = arith.addf %57, %58 : vector<4x32xf32>
    %60 = arith.negf %59 : vector<4x32xf32>
    %61 = math.exp %60 : vector<4x32xf32>
    %cst_19 = arith.constant 1.000000e+00 : f32
    %62 = vector.broadcast %cst_19 : f32 to vector<4x32xf32>
    %63 = arith.addf %62, %61 : vector<4x32xf32>
    %64 = arith.divf %62, %63 : vector<4x32xf32>
    %65 = vector.extract_strided_slice %45 {offsets = [0, 64], sizes = [4, 32], strides = [1, 1]} : vector<4x96xf32> to vector<4x32xf32>
    %66 = vector.extract_strided_slice %48 {offsets = [0, 64], sizes = [4, 32], strides = [1, 1]} : vector<4x96xf32> to vector<4x32xf32>
    %67 = arith.mulf %56, %66 : vector<4x32xf32>
    %68 = arith.addf %65, %67 : vector<4x32xf32>
    %69 = math.tanh %68 : vector<4x32xf32>
    %cst_20 = arith.constant 1.000000e+00 : f32
    %70 = vector.broadcast %cst_20 : f32 to vector<4x32xf32>
    %71 = arith.subf %70, %64 : vector<4x32xf32>
    %72 = arith.mulf %71, %69 : vector<4x32xf32>
    %73 = arith.mulf %64, %39 : vector<4x32xf32>
    %74 = arith.addf %72, %73 : vector<4x32xf32>
    %c2_i32 = arith.constant 2 : i32
    %75 = arith.index_cast %c2_i32 : i32 to index
    %c0_21 = arith.constant 0 : index
    %c0_22 = arith.constant 0 : index
    %76 = vector.load %arg0[%75, %c0_21, %c0_22] : memref<8x4x32xf32, #tpu.memory_space<vmem>>, vector<1x4x32xf32>
    %77 = vector.shape_cast %76 : vector<1x4x32xf32> to vector<4x32xf32>
    %cst_23 = arith.constant dense<0.000000e+00> : vector<4x96xf32>
    %78 = tpu.matmul %77, %0, %cst_23 {dimension_numbers = #tpu.dot_dimension_numbers<[1], [0], [0], [1], [0, 0, 1, 1], [], []>} : vector<4x32xf32>, vector<32x96xf32>, vector<4x96xf32> -> vector<4x96xf32>
    %79 = vector.broadcast %2 : vector<1x96xf32> to vector<4x96xf32>
    %80 = arith.addf %78, %79 : vector<4x96xf32>
    %cst_24 = arith.constant dense<0.000000e+00> : vector<4x96xf32>
    %81 = tpu.matmul %74, %1, %cst_24 {dimension_numbers = #tpu.dot_dimension_numbers<[1], [0], [0], [1], [0, 0, 1, 1], [], []>} : vector<4x32xf32>, vector<32x96xf32>, vector<4x96xf32> -> vector<4x96xf32>
    %82 = vector.broadcast %3 : vector<1x96xf32> to vector<4x96xf32>
    %83 = arith.addf %81, %82 : vector<4x96xf32>
    %84 = vector.extract_strided_slice %80 {offsets = [0, 0], sizes = [4, 32], strides = [1, 1]} : vector<4x96xf32> to vector<4x32xf32>
    %85 = vector.extract_strided_slice %83 {offsets = [0, 0], sizes = [4, 32], strides = [1, 1]} : vector<4x96xf32> to vector<4x32xf32>
    %86 = arith.addf %84, %85 : vector<4x32xf32>
    %87 = arith.negf %86 : vector<4x32xf32>
    %88 = math.exp %87 : vector<4x32xf32>
    %cst_25 = arith.constant 1.000000e+00 : f32
    %89 = vector.broadcast %cst_25 : f32 to vector<4x32xf32>
    %90 = arith.addf %89, %88 : vector<4x32xf32>
    %91 = arith.divf %89, %90 : vector<4x32xf32>
    %92 = vector.extract_strided_slice %80 {offsets = [0, 32], sizes = [4, 32], strides = [1, 1]} : vector<4x96xf32> to vector<4x32xf32>
    %93 = vector.extract_strided_slice %83 {offsets = [0, 32], sizes = [4, 32], strides = [1, 1]} : vector<4x96xf32> to vector<4x32xf32>
    %94 = arith.addf %92, %93 : vector<4x32xf32>
    %95 = arith.negf %94 : vector<4x32xf32>
    %96 = math.exp %95 : vector<4x32xf32>
    %cst_26 = arith.constant 1.000000e+00 : f32
    %97 = vector.broadcast %cst_26 : f32 to vector<4x32xf32>
    %98 = arith.addf %97, %96 : vector<4x32xf32>
    %99 = arith.divf %97, %98 : vector<4x32xf32>
    %100 = vector.extract_strided_slice %80 {offsets = [0, 64], sizes = [4, 32], strides = [1, 1]} : vector<4x96xf32> to vector<4x32xf32>
    %101 = vector.extract_strided_slice %83 {offsets = [0, 64], sizes = [4, 32], strides = [1, 1]} : vector<4x96xf32> to vector<4x32xf32>
    %102 = arith.mulf %91, %101 : vector<4x32xf32>
    %103 = arith.addf %100, %102 : vector<4x32xf32>
    %104 = math.tanh %103 : vector<4x32xf32>
    %cst_27 = arith.constant 1.000000e+00 : f32
    %105 = vector.broadcast %cst_27 : f32 to vector<4x32xf32>
    %106 = arith.subf %105, %99 : vector<4x32xf32>
    %107 = arith.mulf %106, %104 : vector<4x32xf32>
    %108 = arith.mulf %99, %74 : vector<4x32xf32>
    %109 = arith.addf %107, %108 : vector<4x32xf32>
    %c3_i32 = arith.constant 3 : i32
    %110 = arith.index_cast %c3_i32 : i32 to index
    %c0_28 = arith.constant 0 : index
    %c0_29 = arith.constant 0 : index
    %111 = vector.load %arg0[%110, %c0_28, %c0_29] : memref<8x4x32xf32, #tpu.memory_space<vmem>>, vector<1x4x32xf32>
    %112 = vector.shape_cast %111 : vector<1x4x32xf32> to vector<4x32xf32>
    %cst_30 = arith.constant dense<0.000000e+00> : vector<4x96xf32>
    %113 = tpu.matmul %112, %0, %cst_30 {dimension_numbers = #tpu.dot_dimension_numbers<[1], [0], [0], [1], [0, 0, 1, 1], [], []>} : vector<4x32xf32>, vector<32x96xf32>, vector<4x96xf32> -> vector<4x96xf32>
    %114 = vector.broadcast %2 : vector<1x96xf32> to vector<4x96xf32>
    %115 = arith.addf %113, %114 : vector<4x96xf32>
    %cst_31 = arith.constant dense<0.000000e+00> : vector<4x96xf32>
    %116 = tpu.matmul %109, %1, %cst_31 {dimension_numbers = #tpu.dot_dimension_numbers<[1], [0], [0], [1], [0, 0, 1, 1], [], []>} : vector<4x32xf32>, vector<32x96xf32>, vector<4x96xf32> -> vector<4x96xf32>
    %117 = vector.broadcast %3 : vector<1x96xf32> to vector<4x96xf32>
    %118 = arith.addf %116, %117 : vector<4x96xf32>
    %119 = vector.extract_strided_slice %115 {offsets = [0, 0], sizes = [4, 32], strides = [1, 1]} : vector<4x96xf32> to vector<4x32xf32>
    %120 = vector.extract_strided_slice %118 {offsets = [0, 0], sizes = [4, 32], strides = [1, 1]} : vector<4x96xf32> to vector<4x32xf32>
    %121 = arith.addf %119, %120 : vector<4x32xf32>
    %122 = arith.negf %121 : vector<4x32xf32>
    %123 = math.exp %122 : vector<4x32xf32>
    %cst_32 = arith.constant 1.000000e+00 : f32
    %124 = vector.broadcast %cst_32 : f32 to vector<4x32xf32>
    %125 = arith.addf %124, %123 : vector<4x32xf32>
    %126 = arith.divf %124, %125 : vector<4x32xf32>
    %127 = vector.extract_strided_slice %115 {offsets = [0, 32], sizes = [4, 32], strides = [1, 1]} : vector<4x96xf32> to vector<4x32xf32>
    %128 = vector.extract_strided_slice %118 {offsets = [0, 32], sizes = [4, 32], strides = [1, 1]} : vector<4x96xf32> to vector<4x32xf32>
    %129 = arith.addf %127, %128 : vector<4x32xf32>
    %130 = arith.negf %129 : vector<4x32xf32>
    %131 = math.exp %130 : vector<4x32xf32>
    %cst_33 = arith.constant 1.000000e+00 : f32
    %132 = vector.broadcast %cst_33 : f32 to vector<4x32xf32>
    %133 = arith.addf %132, %131 : vector<4x32xf32>
    %134 = arith.divf %132, %133 : vector<4x32xf32>
    %135 = vector.extract_strided_slice %115 {offsets = [0, 64], sizes = [4, 32], strides = [1, 1]} : vector<4x96xf32> to vector<4x32xf32>
    %136 = vector.extract_strided_slice %118 {offsets = [0, 64], sizes = [4, 32], strides = [1, 1]} : vector<4x96xf32> to vector<4x32xf32>
    %137 = arith.mulf %126, %136 : vector<4x32xf32>
    %138 = arith.addf %135, %137 : vector<4x32xf32>
    %139 = math.tanh %138 : vector<4x32xf32>
    %cst_34 = arith.constant 1.000000e+00 : f32
    %140 = vector.broadcast %cst_34 : f32 to vector<4x32xf32>
    %141 = arith.subf %140, %134 : vector<4x32xf32>
    %142 = arith.mulf %141, %139 : vector<4x32xf32>
    %143 = arith.mulf %134, %109 : vector<4x32xf32>
    %144 = arith.addf %142, %143 : vector<4x32xf32>
    %c4_i32 = arith.constant 4 : i32
    %145 = arith.index_cast %c4_i32 : i32 to index
    %c0_35 = arith.constant 0 : index
    %c0_36 = arith.constant 0 : index
    %146 = vector.load %arg0[%145, %c0_35, %c0_36] : memref<8x4x32xf32, #tpu.memory_space<vmem>>, vector<1x4x32xf32>
    %147 = vector.shape_cast %146 : vector<1x4x32xf32> to vector<4x32xf32>
    %cst_37 = arith.constant dense<0.000000e+00> : vector<4x96xf32>
    %148 = tpu.matmul %147, %0, %cst_37 {dimension_numbers = #tpu.dot_dimension_numbers<[1], [0], [0], [1], [0, 0, 1, 1], [], []>} : vector<4x32xf32>, vector<32x96xf32>, vector<4x96xf32> -> vector<4x96xf32>
    %149 = vector.broadcast %2 : vector<1x96xf32> to vector<4x96xf32>
    %150 = arith.addf %148, %149 : vector<4x96xf32>
    %cst_38 = arith.constant dense<0.000000e+00> : vector<4x96xf32>
    %151 = tpu.matmul %144, %1, %cst_38 {dimension_numbers = #tpu.dot_dimension_numbers<[1], [0], [0], [1], [0, 0, 1, 1], [], []>} : vector<4x32xf32>, vector<32x96xf32>, vector<4x96xf32> -> vector<4x96xf32>
    %152 = vector.broadcast %3 : vector<1x96xf32> to vector<4x96xf32>
    %153 = arith.addf %151, %152 : vector<4x96xf32>
    %154 = vector.extract_strided_slice %150 {offsets = [0, 0], sizes = [4, 32], strides = [1, 1]} : vector<4x96xf32> to vector<4x32xf32>
    %155 = vector.extract_strided_slice %153 {offsets = [0, 0], sizes = [4, 32], strides = [1, 1]} : vector<4x96xf32> to vector<4x32xf32>
    %156 = arith.addf %154, %155 : vector<4x32xf32>
    %157 = arith.negf %156 : vector<4x32xf32>
    %158 = math.exp %157 : vector<4x32xf32>
    %cst_39 = arith.constant 1.000000e+00 : f32
    %159 = vector.broadcast %cst_39 : f32 to vector<4x32xf32>
    %160 = arith.addf %159, %158 : vector<4x32xf32>
    %161 = arith.divf %159, %160 : vector<4x32xf32>
    %162 = vector.extract_strided_slice %150 {offsets = [0, 32], sizes = [4, 32], strides = [1, 1]} : vector<4x96xf32> to vector<4x32xf32>
    %163 = vector.extract_strided_slice %153 {offsets = [0, 32], sizes = [4, 32], strides = [1, 1]} : vector<4x96xf32> to vector<4x32xf32>
    %164 = arith.addf %162, %163 : vector<4x32xf32>
    %165 = arith.negf %164 : vector<4x32xf32>
    %166 = math.exp %165 : vector<4x32xf32>
    %cst_40 = arith.constant 1.000000e+00 : f32
    %167 = vector.broadcast %cst_40 : f32 to vector<4x32xf32>
    %168 = arith.addf %167, %166 : vector<4x32xf32>
    %169 = arith.divf %167, %168 : vector<4x32xf32>
    %170 = vector.extract_strided_slice %150 {offsets = [0, 64], sizes = [4, 32], strides = [1, 1]} : vector<4x96xf32> to vector<4x32xf32>
    %171 = vector.extract_strided_slice %153 {offsets = [0, 64], sizes = [4, 32], strides = [1, 1]} : vector<4x96xf32> to vector<4x32xf32>
    %172 = arith.mulf %161, %171 : vector<4x32xf32>
    %173 = arith.addf %170, %172 : vector<4x32xf32>
    %174 = math.tanh %173 : vector<4x32xf32>
    %cst_41 = arith.constant 1.000000e+00 : f32
    %175 = vector.broadcast %cst_41 : f32 to vector<4x32xf32>
    %176 = arith.subf %175, %169 : vector<4x32xf32>
    %177 = arith.mulf %176, %174 : vector<4x32xf32>
    %178 = arith.mulf %169, %144 : vector<4x32xf32>
    %179 = arith.addf %177, %178 : vector<4x32xf32>
    %c5_i32 = arith.constant 5 : i32
    %180 = arith.index_cast %c5_i32 : i32 to index
    %c0_42 = arith.constant 0 : index
    %c0_43 = arith.constant 0 : index
    %181 = vector.load %arg0[%180, %c0_42, %c0_43] : memref<8x4x32xf32, #tpu.memory_space<vmem>>, vector<1x4x32xf32>
    %182 = vector.shape_cast %181 : vector<1x4x32xf32> to vector<4x32xf32>
    %cst_44 = arith.constant dense<0.000000e+00> : vector<4x96xf32>
    %183 = tpu.matmul %182, %0, %cst_44 {dimension_numbers = #tpu.dot_dimension_numbers<[1], [0], [0], [1], [0, 0, 1, 1], [], []>} : vector<4x32xf32>, vector<32x96xf32>, vector<4x96xf32> -> vector<4x96xf32>
    %184 = vector.broadcast %2 : vector<1x96xf32> to vector<4x96xf32>
    %185 = arith.addf %183, %184 : vector<4x96xf32>
    %cst_45 = arith.constant dense<0.000000e+00> : vector<4x96xf32>
    %186 = tpu.matmul %179, %1, %cst_45 {dimension_numbers = #tpu.dot_dimension_numbers<[1], [0], [0], [1], [0, 0, 1, 1], [], []>} : vector<4x32xf32>, vector<32x96xf32>, vector<4x96xf32> -> vector<4x96xf32>
    %187 = vector.broadcast %3 : vector<1x96xf32> to vector<4x96xf32>
    %188 = arith.addf %186, %187 : vector<4x96xf32>
    %189 = vector.extract_strided_slice %185 {offsets = [0, 0], sizes = [4, 32], strides = [1, 1]} : vector<4x96xf32> to vector<4x32xf32>
    %190 = vector.extract_strided_slice %188 {offsets = [0, 0], sizes = [4, 32], strides = [1, 1]} : vector<4x96xf32> to vector<4x32xf32>
    %191 = arith.addf %189, %190 : vector<4x32xf32>
    %192 = arith.negf %191 : vector<4x32xf32>
    %193 = math.exp %192 : vector<4x32xf32>
    %cst_46 = arith.constant 1.000000e+00 : f32
    %194 = vector.broadcast %cst_46 : f32 to vector<4x32xf32>
    %195 = arith.addf %194, %193 : vector<4x32xf32>
    %196 = arith.divf %194, %195 : vector<4x32xf32>
    %197 = vector.extract_strided_slice %185 {offsets = [0, 32], sizes = [4, 32], strides = [1, 1]} : vector<4x96xf32> to vector<4x32xf32>
    %198 = vector.extract_strided_slice %188 {offsets = [0, 32], sizes = [4, 32], strides = [1, 1]} : vector<4x96xf32> to vector<4x32xf32>
    %199 = arith.addf %197, %198 : vector<4x32xf32>
    %200 = arith.negf %199 : vector<4x32xf32>
    %201 = math.exp %200 : vector<4x32xf32>
    %cst_47 = arith.constant 1.000000e+00 : f32
    %202 = vector.broadcast %cst_47 : f32 to vector<4x32xf32>
    %203 = arith.addf %202, %201 : vector<4x32xf32>
    %204 = arith.divf %202, %203 : vector<4x32xf32>
    %205 = vector.extract_strided_slice %185 {offsets = [0, 64], sizes = [4, 32], strides = [1, 1]} : vector<4x96xf32> to vector<4x32xf32>
    %206 = vector.extract_strided_slice %188 {offsets = [0, 64], sizes = [4, 32], strides = [1, 1]} : vector<4x96xf32> to vector<4x32xf32>
    %207 = arith.mulf %196, %206 : vector<4x32xf32>
    %208 = arith.addf %205, %207 : vector<4x32xf32>
    %209 = math.tanh %208 : vector<4x32xf32>
    %cst_48 = arith.constant 1.000000e+00 : f32
    %210 = vector.broadcast %cst_48 : f32 to vector<4x32xf32>
    %211 = arith.subf %210, %204 : vector<4x32xf32>
    %212 = arith.mulf %211, %209 : vector<4x32xf32>
    %213 = arith.mulf %204, %179 : vector<4x32xf32>
    %214 = arith.addf %212, %213 : vector<4x32xf32>
    %c6_i32 = arith.constant 6 : i32
    %215 = arith.index_cast %c6_i32 : i32 to index
    %c0_49 = arith.constant 0 : index
    %c0_50 = arith.constant 0 : index
    %216 = vector.load %arg0[%215, %c0_49, %c0_50] : memref<8x4x32xf32, #tpu.memory_space<vmem>>, vector<1x4x32xf32>
    %217 = vector.shape_cast %216 : vector<1x4x32xf32> to vector<4x32xf32>
    %cst_51 = arith.constant dense<0.000000e+00> : vector<4x96xf32>
    %218 = tpu.matmul %217, %0, %cst_51 {dimension_numbers = #tpu.dot_dimension_numbers<[1], [0], [0], [1], [0, 0, 1, 1], [], []>} : vector<4x32xf32>, vector<32x96xf32>, vector<4x96xf32> -> vector<4x96xf32>
    %219 = vector.broadcast %2 : vector<1x96xf32> to vector<4x96xf32>
    %220 = arith.addf %218, %219 : vector<4x96xf32>
    %cst_52 = arith.constant dense<0.000000e+00> : vector<4x96xf32>
    %221 = tpu.matmul %214, %1, %cst_52 {dimension_numbers = #tpu.dot_dimension_numbers<[1], [0], [0], [1], [0, 0, 1, 1], [], []>} : vector<4x32xf32>, vector<32x96xf32>, vector<4x96xf32> -> vector<4x96xf32>
    %222 = vector.broadcast %3 : vector<1x96xf32> to vector<4x96xf32>
    %223 = arith.addf %221, %222 : vector<4x96xf32>
    %224 = vector.extract_strided_slice %220 {offsets = [0, 0], sizes = [4, 32], strides = [1, 1]} : vector<4x96xf32> to vector<4x32xf32>
    %225 = vector.extract_strided_slice %223 {offsets = [0, 0], sizes = [4, 32], strides = [1, 1]} : vector<4x96xf32> to vector<4x32xf32>
    %226 = arith.addf %224, %225 : vector<4x32xf32>
    %227 = arith.negf %226 : vector<4x32xf32>
    %228 = math.exp %227 : vector<4x32xf32>
    %cst_53 = arith.constant 1.000000e+00 : f32
    %229 = vector.broadcast %cst_53 : f32 to vector<4x32xf32>
    %230 = arith.addf %229, %228 : vector<4x32xf32>
    %231 = arith.divf %229, %230 : vector<4x32xf32>
    %232 = vector.extract_strided_slice %220 {offsets = [0, 32], sizes = [4, 32], strides = [1, 1]} : vector<4x96xf32> to vector<4x32xf32>
    %233 = vector.extract_strided_slice %223 {offsets = [0, 32], sizes = [4, 32], strides = [1, 1]} : vector<4x96xf32> to vector<4x32xf32>
    %234 = arith.addf %232, %233 : vector<4x32xf32>
    %235 = arith.negf %234 : vector<4x32xf32>
    %236 = math.exp %235 : vector<4x32xf32>
    %cst_54 = arith.constant 1.000000e+00 : f32
    %237 = vector.broadcast %cst_54 : f32 to vector<4x32xf32>
    %238 = arith.addf %237, %236 : vector<4x32xf32>
    %239 = arith.divf %237, %238 : vector<4x32xf32>
    %240 = vector.extract_strided_slice %220 {offsets = [0, 64], sizes = [4, 32], strides = [1, 1]} : vector<4x96xf32> to vector<4x32xf32>
    %241 = vector.extract_strided_slice %223 {offsets = [0, 64], sizes = [4, 32], strides = [1, 1]} : vector<4x96xf32> to vector<4x32xf32>
    %242 = arith.mulf %231, %241 : vector<4x32xf32>
    %243 = arith.addf %240, %242 : vector<4x32xf32>
    %244 = math.tanh %243 : vector<4x32xf32>
    %cst_55 = arith.constant 1.000000e+00 : f32
    %245 = vector.broadcast %cst_55 : f32 to vector<4x32xf32>
    %246 = arith.subf %245, %239 : vector<4x32xf32>
    %247 = arith.mulf %246, %244 : vector<4x32xf32>
    %248 = arith.mulf %239, %214 : vector<4x32xf32>
    %249 = arith.addf %247, %248 : vector<4x32xf32>
    %c7_i32 = arith.constant 7 : i32
    %250 = arith.index_cast %c7_i32 : i32 to index
    %c0_56 = arith.constant 0 : index
    %c0_57 = arith.constant 0 : index
    %251 = vector.load %arg0[%250, %c0_56, %c0_57] : memref<8x4x32xf32, #tpu.memory_space<vmem>>, vector<1x4x32xf32>
    %252 = vector.shape_cast %251 : vector<1x4x32xf32> to vector<4x32xf32>
    %cst_58 = arith.constant dense<0.000000e+00> : vector<4x96xf32>
    %253 = tpu.matmul %252, %0, %cst_58 {dimension_numbers = #tpu.dot_dimension_numbers<[1], [0], [0], [1], [0, 0, 1, 1], [], []>} : vector<4x32xf32>, vector<32x96xf32>, vector<4x96xf32> -> vector<4x96xf32>
    %254 = vector.broadcast %2 : vector<1x96xf32> to vector<4x96xf32>
    %255 = arith.addf %253, %254 : vector<4x96xf32>
    %cst_59 = arith.constant dense<0.000000e+00> : vector<4x96xf32>
    %256 = tpu.matmul %249, %1, %cst_59 {dimension_numbers = #tpu.dot_dimension_numbers<[1], [0], [0], [1], [0, 0, 1, 1], [], []>} : vector<4x32xf32>, vector<32x96xf32>, vector<4x96xf32> -> vector<4x96xf32>
    %257 = vector.broadcast %3 : vector<1x96xf32> to vector<4x96xf32>
    %258 = arith.addf %256, %257 : vector<4x96xf32>
    %259 = vector.extract_strided_slice %255 {offsets = [0, 0], sizes = [4, 32], strides = [1, 1]} : vector<4x96xf32> to vector<4x32xf32>
    %260 = vector.extract_strided_slice %258 {offsets = [0, 0], sizes = [4, 32], strides = [1, 1]} : vector<4x96xf32> to vector<4x32xf32>
    %261 = arith.addf %259, %260 : vector<4x32xf32>
    %262 = arith.negf %261 : vector<4x32xf32>
    %263 = math.exp %262 : vector<4x32xf32>
    %cst_60 = arith.constant 1.000000e+00 : f32
    %264 = vector.broadcast %cst_60 : f32 to vector<4x32xf32>
    %265 = arith.addf %264, %263 : vector<4x32xf32>
    %266 = arith.divf %264, %265 : vector<4x32xf32>
    %267 = vector.extract_strided_slice %255 {offsets = [0, 32], sizes = [4, 32], strides = [1, 1]} : vector<4x96xf32> to vector<4x32xf32>
    %268 = vector.extract_strided_slice %258 {offsets = [0, 32], sizes = [4, 32], strides = [1, 1]} : vector<4x96xf32> to vector<4x32xf32>
    %269 = arith.addf %267, %268 : vector<4x32xf32>
    %270 = arith.negf %269 : vector<4x32xf32>
    %271 = math.exp %270 : vector<4x32xf32>
    %cst_61 = arith.constant 1.000000e+00 : f32
    %272 = vector.broadcast %cst_61 : f32 to vector<4x32xf32>
    %273 = arith.addf %272, %271 : vector<4x32xf32>
    %274 = arith.divf %272, %273 : vector<4x32xf32>
    %275 = vector.extract_strided_slice %255 {offsets = [0, 64], sizes = [4, 32], strides = [1, 1]} : vector<4x96xf32> to vector<4x32xf32>
    %276 = vector.extract_strided_slice %258 {offsets = [0, 64], sizes = [4, 32], strides = [1, 1]} : vector<4x96xf32> to vector<4x32xf32>
    %277 = arith.mulf %266, %276 : vector<4x32xf32>
    %278 = arith.addf %275, %277 : vector<4x32xf32>
    %279 = math.tanh %278 : vector<4x32xf32>
    %cst_62 = arith.constant 1.000000e+00 : f32
    %280 = vector.broadcast %cst_62 : f32 to vector<4x32xf32>
    %281 = arith.subf %280, %274 : vector<4x32xf32>
    %282 = arith.mulf %281, %279 : vector<4x32xf32>
    %283 = arith.mulf %274, %249 : vector<4x32xf32>
    %284 = arith.addf %282, %283 : vector<4x32xf32>
    %c8_i32 = arith.constant 8 : i32
    %c0_63 = arith.constant 0 : index
    %c0_64 = arith.constant 0 : index
    %285 = vector.load %arg5[%c0_63, %c0_64] : memref<4x32xf32, #tpu.memory_space<vmem>>, vector<4x32xf32>
    tpu.vector_store %arg5[%c0_63, %c0_64], %284 {strides = array<i32>} : memref<4x32xf32, #tpu.memory_space<vmem>>, vector<4x32xf32>,
    return
  }
}

module attributes {stable_mosaic.version = 11 : i64} {
  func.func @_gru_decoder_kernel(%arg0: memref<8x4x32xf32, #tpu.memory_space<vmem>>, %arg1: memref<4x32xf32, #tpu.memory_space<vmem>>, %arg2: memref<32x96xf32, #tpu.memory_space<vmem>>, %arg3: memref<32x96xf32, #tpu.memory_space<vmem>>, %arg4: memref<32x96xf32, #tpu.memory_space<vmem>>, %arg5: memref<1x96xf32, #tpu.memory_space<vmem>>, %arg6: memref<1x96xf32, #tpu.memory_space<vmem>>, %arg7: memref<8x4x32xf32, #tpu.memory_space<vmem>>) attributes {dimension_semantics = [], scalar_prefetch = 0 : i64, scratch_operands = 0 : i64, tpu.core_type = #tpu.core_type<tc>} {
    %c0 = arith.constant 0 : index
    %c0_0 = arith.constant 0 : index
    %0 = vector.load %arg2[%c0, %c0_0] : memref<32x96xf32, #tpu.memory_space<vmem>>, vector<32x96xf32>
    %c0_1 = arith.constant 0 : index
    %c0_2 = arith.constant 0 : index
    %1 = vector.load %arg4[%c0_1, %c0_2] : memref<32x96xf32, #tpu.memory_space<vmem>>, vector<32x96xf32>
    %c0_3 = arith.constant 0 : index
    %c0_4 = arith.constant 0 : index
    %2 = vector.load %arg6[%c0_3, %c0_4] : memref<1x96xf32, #tpu.memory_space<vmem>>, vector<1x96xf32>
    %c0_5 = arith.constant 0 : index
    %c0_6 = arith.constant 0 : index
    %3 = vector.load %arg1[%c0_5, %c0_6] : memref<4x32xf32, #tpu.memory_space<vmem>>, vector<4x32xf32>
    %c0_7 = arith.constant 0 : index
    %c0_8 = arith.constant 0 : index
    %4 = vector.load %arg3[%c0_7, %c0_8] : memref<32x96xf32, #tpu.memory_space<vmem>>, vector<32x96xf32>
    %cst = arith.constant dense<0.000000e+00> : vector<4x96xf32>
    %5 = tpu.matmul %3, %4, %cst {dimension_numbers = #tpu.dot_dimension_numbers<[1], [0], [0], [1], [0, 0, 1, 1], [], []>} : vector<4x32xf32>, vector<32x96xf32>, vector<4x96xf32> -> vector<4x96xf32>
    %c0_9 = arith.constant 0 : index
    %c0_10 = arith.constant 0 : index
    %6 = vector.load %arg5[%c0_9, %c0_10] : memref<1x96xf32, #tpu.memory_space<vmem>>, vector<1x96xf32>
    %7 = vector.broadcast %6 : vector<1x96xf32> to vector<4x96xf32>
    %8 = arith.addf %5, %7 : vector<4x96xf32>
    %c0_i32 = arith.constant 0 : i32
    %9 = arith.index_cast %c0_i32 : i32 to index
    %c0_11 = arith.constant 0 : index
    %c0_12 = arith.constant 0 : index
    %10 = vector.load %arg0[%9, %c0_11, %c0_12] : memref<8x4x32xf32, #tpu.memory_space<vmem>>, vector<1x4x32xf32>
    %11 = vector.shape_cast %10 : vector<1x4x32xf32> to vector<4x32xf32>
    %cst_13 = arith.constant dense<0.000000e+00> : vector<4x96xf32>
    %12 = tpu.matmul %11, %0, %cst_13 {dimension_numbers = #tpu.dot_dimension_numbers<[1], [0], [0], [1], [0, 0, 1, 1], [], []>} : vector<4x32xf32>, vector<32x96xf32>, vector<4x96xf32> -> vector<4x96xf32>
    %13 = arith.addf %12, %8 : vector<4x96xf32>
    %cst_14 = arith.constant dense<0.000000e+00> : vector<4x96xf32>
    %14 = tpu.matmul %3, %1, %cst_14 {dimension_numbers = #tpu.dot_dimension_numbers<[1], [0], [0], [1], [0, 0, 1, 1], [], []>} : vector<4x32xf32>, vector<32x96xf32>, vector<4x96xf32> -> vector<4x96xf32>
    %15 = vector.broadcast %2 : vector<1x96xf32> to vector<4x96xf32>
    %16 = arith.addf %14, %15 : vector<4x96xf32>
    %17 = vector.extract_strided_slice %13 {offsets = [0, 0], sizes = [4, 32], strides = [1, 1]} : vector<4x96xf32> to vector<4x32xf32>
    %18 = vector.extract_strided_slice %16 {offsets = [0, 0], sizes = [4, 32], strides = [1, 1]} : vector<4x96xf32> to vector<4x32xf32>
    %19 = arith.addf %17, %18 : vector<4x32xf32>
    %20 = arith.negf %19 : vector<4x32xf32>
    %21 = math.exp %20 : vector<4x32xf32>
    %cst_15 = arith.constant 1.000000e+00 : f32
    %22 = vector.broadcast %cst_15 : f32 to vector<4x32xf32>
    %23 = arith.addf %22, %21 : vector<4x32xf32>
    %24 = arith.divf %22, %23 : vector<4x32xf32>
    %25 = vector.extract_strided_slice %13 {offsets = [0, 32], sizes = [4, 32], strides = [1, 1]} : vector<4x96xf32> to vector<4x32xf32>
    %26 = vector.extract_strided_slice %16 {offsets = [0, 32], sizes = [4, 32], strides = [1, 1]} : vector<4x96xf32> to vector<4x32xf32>
    %27 = arith.addf %25, %26 : vector<4x32xf32>
    %28 = arith.negf %27 : vector<4x32xf32>
    %29 = math.exp %28 : vector<4x32xf32>
    %cst_16 = arith.constant 1.000000e+00 : f32
    %30 = vector.broadcast %cst_16 : f32 to vector<4x32xf32>
    %31 = arith.addf %30, %29 : vector<4x32xf32>
    %32 = arith.divf %30, %31 : vector<4x32xf32>
    %33 = vector.extract_strided_slice %13 {offsets = [0, 64], sizes = [4, 32], strides = [1, 1]} : vector<4x96xf32> to vector<4x32xf32>
    %34 = vector.extract_strided_slice %16 {offsets = [0, 64], sizes = [4, 32], strides = [1, 1]} : vector<4x96xf32> to vector<4x32xf32>
    %35 = arith.mulf %24, %34 : vector<4x32xf32>
    %36 = arith.addf %33, %35 : vector<4x32xf32>
    %37 = math.tanh %36 : vector<4x32xf32>
    %cst_17 = arith.constant 1.000000e+00 : f32
    %38 = vector.broadcast %cst_17 : f32 to vector<4x32xf32>
    %39 = arith.subf %38, %32 : vector<4x32xf32>
    %40 = arith.mulf %39, %37 : vector<4x32xf32>
    %41 = arith.mulf %32, %3 : vector<4x32xf32>
    %42 = arith.addf %40, %41 : vector<4x32xf32>
    %43 = arith.index_cast %c0_i32 : i32 to index
    %c0_18 = arith.constant 0 : index
    %c0_19 = arith.constant 0 : index
    %44 = vector.load %arg7[%43, %c0_18, %c0_19] : memref<8x4x32xf32, #tpu.memory_space<vmem>>, vector<1x4x32xf32>
    %45 = vector.shape_cast %44 : vector<1x4x32xf32> to vector<4x32xf32>
    %46 = vector.shape_cast %42 : vector<4x32xf32> to vector<1x4x32xf32>
    tpu.vector_store %arg7[%43, %c0_18, %c0_19], %46 {strides = array<i32>} : memref<8x4x32xf32, #tpu.memory_space<vmem>>, vector<1x4x32xf32>,
    %c1_i32 = arith.constant 1 : i32
    %47 = arith.index_cast %c1_i32 : i32 to index
    %c0_20 = arith.constant 0 : index
    %c0_21 = arith.constant 0 : index
    %48 = vector.load %arg0[%47, %c0_20, %c0_21] : memref<8x4x32xf32, #tpu.memory_space<vmem>>, vector<1x4x32xf32>
    %49 = vector.shape_cast %48 : vector<1x4x32xf32> to vector<4x32xf32>
    %cst_22 = arith.constant dense<0.000000e+00> : vector<4x96xf32>
    %50 = tpu.matmul %49, %0, %cst_22 {dimension_numbers = #tpu.dot_dimension_numbers<[1], [0], [0], [1], [0, 0, 1, 1], [], []>} : vector<4x32xf32>, vector<32x96xf32>, vector<4x96xf32> -> vector<4x96xf32>
    %51 = arith.addf %50, %8 : vector<4x96xf32>
    %cst_23 = arith.constant dense<0.000000e+00> : vector<4x96xf32>
    %52 = tpu.matmul %42, %1, %cst_23 {dimension_numbers = #tpu.dot_dimension_numbers<[1], [0], [0], [1], [0, 0, 1, 1], [], []>} : vector<4x32xf32>, vector<32x96xf32>, vector<4x96xf32> -> vector<4x96xf32>
    %53 = vector.broadcast %2 : vector<1x96xf32> to vector<4x96xf32>
    %54 = arith.addf %52, %53 : vector<4x96xf32>
    %55 = vector.extract_strided_slice %51 {offsets = [0, 0], sizes = [4, 32], strides = [1, 1]} : vector<4x96xf32> to vector<4x32xf32>
    %56 = vector.extract_strided_slice %54 {offsets = [0, 0], sizes = [4, 32], strides = [1, 1]} : vector<4x96xf32> to vector<4x32xf32>
    %57 = arith.addf %55, %56 : vector<4x32xf32>
    %58 = arith.negf %57 : vector<4x32xf32>
    %59 = math.exp %58 : vector<4x32xf32>
    %cst_24 = arith.constant 1.000000e+00 : f32
    %60 = vector.broadcast %cst_24 : f32 to vector<4x32xf32>
    %61 = arith.addf %60, %59 : vector<4x32xf32>
    %62 = arith.divf %60, %61 : vector<4x32xf32>
    %63 = vector.extract_strided_slice %51 {offsets = [0, 32], sizes = [4, 32], strides = [1, 1]} : vector<4x96xf32> to vector<4x32xf32>
    %64 = vector.extract_strided_slice %54 {offsets = [0, 32], sizes = [4, 32], strides = [1, 1]} : vector<4x96xf32> to vector<4x32xf32>
    %65 = arith.addf %63, %64 : vector<4x32xf32>
    %66 = arith.negf %65 : vector<4x32xf32>
    %67 = math.exp %66 : vector<4x32xf32>
    %cst_25 = arith.constant 1.000000e+00 : f32
    %68 = vector.broadcast %cst_25 : f32 to vector<4x32xf32>
    %69 = arith.addf %68, %67 : vector<4x32xf32>
    %70 = arith.divf %68, %69 : vector<4x32xf32>
    %71 = vector.extract_strided_slice %51 {offsets = [0, 64], sizes = [4, 32], strides = [1, 1]} : vector<4x96xf32> to vector<4x32xf32>
    %72 = vector.extract_strided_slice %54 {offsets = [0, 64], sizes = [4, 32], strides = [1, 1]} : vector<4x96xf32> to vector<4x32xf32>
    %73 = arith.mulf %62, %72 : vector<4x32xf32>
    %74 = arith.addf %71, %73 : vector<4x32xf32>
    %75 = math.tanh %74 : vector<4x32xf32>
    %cst_26 = arith.constant 1.000000e+00 : f32
    %76 = vector.broadcast %cst_26 : f32 to vector<4x32xf32>
    %77 = arith.subf %76, %70 : vector<4x32xf32>
    %78 = arith.mulf %77, %75 : vector<4x32xf32>
    %79 = arith.mulf %70, %42 : vector<4x32xf32>
    %80 = arith.addf %78, %79 : vector<4x32xf32>
    %81 = arith.index_cast %c1_i32 : i32 to index
    %c0_27 = arith.constant 0 : index
    %c0_28 = arith.constant 0 : index
    %82 = vector.load %arg7[%81, %c0_27, %c0_28] : memref<8x4x32xf32, #tpu.memory_space<vmem>>, vector<1x4x32xf32>
    %83 = vector.shape_cast %82 : vector<1x4x32xf32> to vector<4x32xf32>
    %84 = vector.shape_cast %80 : vector<4x32xf32> to vector<1x4x32xf32>
    tpu.vector_store %arg7[%81, %c0_27, %c0_28], %84 {strides = array<i32>} : memref<8x4x32xf32, #tpu.memory_space<vmem>>, vector<1x4x32xf32>,
    %c2_i32 = arith.constant 2 : i32
    %85 = arith.index_cast %c2_i32 : i32 to index
    %c0_29 = arith.constant 0 : index
    %c0_30 = arith.constant 0 : index
    %86 = vector.load %arg0[%85, %c0_29, %c0_30] : memref<8x4x32xf32, #tpu.memory_space<vmem>>, vector<1x4x32xf32>
    %87 = vector.shape_cast %86 : vector<1x4x32xf32> to vector<4x32xf32>
    %cst_31 = arith.constant dense<0.000000e+00> : vector<4x96xf32>
    %88 = tpu.matmul %87, %0, %cst_31 {dimension_numbers = #tpu.dot_dimension_numbers<[1], [0], [0], [1], [0, 0, 1, 1], [], []>} : vector<4x32xf32>, vector<32x96xf32>, vector<4x96xf32> -> vector<4x96xf32>
    %89 = arith.addf %88, %8 : vector<4x96xf32>
    %cst_32 = arith.constant dense<0.000000e+00> : vector<4x96xf32>
    %90 = tpu.matmul %80, %1, %cst_32 {dimension_numbers = #tpu.dot_dimension_numbers<[1], [0], [0], [1], [0, 0, 1, 1], [], []>} : vector<4x32xf32>, vector<32x96xf32>, vector<4x96xf32> -> vector<4x96xf32>
    %91 = vector.broadcast %2 : vector<1x96xf32> to vector<4x96xf32>
    %92 = arith.addf %90, %91 : vector<4x96xf32>
    %93 = vector.extract_strided_slice %89 {offsets = [0, 0], sizes = [4, 32], strides = [1, 1]} : vector<4x96xf32> to vector<4x32xf32>
    %94 = vector.extract_strided_slice %92 {offsets = [0, 0], sizes = [4, 32], strides = [1, 1]} : vector<4x96xf32> to vector<4x32xf32>
    %95 = arith.addf %93, %94 : vector<4x32xf32>
    %96 = arith.negf %95 : vector<4x32xf32>
    %97 = math.exp %96 : vector<4x32xf32>
    %cst_33 = arith.constant 1.000000e+00 : f32
    %98 = vector.broadcast %cst_33 : f32 to vector<4x32xf32>
    %99 = arith.addf %98, %97 : vector<4x32xf32>
    %100 = arith.divf %98, %99 : vector<4x32xf32>
    %101 = vector.extract_strided_slice %89 {offsets = [0, 32], sizes = [4, 32], strides = [1, 1]} : vector<4x96xf32> to vector<4x32xf32>
    %102 = vector.extract_strided_slice %92 {offsets = [0, 32], sizes = [4, 32], strides = [1, 1]} : vector<4x96xf32> to vector<4x32xf32>
    %103 = arith.addf %101, %102 : vector<4x32xf32>
    %104 = arith.negf %103 : vector<4x32xf32>
    %105 = math.exp %104 : vector<4x32xf32>
    %cst_34 = arith.constant 1.000000e+00 : f32
    %106 = vector.broadcast %cst_34 : f32 to vector<4x32xf32>
    %107 = arith.addf %106, %105 : vector<4x32xf32>
    %108 = arith.divf %106, %107 : vector<4x32xf32>
    %109 = vector.extract_strided_slice %89 {offsets = [0, 64], sizes = [4, 32], strides = [1, 1]} : vector<4x96xf32> to vector<4x32xf32>
    %110 = vector.extract_strided_slice %92 {offsets = [0, 64], sizes = [4, 32], strides = [1, 1]} : vector<4x96xf32> to vector<4x32xf32>
    %111 = arith.mulf %100, %110 : vector<4x32xf32>
    %112 = arith.addf %109, %111 : vector<4x32xf32>
    %113 = math.tanh %112 : vector<4x32xf32>
    %cst_35 = arith.constant 1.000000e+00 : f32
    %114 = vector.broadcast %cst_35 : f32 to vector<4x32xf32>
    %115 = arith.subf %114, %108 : vector<4x32xf32>
    %116 = arith.mulf %115, %113 : vector<4x32xf32>
    %117 = arith.mulf %108, %80 : vector<4x32xf32>
    %118 = arith.addf %116, %117 : vector<4x32xf32>
    %119 = arith.index_cast %c2_i32 : i32 to index
    %c0_36 = arith.constant 0 : index
    %c0_37 = arith.constant 0 : index
    %120 = vector.load %arg7[%119, %c0_36, %c0_37] : memref<8x4x32xf32, #tpu.memory_space<vmem>>, vector<1x4x32xf32>
    %121 = vector.shape_cast %120 : vector<1x4x32xf32> to vector<4x32xf32>
    %122 = vector.shape_cast %118 : vector<4x32xf32> to vector<1x4x32xf32>
    tpu.vector_store %arg7[%119, %c0_36, %c0_37], %122 {strides = array<i32>} : memref<8x4x32xf32, #tpu.memory_space<vmem>>, vector<1x4x32xf32>,
    %c3_i32 = arith.constant 3 : i32
    %123 = arith.index_cast %c3_i32 : i32 to index
    %c0_38 = arith.constant 0 : index
    %c0_39 = arith.constant 0 : index
    %124 = vector.load %arg0[%123, %c0_38, %c0_39] : memref<8x4x32xf32, #tpu.memory_space<vmem>>, vector<1x4x32xf32>
    %125 = vector.shape_cast %124 : vector<1x4x32xf32> to vector<4x32xf32>
    %cst_40 = arith.constant dense<0.000000e+00> : vector<4x96xf32>
    %126 = tpu.matmul %125, %0, %cst_40 {dimension_numbers = #tpu.dot_dimension_numbers<[1], [0], [0], [1], [0, 0, 1, 1], [], []>} : vector<4x32xf32>, vector<32x96xf32>, vector<4x96xf32> -> vector<4x96xf32>
    %127 = arith.addf %126, %8 : vector<4x96xf32>
    %cst_41 = arith.constant dense<0.000000e+00> : vector<4x96xf32>
    %128 = tpu.matmul %118, %1, %cst_41 {dimension_numbers = #tpu.dot_dimension_numbers<[1], [0], [0], [1], [0, 0, 1, 1], [], []>} : vector<4x32xf32>, vector<32x96xf32>, vector<4x96xf32> -> vector<4x96xf32>
    %129 = vector.broadcast %2 : vector<1x96xf32> to vector<4x96xf32>
    %130 = arith.addf %128, %129 : vector<4x96xf32>
    %131 = vector.extract_strided_slice %127 {offsets = [0, 0], sizes = [4, 32], strides = [1, 1]} : vector<4x96xf32> to vector<4x32xf32>
    %132 = vector.extract_strided_slice %130 {offsets = [0, 0], sizes = [4, 32], strides = [1, 1]} : vector<4x96xf32> to vector<4x32xf32>
    %133 = arith.addf %131, %132 : vector<4x32xf32>
    %134 = arith.negf %133 : vector<4x32xf32>
    %135 = math.exp %134 : vector<4x32xf32>
    %cst_42 = arith.constant 1.000000e+00 : f32
    %136 = vector.broadcast %cst_42 : f32 to vector<4x32xf32>
    %137 = arith.addf %136, %135 : vector<4x32xf32>
    %138 = arith.divf %136, %137 : vector<4x32xf32>
    %139 = vector.extract_strided_slice %127 {offsets = [0, 32], sizes = [4, 32], strides = [1, 1]} : vector<4x96xf32> to vector<4x32xf32>
    %140 = vector.extract_strided_slice %130 {offsets = [0, 32], sizes = [4, 32], strides = [1, 1]} : vector<4x96xf32> to vector<4x32xf32>
    %141 = arith.addf %139, %140 : vector<4x32xf32>
    %142 = arith.negf %141 : vector<4x32xf32>
    %143 = math.exp %142 : vector<4x32xf32>
    %cst_43 = arith.constant 1.000000e+00 : f32
    %144 = vector.broadcast %cst_43 : f32 to vector<4x32xf32>
    %145 = arith.addf %144, %143 : vector<4x32xf32>
    %146 = arith.divf %144, %145 : vector<4x32xf32>
    %147 = vector.extract_strided_slice %127 {offsets = [0, 64], sizes = [4, 32], strides = [1, 1]} : vector<4x96xf32> to vector<4x32xf32>
    %148 = vector.extract_strided_slice %130 {offsets = [0, 64], sizes = [4, 32], strides = [1, 1]} : vector<4x96xf32> to vector<4x32xf32>
    %149 = arith.mulf %138, %148 : vector<4x32xf32>
    %150 = arith.addf %147, %149 : vector<4x32xf32>
    %151 = math.tanh %150 : vector<4x32xf32>
    %cst_44 = arith.constant 1.000000e+00 : f32
    %152 = vector.broadcast %cst_44 : f32 to vector<4x32xf32>
    %153 = arith.subf %152, %146 : vector<4x32xf32>
    %154 = arith.mulf %153, %151 : vector<4x32xf32>
    %155 = arith.mulf %146, %118 : vector<4x32xf32>
    %156 = arith.addf %154, %155 : vector<4x32xf32>
    %157 = arith.index_cast %c3_i32 : i32 to index
    %c0_45 = arith.constant 0 : index
    %c0_46 = arith.constant 0 : index
    %158 = vector.load %arg7[%157, %c0_45, %c0_46] : memref<8x4x32xf32, #tpu.memory_space<vmem>>, vector<1x4x32xf32>
    %159 = vector.shape_cast %158 : vector<1x4x32xf32> to vector<4x32xf32>
    %160 = vector.shape_cast %156 : vector<4x32xf32> to vector<1x4x32xf32>
    tpu.vector_store %arg7[%157, %c0_45, %c0_46], %160 {strides = array<i32>} : memref<8x4x32xf32, #tpu.memory_space<vmem>>, vector<1x4x32xf32>,
    %c4_i32 = arith.constant 4 : i32
    %161 = arith.index_cast %c4_i32 : i32 to index
    %c0_47 = arith.constant 0 : index
    %c0_48 = arith.constant 0 : index
    %162 = vector.load %arg0[%161, %c0_47, %c0_48] : memref<8x4x32xf32, #tpu.memory_space<vmem>>, vector<1x4x32xf32>
    %163 = vector.shape_cast %162 : vector<1x4x32xf32> to vector<4x32xf32>
    %cst_49 = arith.constant dense<0.000000e+00> : vector<4x96xf32>
    %164 = tpu.matmul %163, %0, %cst_49 {dimension_numbers = #tpu.dot_dimension_numbers<[1], [0], [0], [1], [0, 0, 1, 1], [], []>} : vector<4x32xf32>, vector<32x96xf32>, vector<4x96xf32> -> vector<4x96xf32>
    %165 = arith.addf %164, %8 : vector<4x96xf32>
    %cst_50 = arith.constant dense<0.000000e+00> : vector<4x96xf32>
    %166 = tpu.matmul %156, %1, %cst_50 {dimension_numbers = #tpu.dot_dimension_numbers<[1], [0], [0], [1], [0, 0, 1, 1], [], []>} : vector<4x32xf32>, vector<32x96xf32>, vector<4x96xf32> -> vector<4x96xf32>
    %167 = vector.broadcast %2 : vector<1x96xf32> to vector<4x96xf32>
    %168 = arith.addf %166, %167 : vector<4x96xf32>
    %169 = vector.extract_strided_slice %165 {offsets = [0, 0], sizes = [4, 32], strides = [1, 1]} : vector<4x96xf32> to vector<4x32xf32>
    %170 = vector.extract_strided_slice %168 {offsets = [0, 0], sizes = [4, 32], strides = [1, 1]} : vector<4x96xf32> to vector<4x32xf32>
    %171 = arith.addf %169, %170 : vector<4x32xf32>
    %172 = arith.negf %171 : vector<4x32xf32>
    %173 = math.exp %172 : vector<4x32xf32>
    %cst_51 = arith.constant 1.000000e+00 : f32
    %174 = vector.broadcast %cst_51 : f32 to vector<4x32xf32>
    %175 = arith.addf %174, %173 : vector<4x32xf32>
    %176 = arith.divf %174, %175 : vector<4x32xf32>
    %177 = vector.extract_strided_slice %165 {offsets = [0, 32], sizes = [4, 32], strides = [1, 1]} : vector<4x96xf32> to vector<4x32xf32>
    %178 = vector.extract_strided_slice %168 {offsets = [0, 32], sizes = [4, 32], strides = [1, 1]} : vector<4x96xf32> to vector<4x32xf32>
    %179 = arith.addf %177, %178 : vector<4x32xf32>
    %180 = arith.negf %179 : vector<4x32xf32>
    %181 = math.exp %180 : vector<4x32xf32>
    %cst_52 = arith.constant 1.000000e+00 : f32
    %182 = vector.broadcast %cst_52 : f32 to vector<4x32xf32>
    %183 = arith.addf %182, %181 : vector<4x32xf32>
    %184 = arith.divf %182, %183 : vector<4x32xf32>
    %185 = vector.extract_strided_slice %165 {offsets = [0, 64], sizes = [4, 32], strides = [1, 1]} : vector<4x96xf32> to vector<4x32xf32>
    %186 = vector.extract_strided_slice %168 {offsets = [0, 64], sizes = [4, 32], strides = [1, 1]} : vector<4x96xf32> to vector<4x32xf32>
    %187 = arith.mulf %176, %186 : vector<4x32xf32>
    %188 = arith.addf %185, %187 : vector<4x32xf32>
    %189 = math.tanh %188 : vector<4x32xf32>
    %cst_53 = arith.constant 1.000000e+00 : f32
    %190 = vector.broadcast %cst_53 : f32 to vector<4x32xf32>
    %191 = arith.subf %190, %184 : vector<4x32xf32>
    %192 = arith.mulf %191, %189 : vector<4x32xf32>
    %193 = arith.mulf %184, %156 : vector<4x32xf32>
    %194 = arith.addf %192, %193 : vector<4x32xf32>
    %195 = arith.index_cast %c4_i32 : i32 to index
    %c0_54 = arith.constant 0 : index
    %c0_55 = arith.constant 0 : index
    %196 = vector.load %arg7[%195, %c0_54, %c0_55] : memref<8x4x32xf32, #tpu.memory_space<vmem>>, vector<1x4x32xf32>
    %197 = vector.shape_cast %196 : vector<1x4x32xf32> to vector<4x32xf32>
    %198 = vector.shape_cast %194 : vector<4x32xf32> to vector<1x4x32xf32>
    tpu.vector_store %arg7[%195, %c0_54, %c0_55], %198 {strides = array<i32>} : memref<8x4x32xf32, #tpu.memory_space<vmem>>, vector<1x4x32xf32>,
    %c5_i32 = arith.constant 5 : i32
    %199 = arith.index_cast %c5_i32 : i32 to index
    %c0_56 = arith.constant 0 : index
    %c0_57 = arith.constant 0 : index
    %200 = vector.load %arg0[%199, %c0_56, %c0_57] : memref<8x4x32xf32, #tpu.memory_space<vmem>>, vector<1x4x32xf32>
    %201 = vector.shape_cast %200 : vector<1x4x32xf32> to vector<4x32xf32>
    %cst_58 = arith.constant dense<0.000000e+00> : vector<4x96xf32>
    %202 = tpu.matmul %201, %0, %cst_58 {dimension_numbers = #tpu.dot_dimension_numbers<[1], [0], [0], [1], [0, 0, 1, 1], [], []>} : vector<4x32xf32>, vector<32x96xf32>, vector<4x96xf32> -> vector<4x96xf32>
    %203 = arith.addf %202, %8 : vector<4x96xf32>
    %cst_59 = arith.constant dense<0.000000e+00> : vector<4x96xf32>
    %204 = tpu.matmul %194, %1, %cst_59 {dimension_numbers = #tpu.dot_dimension_numbers<[1], [0], [0], [1], [0, 0, 1, 1], [], []>} : vector<4x32xf32>, vector<32x96xf32>, vector<4x96xf32> -> vector<4x96xf32>
    %205 = vector.broadcast %2 : vector<1x96xf32> to vector<4x96xf32>
    %206 = arith.addf %204, %205 : vector<4x96xf32>
    %207 = vector.extract_strided_slice %203 {offsets = [0, 0], sizes = [4, 32], strides = [1, 1]} : vector<4x96xf32> to vector<4x32xf32>
    %208 = vector.extract_strided_slice %206 {offsets = [0, 0], sizes = [4, 32], strides = [1, 1]} : vector<4x96xf32> to vector<4x32xf32>
    %209 = arith.addf %207, %208 : vector<4x32xf32>
    %210 = arith.negf %209 : vector<4x32xf32>
    %211 = math.exp %210 : vector<4x32xf32>
    %cst_60 = arith.constant 1.000000e+00 : f32
    %212 = vector.broadcast %cst_60 : f32 to vector<4x32xf32>
    %213 = arith.addf %212, %211 : vector<4x32xf32>
    %214 = arith.divf %212, %213 : vector<4x32xf32>
    %215 = vector.extract_strided_slice %203 {offsets = [0, 32], sizes = [4, 32], strides = [1, 1]} : vector<4x96xf32> to vector<4x32xf32>
    %216 = vector.extract_strided_slice %206 {offsets = [0, 32], sizes = [4, 32], strides = [1, 1]} : vector<4x96xf32> to vector<4x32xf32>
    %217 = arith.addf %215, %216 : vector<4x32xf32>
    %218 = arith.negf %217 : vector<4x32xf32>
    %219 = math.exp %218 : vector<4x32xf32>
    %cst_61 = arith.constant 1.000000e+00 : f32
    %220 = vector.broadcast %cst_61 : f32 to vector<4x32xf32>
    %221 = arith.addf %220, %219 : vector<4x32xf32>
    %222 = arith.divf %220, %221 : vector<4x32xf32>
    %223 = vector.extract_strided_slice %203 {offsets = [0, 64], sizes = [4, 32], strides = [1, 1]} : vector<4x96xf32> to vector<4x32xf32>
    %224 = vector.extract_strided_slice %206 {offsets = [0, 64], sizes = [4, 32], strides = [1, 1]} : vector<4x96xf32> to vector<4x32xf32>
    %225 = arith.mulf %214, %224 : vector<4x32xf32>
    %226 = arith.addf %223, %225 : vector<4x32xf32>
    %227 = math.tanh %226 : vector<4x32xf32>
    %cst_62 = arith.constant 1.000000e+00 : f32
    %228 = vector.broadcast %cst_62 : f32 to vector<4x32xf32>
    %229 = arith.subf %228, %222 : vector<4x32xf32>
    %230 = arith.mulf %229, %227 : vector<4x32xf32>
    %231 = arith.mulf %222, %194 : vector<4x32xf32>
    %232 = arith.addf %230, %231 : vector<4x32xf32>
    %233 = arith.index_cast %c5_i32 : i32 to index
    %c0_63 = arith.constant 0 : index
    %c0_64 = arith.constant 0 : index
    %234 = vector.load %arg7[%233, %c0_63, %c0_64] : memref<8x4x32xf32, #tpu.memory_space<vmem>>, vector<1x4x32xf32>
    %235 = vector.shape_cast %234 : vector<1x4x32xf32> to vector<4x32xf32>
    %236 = vector.shape_cast %232 : vector<4x32xf32> to vector<1x4x32xf32>
    tpu.vector_store %arg7[%233, %c0_63, %c0_64], %236 {strides = array<i32>} : memref<8x4x32xf32, #tpu.memory_space<vmem>>, vector<1x4x32xf32>,
    %c6_i32 = arith.constant 6 : i32
    %237 = arith.index_cast %c6_i32 : i32 to index
    %c0_65 = arith.constant 0 : index
    %c0_66 = arith.constant 0 : index
    %238 = vector.load %arg0[%237, %c0_65, %c0_66] : memref<8x4x32xf32, #tpu.memory_space<vmem>>, vector<1x4x32xf32>
    %239 = vector.shape_cast %238 : vector<1x4x32xf32> to vector<4x32xf32>
    %cst_67 = arith.constant dense<0.000000e+00> : vector<4x96xf32>
    %240 = tpu.matmul %239, %0, %cst_67 {dimension_numbers = #tpu.dot_dimension_numbers<[1], [0], [0], [1], [0, 0, 1, 1], [], []>} : vector<4x32xf32>, vector<32x96xf32>, vector<4x96xf32> -> vector<4x96xf32>
    %241 = arith.addf %240, %8 : vector<4x96xf32>
    %cst_68 = arith.constant dense<0.000000e+00> : vector<4x96xf32>
    %242 = tpu.matmul %232, %1, %cst_68 {dimension_numbers = #tpu.dot_dimension_numbers<[1], [0], [0], [1], [0, 0, 1, 1], [], []>} : vector<4x32xf32>, vector<32x96xf32>, vector<4x96xf32> -> vector<4x96xf32>
    %243 = vector.broadcast %2 : vector<1x96xf32> to vector<4x96xf32>
    %244 = arith.addf %242, %243 : vector<4x96xf32>
    %245 = vector.extract_strided_slice %241 {offsets = [0, 0], sizes = [4, 32], strides = [1, 1]} : vector<4x96xf32> to vector<4x32xf32>
    %246 = vector.extract_strided_slice %244 {offsets = [0, 0], sizes = [4, 32], strides = [1, 1]} : vector<4x96xf32> to vector<4x32xf32>
    %247 = arith.addf %245, %246 : vector<4x32xf32>
    %248 = arith.negf %247 : vector<4x32xf32>
    %249 = math.exp %248 : vector<4x32xf32>
    %cst_69 = arith.constant 1.000000e+00 : f32
    %250 = vector.broadcast %cst_69 : f32 to vector<4x32xf32>
    %251 = arith.addf %250, %249 : vector<4x32xf32>
    %252 = arith.divf %250, %251 : vector<4x32xf32>
    %253 = vector.extract_strided_slice %241 {offsets = [0, 32], sizes = [4, 32], strides = [1, 1]} : vector<4x96xf32> to vector<4x32xf32>
    %254 = vector.extract_strided_slice %244 {offsets = [0, 32], sizes = [4, 32], strides = [1, 1]} : vector<4x96xf32> to vector<4x32xf32>
    %255 = arith.addf %253, %254 : vector<4x32xf32>
    %256 = arith.negf %255 : vector<4x32xf32>
    %257 = math.exp %256 : vector<4x32xf32>
    %cst_70 = arith.constant 1.000000e+00 : f32
    %258 = vector.broadcast %cst_70 : f32 to vector<4x32xf32>
    %259 = arith.addf %258, %257 : vector<4x32xf32>
    %260 = arith.divf %258, %259 : vector<4x32xf32>
    %261 = vector.extract_strided_slice %241 {offsets = [0, 64], sizes = [4, 32], strides = [1, 1]} : vector<4x96xf32> to vector<4x32xf32>
    %262 = vector.extract_strided_slice %244 {offsets = [0, 64], sizes = [4, 32], strides = [1, 1]} : vector<4x96xf32> to vector<4x32xf32>
    %263 = arith.mulf %252, %262 : vector<4x32xf32>
    %264 = arith.addf %261, %263 : vector<4x32xf32>
    %265 = math.tanh %264 : vector<4x32xf32>
    %cst_71 = arith.constant 1.000000e+00 : f32
    %266 = vector.broadcast %cst_71 : f32 to vector<4x32xf32>
    %267 = arith.subf %266, %260 : vector<4x32xf32>
    %268 = arith.mulf %267, %265 : vector<4x32xf32>
    %269 = arith.mulf %260, %232 : vector<4x32xf32>
    %270 = arith.addf %268, %269 : vector<4x32xf32>
    %271 = arith.index_cast %c6_i32 : i32 to index
    %c0_72 = arith.constant 0 : index
    %c0_73 = arith.constant 0 : index
    %272 = vector.load %arg7[%271, %c0_72, %c0_73] : memref<8x4x32xf32, #tpu.memory_space<vmem>>, vector<1x4x32xf32>
    %273 = vector.shape_cast %272 : vector<1x4x32xf32> to vector<4x32xf32>
    %274 = vector.shape_cast %270 : vector<4x32xf32> to vector<1x4x32xf32>
    tpu.vector_store %arg7[%271, %c0_72, %c0_73], %274 {strides = array<i32>} : memref<8x4x32xf32, #tpu.memory_space<vmem>>, vector<1x4x32xf32>,
    %c7_i32 = arith.constant 7 : i32
    %275 = arith.index_cast %c7_i32 : i32 to index
    %c0_74 = arith.constant 0 : index
    %c0_75 = arith.constant 0 : index
    %276 = vector.load %arg0[%275, %c0_74, %c0_75] : memref<8x4x32xf32, #tpu.memory_space<vmem>>, vector<1x4x32xf32>
    %277 = vector.shape_cast %276 : vector<1x4x32xf32> to vector<4x32xf32>
    %cst_76 = arith.constant dense<0.000000e+00> : vector<4x96xf32>
    %278 = tpu.matmul %277, %0, %cst_76 {dimension_numbers = #tpu.dot_dimension_numbers<[1], [0], [0], [1], [0, 0, 1, 1], [], []>} : vector<4x32xf32>, vector<32x96xf32>, vector<4x96xf32> -> vector<4x96xf32>
    %279 = arith.addf %278, %8 : vector<4x96xf32>
    %cst_77 = arith.constant dense<0.000000e+00> : vector<4x96xf32>
    %280 = tpu.matmul %270, %1, %cst_77 {dimension_numbers = #tpu.dot_dimension_numbers<[1], [0], [0], [1], [0, 0, 1, 1], [], []>} : vector<4x32xf32>, vector<32x96xf32>, vector<4x96xf32> -> vector<4x96xf32>
    %281 = vector.broadcast %2 : vector<1x96xf32> to vector<4x96xf32>
    %282 = arith.addf %280, %281 : vector<4x96xf32>
    %283 = vector.extract_strided_slice %279 {offsets = [0, 0], sizes = [4, 32], strides = [1, 1]} : vector<4x96xf32> to vector<4x32xf32>
    %284 = vector.extract_strided_slice %282 {offsets = [0, 0], sizes = [4, 32], strides = [1, 1]} : vector<4x96xf32> to vector<4x32xf32>
    %285 = arith.addf %283, %284 : vector<4x32xf32>
    %286 = arith.negf %285 : vector<4x32xf32>
    %287 = math.exp %286 : vector<4x32xf32>
    %cst_78 = arith.constant 1.000000e+00 : f32
    %288 = vector.broadcast %cst_78 : f32 to vector<4x32xf32>
    %289 = arith.addf %288, %287 : vector<4x32xf32>
    %290 = arith.divf %288, %289 : vector<4x32xf32>
    %291 = vector.extract_strided_slice %279 {offsets = [0, 32], sizes = [4, 32], strides = [1, 1]} : vector<4x96xf32> to vector<4x32xf32>
    %292 = vector.extract_strided_slice %282 {offsets = [0, 32], sizes = [4, 32], strides = [1, 1]} : vector<4x96xf32> to vector<4x32xf32>
    %293 = arith.addf %291, %292 : vector<4x32xf32>
    %294 = arith.negf %293 : vector<4x32xf32>
    %295 = math.exp %294 : vector<4x32xf32>
    %cst_79 = arith.constant 1.000000e+00 : f32
    %296 = vector.broadcast %cst_79 : f32 to vector<4x32xf32>
    %297 = arith.addf %296, %295 : vector<4x32xf32>
    %298 = arith.divf %296, %297 : vector<4x32xf32>
    %299 = vector.extract_strided_slice %279 {offsets = [0, 64], sizes = [4, 32], strides = [1, 1]} : vector<4x96xf32> to vector<4x32xf32>
    %300 = vector.extract_strided_slice %282 {offsets = [0, 64], sizes = [4, 32], strides = [1, 1]} : vector<4x96xf32> to vector<4x32xf32>
    %301 = arith.mulf %290, %300 : vector<4x32xf32>
    %302 = arith.addf %299, %301 : vector<4x32xf32>
    %303 = math.tanh %302 : vector<4x32xf32>
    %cst_80 = arith.constant 1.000000e+00 : f32
    %304 = vector.broadcast %cst_80 : f32 to vector<4x32xf32>
    %305 = arith.subf %304, %298 : vector<4x32xf32>
    %306 = arith.mulf %305, %303 : vector<4x32xf32>
    %307 = arith.mulf %298, %270 : vector<4x32xf32>
    %308 = arith.addf %306, %307 : vector<4x32xf32>
    %309 = arith.index_cast %c7_i32 : i32 to index
    %c0_81 = arith.constant 0 : index
    %c0_82 = arith.constant 0 : index
    %310 = vector.load %arg7[%309, %c0_81, %c0_82] : memref<8x4x32xf32, #tpu.memory_space<vmem>>, vector<1x4x32xf32>
    %311 = vector.shape_cast %310 : vector<1x4x32xf32> to vector<4x32xf32>
    %312 = vector.shape_cast %308 : vector<4x32xf32> to vector<1x4x32xf32>
    tpu.vector_store %arg7[%309, %c0_81, %c0_82], %312 {strides = array<i32>} : memref<8x4x32xf32, #tpu.memory_space<vmem>>, vector<1x4x32xf32>,
    %c8_i32 = arith.constant 8 : i32
    return
  }
}

module attributes {stable_mosaic.version = 11 : i64} {
  func.func @_vocab_proj_kernel(%arg0: memref<32x32xf32, #tpu.memory_space<vmem>>, %arg1: memref<32x16xf32, #tpu.memory_space<vmem>>, %arg2: memref<1x16xf32, #tpu.memory_space<vmem>>, %arg3: memref<32x16xf32, #tpu.memory_space<vmem>>) attributes {dimension_semantics = [], scalar_prefetch = 0 : i64, scratch_operands = 0 : i64, tpu.core_type = #tpu.core_type<tc>} {
    %c0 = arith.constant 0 : index
    %c0_0 = arith.constant 0 : index
    %0 = vector.load %arg0[%c0, %c0_0] : memref<32x32xf32, #tpu.memory_space<vmem>>, vector<32x32xf32>
    %c0_1 = arith.constant 0 : index
    %c0_2 = arith.constant 0 : index
    %1 = vector.load %arg1[%c0_1, %c0_2] : memref<32x16xf32, #tpu.memory_space<vmem>>, vector<32x16xf32>
    %cst = arith.constant dense<0.000000e+00> : vector<32x16xf32>
    %2 = tpu.matmul %0, %1, %cst {dimension_numbers = #tpu.dot_dimension_numbers<[1], [0], [0], [1], [0, 0, 1, 1], [], []>} : vector<32x32xf32>, vector<32x16xf32>, vector<32x16xf32> -> vector<32x16xf32>
    %c0_3 = arith.constant 0 : index
    %c0_4 = arith.constant 0 : index
    %3 = vector.load %arg2[%c0_3, %c0_4] : memref<1x16xf32, #tpu.memory_space<vmem>>, vector<1x16xf32>
    %4 = vector.broadcast %3 : vector<1x16xf32> to vector<32x16xf32>
    %5 = arith.addf %2, %4 : vector<32x16xf32>
    %c0_5 = arith.constant 0 : index
    %c0_6 = arith.constant 0 : index
    %6 = vector.load %arg3[%c0_5, %c0_6] : memref<32x16xf32, #tpu.memory_space<vmem>>, vector<32x16xf32>
    tpu.vector_store %arg3[%c0_5, %c0_6], %5 {strides = array<i32>} : memref<32x16xf32, #tpu.memory_space<vmem>>, vector<32x16xf32>,
    return
  }
}

</mosaic_0001>

<llo_original>
// kernel: encoder_decoder_forward.5
$region0: #{encoder_decoder_forward.5}
  #allocation0 [shape = 'u32[]', space=smem, size = 0x4, offset = 0x4, fixed_abs, tag = 'smem constant byte address 0x4 - core index']
  #allocation1 [shape = 'u32[144,128]{1,0:T(1,128)}', space=vmem, size = 0x12000, scoped, tag = 'internal scratch']
  %s0 = inlined_call_operand.vmem [shape: f32[32,32], index: 0, kind: input, shape index: {}]
  %s1 = inlined_call_operand.vmem [shape: f32[32,16], index: 1, kind: input, shape index: {}]
  %s2 = inlined_call_operand.vmem [shape: f32[1,16], index: 2, kind: input, shape index: {}]
  %s3 = inlined_call_operand.hbm [shape: f32[32,16], index: 3, kind: output, shape index: {}]
  %s4 = sld [smem:[#allocation0]]
  $region22: #{encoder_decoder_forward.5} parent=0
    _
  %s6 = ssub.s32 1, %s4
  %s7 = scalar_select 0, %s6, %s4
  $region1: #{encoder_decoder_forward.5} parent=0
    #allocation2 [shape = 'u8[16384]{0}', space=vmem, size = 0x4000, scoped, tag = 'output window, operand 0, single buffered']
    #allocation3 [shape = 's32[1]{0}', space=sflag, size = 0x4, scoped, tag = 'scoped memory for encoder_decoder_forward.5']
    %8 = vsyncpa [#allocation3], 0
    // Predicated region
    $region2: #{encoder_decoder_forward.5} parent=1 // pred_check
      _
    $region3: #{encoder_decoder_forward.5} parent=1 // pred_check_branch
      %10 = sbr.rel (0) target = $region5
    $region4: #{encoder_decoder_forward.5} parent=1 // pred_region
      _
    $region5: #{encoder_decoder_forward.5} parent=1 // pred_fallthru
      _
    // Predicated region
    $region6: #{encoder_decoder_forward.5} parent=1 // pred_check
      _
    $region7: #{encoder_decoder_forward.5} parent=1 // pred_check_branch
      %12 = sbr.rel (0) target = $region9
    $region8: #{encoder_decoder_forward.5} parent=1 // pred_region
      _
    $region9: #{encoder_decoder_forward.5} parent=1 // pred_fallthru
      _
    // Predicated region
    $region10: #{encoder_decoder_forward.5} parent=1 // pred_check
      _
    $region11: #{encoder_decoder_forward.5} parent=1 // pred_check_branch
      %14 = sbr.rel (0) target = $region13
    $region12: #{encoder_decoder_forward.5} parent=1 // pred_region
      _
    $region13: #{encoder_decoder_forward.5} parent=1 // pred_fallthru
      _
    %v15 = vld [vmem:[%s0] sm:$0xff]
    %v16 = vld [vmem:[%s0 + $0x8] sm:$0xff]
    %v17 = vld [vmem:[%s0 + $0x10] sm:$0xff]
    %v18 = vld [vmem:[%s0 + $0x18] sm:$0xff]
    %v19 = vld [vmem:[%s1] sm:$0xff]
    %v20 = vld [vmem:[%s1 + $0x8] sm:$0xff]
    %v21 = vld [vmem:[%s1 + $0x10] sm:$0xff]
    %v22 = vld [vmem:[%s1 + $0x18] sm:$0xff]
    %v23 = vld [vmem:[%s2] sm:$0x1]
    %v25 = vlaneseq
    %v26 = vshrl.u32 %v25, 7
    %v27 = vsub.s32 0, %v26
    %v28 = vrot.slane %v23, %v27
    %vm30 = vcmask 261120
    %v32 = vsel %vm30, %v15, 0
    %v35 = vsel %vm30, %v16, 0
    %v38 = vsel %vm30, %v17, 0
    %v41 = vsel %vm30, %v18, 0
    %43 = vmatprep.subr.mxu0 0.0
    %44 = vmatpush1.msra.mxu0 %v19
    %45 = vmatprep.subr.mxu0 0.0
    %46 = vmatpush1.msra.mxu0 %v20
    %47 = vmatprep.subr.mxu0 0.0
    %48 = vmatpush1.msra.mxu0 %v21
    %49 = vmatprep.subr.mxu0 0.0
    %50 = vmatpush1.msra.mxu0 %v22
    %51 = vmatprep.subr.mxu0 0.0
    %52 = vmatpush1.msra.mxu0 0.0
    %53 = vmatprep.subr.mxu0 0.0
    %54 = vmatpush1.msra.mxu0 0.0
    %55 = vmatprep.subr.mxu0 0.0
    %56 = vmatpush1.msra.mxu0 0.0
    %57 = vmatprep.subr.mxu0 0.0
    %58 = vmatpush1.msra.mxu0 0.0
    %59 = vmatprep.subr.mxu0 0.0
    %60 = vmatpush1.msra.mxu0 0.0
    %61 = vmatprep.subr.mxu0 0.0
    %62 = vmatpush1.msra.mxu0 0.0
    %63 = vmatprep.subr.mxu0 0.0
    %64 = vmatpush1.msra.mxu0 0.0
    %65 = vmatprep.subr.mxu0 0.0
    %66 = vmatpush1.msra.mxu0 0.0
    %67 = vmatprep.subr.mxu0 0.0
    %68 = vmatpush1.msra.mxu0 0.0
    %69 = vmatprep.subr.mxu0 0.0
    %70 = vmatpush1.msra.mxu0 0.0
    %71 = vmatprep.subr.mxu0 0.0
    %72 = vmatpush1.msra.mxu0 0.0
    %73 = vmatprep.subr.mxu0 0.0
    %74 = vmatpush1.msra.mxu0 0.0
    %75 = vmatprep.subr.mxu0 0.0
    %76 = vmatpush1.msra.mxu0 0.0
    %77 = vmatprep.subr.mxu0 0.0
    %78 = vmatpush1.msra.mxu0 0.0
    %79 = vmatprep.subr.mxu0 0.0
    %80 = vmatpush1.msra.mxu0 0.0
    %81 = vmatprep.subr.mxu0 0.0
    %82 = vmatpush1.msra.mxu0 0.0
    %83 = vmatprep.subr.mxu0 0.0
    %84 = vmatpush1.msra.mxu0 0.0
    %85 = vmatprep.subr.mxu0 0.0
    %86 = vmatpush1.msra.mxu0 0.0
    %87 = vmatprep.subr.mxu0 0.0
    %88 = vmatpush1.msra.mxu0 0.0
    %89 = vmatprep.subr.mxu0 0.0
    %90 = vmatpush1.msra.mxu0 0.0
    %91 = vmatprep.subr.mxu0 0.0
    %92 = vmatpush1.msra.mxu0 0.0
    %93 = vmatprep.subr.mxu0 0.0
    %94 = vmatpush1.msra.mxu0 0.0
    %95 = vmatprep.subr.mxu0 0.0
    %96 = vmatpush1.msra.mxu0 0.0
    %97 = vmatprep.subr.mxu0 0.0
    %98 = vmatpush1.msra.mxu0 0.0
    %99 = vmatprep.subr.mxu0 0.0
    %100 = vmatpush1.msra.mxu0 0.0
    %101 = vmatprep.subr.mxu0 0.0
    %102 = vmatpush1.msra.mxu0 0.0
    %103 = vmatprep.subr.mxu0 0.0
    %104 = vmatpush1.msra.mxu0 0.0
    %105 = vmatprep.subr.mxu0 0.0
    %106 = vmatpush1.msra.mxu0 0.0
    %107 = vmatprep.mubr.f32.mxu0 0.0
    %108 = vmatmul.mubr.f32.gmra.mrb[0].mxu0 %v32
    %v109 = vpop.f32.mrb[0].mxu0
    %v110 = vadd.f32 %v28, %v109
    %v111 = vpop.f32.mrb[0].mxu0
    %112 = vmatprep.mubr.f32.mxu0 0.0
    %113 = vmatmul.mubr.f32.gmra.mrb[0].mxu0 %v35
    %v114 = vpop.f32.mrb[0].mxu0
    %v115 = vadd.f32 %v28, %v114
    %v116 = vpop.f32.mrb[0].mxu0
    %117 = vmatprep.mubr.f32.mxu0 0.0
    %118 = vmatmul.mubr.f32.gmra.mrb[0].mxu0 %v38
    %v119 = vpop.f32.mrb[0].mxu0
    %v120 = vadd.f32 %v28, %v119
    %v121 = vpop.f32.mrb[0].mxu0
    %122 = vmatprep.mubr.f32.mxu0 0.0
    %123 = vmatmul.mubr.f32.gmra.mrb[0].mxu0 %v41
    %v124 = vpop.f32.mrb[0].mxu0
    %v125 = vadd.f32 %v28, %v124
    %v126 = vpop.f32.mrb[0].mxu0
    %127 = vdwg.mxu0
    %vm128 = vcmask 130048
    %129 = vst.msk [vmem:[#allocation2] sm:$0xff] %vm128, %v110
    %130 = vst.msk [vmem:[#allocation2 + $0x8] sm:$0xff] %vm128, %v115
    %131 = vst.msk [vmem:[#allocation2 + $0x10] sm:$0xff] %vm128, %v120
    %132 = vst.msk [vmem:[#allocation2 + $0x18] sm:$0xff] %vm128, %v125
    // Predicated region
    $region14: #{encoder_decoder_forward.5} parent=1 // pred_check
      _
    $region15: #{encoder_decoder_forward.5} parent=1 // pred_check_branch
      %134 = sbr.rel (0) target = $region17
    $region16: #{encoder_decoder_forward.5} parent=1 // pred_region
      %s136 = ssub.s32 512, 512
      %137 = vsyncadd [#allocation3], %s136
      %s138 = sshll.u32 [#allocation2], 4
      %s139 = int_to_ptr.vmem [resolvable:$true] %s138
      %144 = dma.vmem_to_hbm [thread:$0]  %s139, 512, %s3, [#allocation3], 128, 128, 8
    $region17: #{encoder_decoder_forward.5} parent=1 // pred_fallthru
      _
    // Predicated region
    $region18: #{encoder_decoder_forward.5} parent=1 // pred_check
      _
    $region19: #{encoder_decoder_forward.5} parent=1 // pred_check_branch
      %146 = sbr.rel (0) target = $region21
    $region20: #{encoder_decoder_forward.5} parent=1 // pred_region
      %147 = dma.done [#allocation3], 512
    $region21: #{encoder_decoder_forward.5} parent=1 // pred_fallthru
      _
    %148 = vsyncpa [#allocation3], 1

// kernel: encoder_decoder_forward.3
$region0: #{encoder_decoder_forward.3}
  #allocation0 [shape = 'u32[]', space=smem, size = 0x4, offset = 0x4, fixed_abs, tag = 'smem constant byte address 0x4 - core index']
  #allocation1 [shape = 'u32[144,128]{1,0:T(1,128)}', space=vmem, size = 0x12000, scoped, tag = 'internal scratch']
  %s0 = inlined_call_operand.vmem [shape: f32[8,4,32], index: 0, kind: input, shape index: {}]
  %s1 = inlined_call_operand.vmem [shape: f32[32,96], index: 1, kind: input, shape index: {}]
  %s2 = inlined_call_operand.vmem [shape: f32[32,96], index: 2, kind: input, shape index: {}]
  %s3 = inlined_call_operand.vmem [shape: f32[1,96], index: 3, kind: input, shape index: {}]
  %s4 = inlined_call_operand.vmem [shape: f32[1,96], index: 4, kind: input, shape index: {}]
  %s5 = inlined_call_operand.vmem [shape: f32[4,32], index: 5, kind: output, shape index: {}]
  %s6 = sld [smem:[#allocation0]]
  $region30: #{encoder_decoder_forward.3} parent=0
    _
  %s8 = ssub.s32 1, %s6
  %s9 = scalar_select 0, %s8, %s6
  // Predicated region
  $region2: #{encoder_decoder_forward.3} parent=0 // pred_check
    _
  $region3: #{encoder_decoder_forward.3} parent=0 // pred_check_branch
    %11 = sbr.rel (0) target = $region5
  $region4: #{encoder_decoder_forward.3} parent=0 // pred_region
    _
  $region5: #{encoder_decoder_forward.3} parent=0 // pred_fallthru
    _
  // Predicated region
  $region6: #{encoder_decoder_forward.3} parent=0 // pred_check
    _
  $region7: #{encoder_decoder_forward.3} parent=0 // pred_check_branch
    %13 = sbr.rel (0) target = $region9
  $region8: #{encoder_decoder_forward.3} parent=0 // pred_region
    _
  $region9: #{encoder_decoder_forward.3} parent=0 // pred_fallthru
    _
  // Predicated region
  $region10: #{encoder_decoder_forward.3} parent=0 // pred_check
    _
  $region11: #{encoder_decoder_forward.3} parent=0 // pred_check_branch
    %15 = sbr.rel (0) target = $region13
  $region12: #{encoder_decoder_forward.3} parent=0 // pred_region
    _
  $region13: #{encoder_decoder_forward.3} parent=0 // pred_fallthru
    _
  // Predicated region
  $region14: #{encoder_decoder_forward.3} parent=0 // pred_check
    _
  $region15: #{encoder_decoder_forward.3} parent=0 // pred_check_branch
    %17 = sbr.rel (0) target = $region17
  $region16: #{encoder_decoder_forward.3} parent=0 // pred_region
    _
  $region17: #{encoder_decoder_forward.3} parent=0 // pred_fallthru
    _
  // Predicated region
  $region18: #{encoder_decoder_forward.3} parent=0 // pred_check
    _
  $region19: #{encoder_decoder_forward.3} parent=0 // pred_check_branch
    %19 = sbr.rel (0) target = $region21
  $region20: #{encoder_decoder_forward.3} parent=0 // pred_region
    _
  $region21: #{encoder_decoder_forward.3} parent=0 // pred_fallthru
    _
  %v20 = vld [vmem:[%s1] sm:$0xff]
  %v21 = vld [vmem:[%s1 + $0x8] sm:$0xff]
  %v22 = vld [vmem:[%s1 + $0x10] sm:$0xff]
  %v23 = vld [vmem:[%s1 + $0x18] sm:$0xff]
  %v24 = vld [vmem:[%s2] sm:$0xff]
  %v25 = vld [vmem:[%s2 + $0x8] sm:$0xff]
  %v26 = vld [vmem:[%s2 + $0x10] sm:$0xff]
  %v27 = vld [vmem:[%s2 + $0x18] sm:$0xff]
  %v28 = vld [vmem:[%s3] sm:$0x1]
  %v29 = vld [vmem:[%s4] sm:$0x1]
  %v30 = vld [vmem:[%s0] sm:$0xf]
  %v32 = vlaneseq
  %v33 = vshrl.u32 %v32, 7
  %v34 = vsub.s32 0, %v33
  %v35 = vrot.slane %v28, %v34
  %vm37 = vcmask 261120
  %v39 = vsel %vm37, %v30, 0
  %41 = vmatprep.subr.mxu0 0.0
  %42 = vmatpush1.msra.mxu0 %v20
  %43 = vmatprep.subr.mxu0 0.0
  %44 = vmatpush1.msra.mxu0 %v21
  %45 = vmatprep.subr.mxu0 0.0
  %46 = vmatpush1.msra.mxu0 %v22
  %47 = vmatprep.subr.mxu0 0.0
  %48 = vmatpush1.msra.mxu0 %v23
  %49 = vmatprep.subr.mxu0 0.0
  %50 = vmatpush1.msra.mxu0 0.0
  %51 = vmatprep.subr.mxu0 0.0
  %52 = vmatpush1.msra.mxu0 0.0
  %53 = vmatprep.subr.mxu0 0.0
  %54 = vmatpush1.msra.mxu0 0.0
  %55 = vmatprep.subr.mxu0 0.0
  %56 = vmatpush1.msra.mxu0 0.0
  %57 = vmatprep.subr.mxu0 0.0
  %58 = vmatpush1.msra.mxu0 0.0
  %59 = vmatprep.subr.mxu0 0.0
  %60 = vmatpush1.msra.mxu0 0.0
  %61 = vmatprep.subr.mxu0 0.0
  %62 = vmatpush1.msra.mxu0 0.0
  %63 = vmatprep.subr.mxu0 0.0
  %64 = vmatpush1.msra.mxu0 0.0
  %65 = vmatprep.subr.mxu0 0.0
  %66 = vmatpush1.msra.mxu0 0.0
  %67 = vmatprep.subr.mxu0 0.0
  %68 = vmatpush1.msra.mxu0 0.0
  %69 = vmatprep.subr.mxu0 0.0
  %70 = vmatpush1.msra.mxu0 0.0
  %71 = vmatprep.subr.mxu0 0.0
  %72 = vmatpush1.msra.mxu0 0.0
  %73 = vmatprep.subr.mxu0 0.0
  %74 = vmatpush1.msra.mxu0 0.0
  %75 = vmatprep.subr.mxu0 0.0
  %76 = vmatpush1.msra.mxu0 0.0
  %77 = vmatprep.subr.mxu0 0.0
  %78 = vmatpush1.msra.mxu0 0.0
  %79 = vmatprep.subr.mxu0 0.0
  %80 = vmatpush1.msra.mxu0 0.0
  %81 = vmatprep.subr.mxu0 0.0
  %82 = vmatpush1.msra.mxu0 0.0
  %83 = vmatprep.subr.mxu0 0.0
  %84 = vmatpush1.msra.mxu0 0.0
  %85 = vmatprep.subr.mxu0 0.0
  %86 = vmatpush1.msra.mxu0 0.0
  %87 = vmatprep.subr.mxu0 0.0
  %88 = vmatpush1.msra.mxu0 0.0
  %89 = vmatprep.subr.mxu0 0.0
  %90 = vmatpush1.msra.mxu0 0.0
  %91 = vmatprep.subr.mxu0 0.0
  %92 = vmatpush1.msra.mxu0 0.0
  %93 = vmatprep.subr.mxu0 0.0
  %94 = vmatpush1.msra.mxu0 0.0
  %95 = vmatprep.subr.mxu0 0.0
  %96 = vmatpush1.msra.mxu0 0.0
  %97 = vmatprep.subr.mxu0 0.0
  %98 = vmatpush1.msra.mxu0 0.0
  %99 = vmatprep.subr.mxu0 0.0
  %100 = vmatpush1.msra.mxu0 0.0
  %101 = vmatprep.subr.mxu0 0.0
  %102 = vmatpush1.msra.mxu0 0.0
  %103 = vmatprep.subr.mxu0 0.0
  %104 = vmatpush1.msra.mxu0 0.0
  %105 = vmatprep.mubr.f32.mxu0 0.0
  %106 = vmatmul.mubr.f32.gmra.mrb[0].mxu0 %v39
  %v107 = vpop.f32.mrb[0].mxu0
  %v108 = vadd.f32 %v35, %v107
  %v109 = vpop.f32.mrb[0].mxu0
  %110 = vdwg.mxu0
  %v112 = vlaneseq
  %v113 = vshrl.u32 %v112, 7
  %v114 = vsub.s32 0, %v113
  %v115 = vrot.slane %v29, %v114
  %v118 = vsel %vm37, 0.0, 0
  %120 = vmatprep.subr.mxu0 0.0
  %121 = vmatpush1.msra.mxu0 %v24
  %122 = vmatprep.subr.mxu0 0.0
  %123 = vmatpush1.msra.mxu0 %v25
  %124 = vmatprep.subr.mxu0 0.0
  %125 = vmatpush1.msra.mxu0 %v26
  %126 = vmatprep.subr.mxu0 0.0
  %127 = vmatpush1.msra.mxu0 %v27
  %128 = vmatprep.subr.mxu0 0.0
  %129 = vmatpush1.msra.mxu0 0.0
  %130 = vmatprep.subr.mxu0 0.0
  %131 = vmatpush1.msra.mxu0 0.0
  %132 = vmatprep.subr.mxu0 0.0
  %133 = vmatpush1.msra.mxu0 0.0
  %134 = vmatprep.subr.mxu0 0.0
  %135 = vmatpush1.msra.mxu0 0.0
  %136 = vmatprep.subr.mxu0 0.0
  %137 = vmatpush1.msra.mxu0 0.0
  %138 = vmatprep.subr.mxu0 0.0
  %139 = vmatpush1.msra.mxu0 0.0
  %140 = vmatprep.subr.mxu0 0.0
  %141 = vmatpush1.msra.mxu0 0.0
  %142 = vmatprep.subr.mxu0 0.0
  %143 = vmatpush1.msra.mxu0 0.0
  %144 = vmatprep.subr.mxu0 0.0
  %145 = vmatpush1.msra.mxu0 0.0
  %146 = vmatprep.subr.mxu0 0.0
  %147 = vmatpush1.msra.mxu0 0.0
  %148 = vmatprep.subr.mxu0 0.0
  %149 = vmatpush1.msra.mxu0 0.0
  %150 = vmatprep.subr.mxu0 0.0
  %151 = vmatpush1.msra.mxu0 0.0
  %152 = vmatprep.subr.mxu0 0.0
  %153 = vmatpush1.msra.mxu0 0.0
  %154 = vmatprep.subr.mxu0 0.0
  %155 = vmatpush1.msra.mxu0 0.0
  %156 = vmatprep.subr.mxu0 0.0
  %157 = vmatpush1.msra.mxu0 0.0
  %158 = vmatprep.subr.mxu0 0.0
  %159 = vmatpush1.msra.mxu0 0.0
  %160 = vmatprep.subr.mxu0 0.0
  %161 = vmatpush1.msra.mxu0 0.0
  %162 = vmatprep.subr.mxu0 0.0
  %163 = vmatpush1.msra.mxu0 0.0
  %164 = vmatprep.subr.mxu0 0.0
  %165 = vmatpush1.msra.mxu0 0.0
  %166 = vmatprep.subr.mxu0 0.0
  %167 = vmatpush1.msra.mxu0 0.0
  %168 = vmatprep.subr.mxu0 0.0
  %169 = vmatpush1.msra.mxu0 0.0
  %170 = vmatprep.subr.mxu0 0.0
  %171 = vmatpush1.msra.mxu0 0.0
  %172 = vmatprep.subr.mxu0 0.0
  %173 = vmatpush1.msra.mxu0 0.0
  %174 = vmatprep.subr.mxu0 0.0
  %175 = vmatpush1.msra.mxu0 0.0
  %176 = vmatprep.subr.mxu0 0.0
  %177 = vmatpush1.msra.mxu0 0.0
  %178 = vmatprep.subr.mxu0 0.0
  %179 = vmatpush1.msra.mxu0 0.0
  %180 = vmatprep.subr.mxu0 0.0
  %181 = vmatpush1.msra.mxu0 0.0
  %182 = vmatprep.subr.mxu0 0.0
  %183 = vmatpush1.msra.mxu0 0.0
  %184 = vmatprep.mubr.f32.mxu0 0.0
  %185 = vmatmul.mubr.f32.gmra.mrb[0].mxu0 %v118
  %v186 = vpop.f32.mrb[0].mxu0
  %v187 = vadd.f32 %v115, %v186
  %v188 = vpop.f32.mrb[0].mxu0
  %189 = vdwg.mxu0
  %v190 = vadd.f32 %v108, %v187
  %v191 = vxor.u32 %v190, 2147483648
  %v192 = vmul.f32 %v191, 1.442695
  %v193 = vpow.pop %v192
  %v194 = vadd.f32 %v193, 1.0
  %v195 = vrcp.pop %v194
  %v196 = vmul.f32 1.0, %v195
  %198 = vrot.lane.b32.xlu0 %v187, 64
  %v199 = vpop.permute.xlu0 %198
  %v201 = vmul.f32 %v196, %v199
  %203 = vrot.lane.b32.xlu0 %v201, 64
  %v204 = vpop.permute.xlu0 %203
  %v206 = vadd.f32 %v108, %v204
  %v207 = vtanh.pop %v206
  %v208 = vsub.f32 1.0, %v196
  %210 = vrot.lane.b32.xlu0 %v207, 96
  %v211 = vpop.permute.xlu0 %210
  %v213 = vmul.f32 %v208, %v211
  %v214 = vmul.f32 %v196, 0.0
  %v215 = vadd.f32 %v213, %v214
  %s216 = scalar_lea.vmem %s0, 4
  %v217 = vld [vmem:[%s216] sm:$0xf]
  %v219 = vsel %vm37, %v217, 0
  %221 = vmatprep.subr.mxu0 0.0
  %222 = vmatpush1.msra.mxu0 %v20
  %223 = vmatprep.subr.mxu0 0.0
  %224 = vmatpush1.msra.mxu0 %v21
  %225 = vmatprep.subr.mxu0 0.0
  %226 = vmatpush1.msra.mxu0 %v22
  %227 = vmatprep.subr.mxu0 0.0
  %228 = vmatpush1.msra.mxu0 %v23
  %229 = vmatprep.subr.mxu0 0.0
  %230 = vmatpush1.msra.mxu0 0.0
  %231 = vmatprep.subr.mxu0 0.0
  %232 = vmatpush1.msra.mxu0 0.0
  %233 = vmatprep.subr.mxu0 0.0
  %234 = vmatpush1.msra.mxu0 0.0
  %235 = vmatprep.subr.mxu0 0.0
  %236 = vmatpush1.msra.mxu0 0.0
  %237 = vmatprep.subr.mxu0 0.0
  %238 = vmatpush1.msra.mxu0 0.0
  %239 = vmatprep.subr.mxu0 0.0
  %240 = vmatpush1.msra.mxu0 0.0
  %241 = vmatprep.subr.mxu0 0.0
  %242 = vmatpush1.msra.mxu0 0.0
  %243 = vmatprep.subr.mxu0 0.0
  %244 = vmatpush1.msra.mxu0 0.0
  %245 = vmatprep.subr.mxu0 0.0
  %246 = vmatpush1.msra.mxu0 0.0
  %247 = vmatprep.subr.mxu0 0.0
  %248 = vmatpush1.msra.mxu0 0.0
  %249 = vmatprep.subr.mxu0 0.0
  %250 = vmatpush1.msra.mxu0 0.0
  %251 = vmatprep.subr.mxu0 0.0
  %252 = vmatpush1.msra.mxu0 0.0
  %253 = vmatprep.subr.mxu0 0.0
  %254 = vmatpush1.msra.mxu0 0.0
  %255 = vmatprep.subr.mxu0 0.0
  %256 = vmatpush1.msra.mxu0 0.0
  %257 = vmatprep.subr.mxu0 0.0
  %258 = vmatpush1.msra.mxu0 0.0
  %259 = vmatprep.subr.mxu0 0.0
  %260 = vmatpush1.msra.mxu0 0.0
  %261 = vmatprep.subr.mxu0 0.0
  %262 = vmatpush1.msra.mxu0 0.0
  %263 = vmatprep.subr.mxu0 0.0
  %264 = vmatpush1.msra.mxu0 0.0
  %265 = vmatprep.subr.mxu0 0.0
  %266 = vmatpush1.msra.mxu0 0.0
  %267 = vmatprep.subr.mxu0 0.0
  %268 = vmatpush1.msra.mxu0 0.0
  %269 = vmatprep.subr.mxu0 0.0
  %270 = vmatpush1.msra.mxu0 0.0
  %271 = vmatprep.subr.mxu0 0.0
  %272 = vmatpush1.msra.mxu0 0.0
  %273 = vmatprep.subr.mxu0 0.0
  %274 = vmatpush1.msra.mxu0 0.0
  %275 = vmatprep.subr.mxu0 0.0
  %276 = vmatpush1.msra.mxu0 0.0
  %277 = vmatprep.subr.mxu0 0.0
  %278 = vmatpush1.msra.mxu0 0.0
  %279 = vmatprep.subr.mxu0 0.0
  %280 = vmatpush1.msra.mxu0 0.0
  %281 = vmatprep.subr.mxu0 0.0
  %282 = vmatpush1.msra.mxu0 0.0
  %283 = vmatprep.subr.mxu0 0.0
  %284 = vmatpush1.msra.mxu0 0.0
  %285 = vmatprep.mubr.f32.mxu0 0.0
  %286 = vmatmul.mubr.f32.gmra.mrb[0].mxu0 %v219
  %v287 = vpop.f32.mrb[0].mxu0
  %v288 = vadd.f32 %v35, %v287
  %v289 = vpop.f32.mrb[0].mxu0
  %290 = vdwg.mxu0
  %292 = vrot.lane.b32.xlu0 %v215, 96
  %v293 = vpop.permute.xlu0 %292
  %v294 = vsel %vm37, %v293, 0
  %296 = vmatprep.subr.mxu0 0.0
  %297 = vmatpush1.msra.mxu0 %v24
  %298 = vmatprep.subr.mxu0 0.0
  %299 = vmatpush1.msra.mxu0 %v25
  %300 = vmatprep.subr.mxu0 0.0
  %301 = vmatpush1.msra.mxu0 %v26
  %302 = vmatprep.subr.mxu0 0.0
  %303 = vmatpush1.msra.mxu0 %v27
  %304 = vmatprep.subr.mxu0 0.0
  %305 = vmatpush1.msra.mxu0 0.0
  %306 = vmatprep.subr.mxu0 0.0
  %307 = vmatpush1.msra.mxu0 0.0
  %308 = vmatprep.subr.mxu0 0.0
  %309 = vmatpush1.msra.mxu0 0.0
  %310 = vmatprep.subr.mxu0 0.0
  %311 = vmatpush1.msra.mxu0 0.0
  %312 = vmatprep.subr.mxu0 0.0
  %313 = vmatpush1.msra.mxu0 0.0
  %314 = vmatprep.subr.mxu0 0.0
  %315 = vmatpush1.msra.mxu0 0.0
  %316 = vmatprep.subr.mxu0 0.0
  %317 = vmatpush1.msra.mxu0 0.0
  %318 = vmatprep.subr.mxu0 0.0
  %319 = vmatpush1.msra.mxu0 0.0
  %320 = vmatprep.subr.mxu0 0.0
  %321 = vmatpush1.msra.mxu0 0.0
  %322 = vmatprep.subr.mxu0 0.0
  %323 = vmatpush1.msra.mxu0 0.0
  %324 = vmatprep.subr.mxu0 0.0
  %325 = vmatpush1.msra.mxu0 0.0
  %326 = vmatprep.subr.mxu0 0.0
  %327 = vmatpush1.msra.mxu0 0.0
  %328 = vmatprep.subr.mxu0 0.0
  %329 = vmatpush1.msra.mxu0 0.0
  %330 = vmatprep.subr.mxu0 0.0
  %331 = vmatpush1.msra.mxu0 0.0
  %332 = vmatprep.subr.mxu0 0.0
  %333 = vmatpush1.msra.mxu0 0.0
  %334 = vmatprep.subr.mxu0 0.0
  %335 = vmatpush1.msra.mxu0 0.0
  %336 = vmatprep.subr.mxu0 0.0
  %337 = vmatpush1.msra.mxu0 0.0
  %338 = vmatprep.subr.mxu0 0.0
  %339 = vmatpush1.msra.mxu0 0.0
  %340 = vmatprep.subr.mxu0 0.0
  %341 = vmatpush1.msra.mxu0 0.0
  %342 = vmatprep.subr.mxu0 0.0
  %343 = vmatpush1.msra.mxu0 0.0
  %344 = vmatprep.subr.mxu0 0.0
  %345 = vmatpush1.msra.mxu0 0.0
  %346 = vmatprep.subr.mxu0 0.0
  %347 = vmatpush1.msra.mxu0 0.0
  %348 = vmatprep.subr.mxu0 0.0
  %349 = vmatpush1.msra.mxu0 0.0
  %350 = vmatprep.subr.mxu0 0.0
  %351 = vmatpush1.msra.mxu0 0.0
  %352 = vmatprep.subr.mxu0 0.0
  %353 = vmatpush1.msra.mxu0 0.0
  %354 = vmatprep.subr.mxu0 0.0
  %355 = vmatpush1.msra.mxu0 0.0
  %356 = vmatprep.subr.mxu0 0.0
  %357 = vmatpush1.msra.mxu0 0.0
  %358 = vmatprep.subr.mxu0 0.0
  %359 = vmatpush1.msra.mxu0 0.0
  %360 = vmatprep.mubr.f32.mxu0 0.0
  %361 = vmatmul.mubr.f32.gmra.mrb[0].mxu0 %v294
  %v362 = vpop.f32.mrb[0].mxu0
  %v363 = vadd.f32 %v115, %v362
  %v364 = vpop.f32.mrb[0].mxu0
  %365 = vdwg.mxu0
  %v366 = vadd.f32 %v288, %v363
  %v367 = vxor.u32 %v366, 2147483648
  %v368 = vmul.f32 %v367, 1.442695
  %v369 = vpow.pop %v368
  %v370 = vadd.f32 %v369, 1.0
  %v371 = vrcp.pop %v370
  %v372 = vmul.f32 1.0, %v371
  %374 = vrot.lane.b32.xlu0 %v363, 64
  %v375 = vpop.permute.xlu0 %374
  %v377 = vmul.f32 %v372, %v375
  %379 = vrot.lane.b32.xlu0 %v377, 64
  %v380 = vpop.permute.xlu0 %379
  %v382 = vadd.f32 %v288, %v380
  %v383 = vtanh.pop %v382
  %v384 = vsub.f32 1.0, %v372
  %386 = vrot.lane.b32.xlu0 %v383, 96
  %v387 = vpop.permute.xlu0 %386
  %v389 = vmul.f32 %v384, %v387
  %v390 = vmul.f32 %v372, %v215
  %v391 = vadd.f32 %v389, %v390
  %s392 = scalar_lea.vmem %s0, 8
  %v393 = vld [vmem:[%s392] sm:$0xf]
  %v395 = vsel %vm37, %v393, 0
  %397 = vmatprep.subr.mxu0 0.0
  %398 = vmatpush1.msra.mxu0 %v20
  %399 = vmatprep.subr.mxu0 0.0
  %400 = vmatpush1.msra.mxu0 %v21
  %401 = vmatprep.subr.mxu0 0.0
  %402 = vmatpush1.msra.mxu0 %v22
  %403 = vmatprep.subr.mxu0 0.0
  %404 = vmatpush1.msra.mxu0 %v23
  %405 = vmatprep.subr.mxu0 0.0
  %406 = vmatpush1.msra.mxu0 0.0
  %407 = vmatprep.subr.mxu0 0.0
  %408 = vmatpush1.msra.mxu0 0.0
  %409 = vmatprep.subr.mxu0 0.0
  %410 = vmatpush1.msra.mxu0 0.0
  %411 = vmatprep.subr.mxu0 0.0
  %412 = vmatpush1.msra.mxu0 0.0
  %413 = vmatprep.subr.mxu0 0.0
  %414 = vmatpush1.msra.mxu0 0.0
  %415 = vmatprep.subr.mxu0 0.0
  %416 = vmatpush1.msra.mxu0 0.0
  %417 = vmatprep.subr.mxu0 0.0
  %418 = vmatpush1.msra.mxu0 0.0
  %419 = vmatprep.subr.mxu0 0.0
  %420 = vmatpush1.msra.mxu0 0.0
  %421 = vmatprep.subr.mxu0 0.0
  %422 = vmatpush1.msra.mxu0 0.0
  %423 = vmatprep.subr.mxu0 0.0
  %424 = vmatpush1.msra.mxu0 0.0
  %425 = vmatprep.subr.mxu0 0.0
  %426 = vmatpush1.msra.mxu0 0.0
  %427 = vmatprep.subr.mxu0 0.0
  %428 = vmatpush1.msra.mxu0 0.0
  %429 = vmatprep.subr.mxu0 0.0
  %430 = vmatpush1.msra.mxu0 0.0
  %431 = vmatprep.subr.mxu0 0.0
  %432 = vmatpush1.msra.mxu0 0.0
  %433 = vmatprep.subr.mxu0 0.0
  %434 = vmatpush1.msra.mxu0 0.0
  %435 = vmatprep.subr.mxu0 0.0
  %436 = vmatpush1.msra.mxu0 0.0
  %437 = vmatprep.subr.mxu0 0.0
  %438 = vmatpush1.msra.mxu0 0.0
  %439 = vmatprep.subr.mxu0 0.0
  %440 = vmatpush1.msra.mxu0 0.0
  %441 = vmatprep.subr.mxu0 0.0
  %442 = vmatpush1.msra.mxu0 0.0
  %443 = vmatprep.subr.mxu0 0.0
  %444 = vmatpush1.msra.mxu0 0.0
  %445 = vmatprep.subr.mxu0 0.0
  %446 = vmatpush1.msra.mxu0 0.0
  %447 = vmatprep.subr.mxu0 0.0
  %448 = vmatpush1.msra.mxu0 0.0
  %449 = vmatprep.subr.mxu0 0.0
  %450 = vmatpush1.msra.mxu0 0.0
  %451 = vmatprep.subr.mxu0 0.0
  %452 = vmatpush1.msra.mxu0 0.0
  %453 = vmatprep.subr.mxu0 0.0
  %454 = vmatpush1.msra.mxu0 0.0
  %455 = vmatprep.subr.mxu0 0.0
  %456 = vmatpush1.msra.mxu0 0.0
  %457 = vmatprep.subr.mxu0 0.0
  %458 = vmatpush1.msra.mxu0 0.0
  %459 = vmatprep.subr.mxu0 0.0
  %460 = vmatpush1.msra.mxu0 0.0
  %461 = vmatprep.mubr.f32.mxu0 0.0
  %462 = vmatmul.mubr.f32.gmra.mrb[0].mxu0 %v395
  %v463 = vpop.f32.mrb[0].mxu0
  %v464 = vadd.f32 %v35, %v463
  %v465 = vpop.f32.mrb[0].mxu0
  %466 = vdwg.mxu0
  %468 = vrot.lane.b32.xlu0 %v391, 96
  %v469 = vpop.permute.xlu0 %468
  %v470 = vsel %vm37, %v469, 0
  %472 = vmatprep.subr.mxu0 0.0
  %473 = vmatpush1.msra.mxu0 %v24
  %474 = vmatprep.subr.mxu0 0.0
  %475 = vmatpush1.msra.mxu0 %v25
  %476 = vmatprep.subr.mxu0 0.0
  %477 = vmatpush1.msra.mxu0 %v26
  %478 = vmatprep.subr.mxu0 0.0
  %479 = vmatpush1.msra.mxu0 %v27
  %480 = vmatprep.subr.mxu0 0.0
  %481 = vmatpush1.msra.mxu0 0.0
  %482 = vmatprep.subr.mxu0 0.0
  %483 = vmatpush1.msra.mxu0 0.0
  %484 = vmatprep.subr.mxu0 0.0
  %485 = vmatpush1.msra.mxu0 0.0
  %486 = vmatprep.subr.mxu0 0.0
  %487 = vmatpush1.msra.mxu0 0.0
  %488 = vmatprep.subr.mxu0 0.0
  %489 = vmatpush1.msra.mxu0 0.0
  %490 = vmatprep.subr.mxu0 0.0
  %491 = vmatpush1.msra.mxu0 0.0
  %492 = vmatprep.subr.mxu0 0.0
  %493 = vmatpush1.msra.mxu0 0.0
  %494 = vmatprep.subr.mxu0 0.0
  %495 = vmatpush1.msra.mxu0 0.0
  %496 = vmatprep.subr.mxu0 0.0
  %497 = vmatpush1.msra.mxu0 0.0
  %498 = vmatprep.subr.mxu0 0.0
  %499 = vmatpush1.msra.mxu0 0.0
  %500 = vmatprep.subr.mxu0 0.0
  %501 = vmatpush1.msra.mxu0 0.0
  %502 = vmatprep.subr.mxu0 0.0
  %503 = vmatpush1.msra.mxu0 0.0
  %504 = vmatprep.subr.mxu0 0.0
  %505 = vmatpush1.msra.mxu0 0.0
  %506 = vmatprep.subr.mxu0 0.0
  %507 = vmatpush1.msra.mxu0 0.0
  %508 = vmatprep.subr.mxu0 0.0
  %509 = vmatpush1.msra.mxu0 0.0
  %510 = vmatprep.subr.mxu0 0.0
  %511 = vmatpush1.msra.mxu0 0.0
  %512 = vmatprep.subr.mxu0 0.0
  %513 = vmatpush1.msra.mxu0 0.0
  %514 = vmatprep.subr.mxu0 0.0
  %515 = vmatpush1.msra.mxu0 0.0
  %516 = vmatprep.subr.mxu0 0.0
  %517 = vmatpush1.msra.mxu0 0.0
  %518 = vmatprep.subr.mxu0 0.0
  %519 = vmatpush1.msra.mxu0 0.0
  %520 = vmatprep.subr.mxu0 0.0
  %521 = vmatpush1.msra.mxu0 0.0
  %522 = vmatprep.subr.mxu0 0.0
  %523 = vmatpush1.msra.mxu0 0.0
  %524 = vmatprep.subr.mxu0 0.0
  %525 = vmatpush1.msra.mxu0 0.0
  %526 = vmatprep.subr.mxu0 0.0
  %527 = vmatpush1.msra.mxu0 0.0
  %528 = vmatprep.subr.mxu0 0.0
  %529 = vmatpush1.msra.mxu0 0.0
  %530 = vmatprep.subr.mxu0 0.0
  %531 = vmatpush1.msra.mxu0 0.0
  %532 = vmatprep.subr.mxu0 0.0
  %533 = vmatpush1.msra.mxu0 0.0
  %534 = vmatprep.subr.mxu0 0.0
  %535 = vmatpush1.msra.mxu0 0.0
  %536 = vmatprep.mubr.f32.mxu0 0.0
  %537 = vmatmul.mubr.f32.gmra.mrb[0].mxu0 %v470
  %v538 = vpop.f32.mrb[0].mxu0
  %v539 = vadd.f32 %v115, %v538
  %v540 = vpop.f32.mrb[0].mxu0
  %541 = vdwg.mxu0
  %v542 = vadd.f32 %v464, %v539
  %v543 = vxor.u32 %v542, 2147483648
  %v544 = vmul.f32 %v543, 1.442695
  %v545 = vpow.pop %v544
  %v546 = vadd.f32 %v545, 1.0
  %v547 = vrcp.pop %v546
  %v548 = vmul.f32 1.0, %v547
  %550 = vrot.lane.b32.xlu0 %v539, 64
  %v551 = vpop.permute.xlu0 %550
  %v553 = vmul.f32 %v548, %v551
  %555 = vrot.lane.b32.xlu0 %v553, 64
  %v556 = vpop.permute.xlu0 %555
  %v558 = vadd.f32 %v464, %v556
  %v559 = vtanh.pop %v558
  %v560 = vsub.f32 1.0, %v548
  %562 = vrot.lane.b32.xlu0 %v559, 96
  %v563 = vpop.permute.xlu0 %562
  %v565 = vmul.f32 %v560, %v563
  %v566 = vmul.f32 %v548, %v391
  %v567 = vadd.f32 %v565, %v566
  %s568 = scalar_lea.vmem %s0, 12
  %v569 = vld [vmem:[%s568] sm:$0xf]
  %v571 = vsel %vm37, %v569, 0
  %573 = vmatprep.subr.mxu0 0.0
  %574 = vmatpush1.msra.mxu0 %v20
  %575 = vmatprep.subr.mxu0 0.0
  %576 = vmatpush1.msra.mxu0 %v21
  %577 = vmatprep.subr.mxu0 0.0
  %578 = vmatpush1.msra.mxu0 %v22
  %579 = vmatprep.subr.mxu0 0.0
  %580 = vmatpush1.msra.mxu0 %v23
  %581 = vmatprep.subr.mxu0 0.0
  %582 = vmatpush1.msra.mxu0 0.0
  %583 = vmatprep.subr.mxu0 0.0
  %584 = vmatpush1.msra.mxu0 0.0
  %585 = vmatprep.subr.mxu0 0.0
  %586 = vmatpush1.msra.mxu0 0.0
  %587 = vmatprep.subr.mxu0 0.0
  %588 = vmatpush1.msra.mxu0 0.0
  %589 = vmatprep.subr.mxu0 0.0
  %590 = vmatpush1.msra.mxu0 0.0
  %591 = vmatprep.subr.mxu0 0.0
  %592 = vmatpush1.msra.mxu0 0.0
  %593 = vmatprep.subr.mxu0 0.0
  %594 = vmatpush1.msra.mxu0 0.0
  %595 = vmatprep.subr.mxu0 0.0
  %596 = vmatpush1.msra.mxu0 0.0
  %597 = vmatprep.subr.mxu0 0.0
  %598 = vmatpush1.msra.mxu0 0.0
  %599 = vmatprep.subr.mxu0 0.0
  %600 = vmatpush1.msra.mxu0 0.0
  %601 = vmatprep.subr.mxu0 0.0
  %602 = vmatpush1.msra.mxu0 0.0
  %603 = vmatprep.subr.mxu0 0.0
  %604 = vmatpush1.msra.mxu0 0.0
  %605 = vmatprep.subr.mxu0 0.0
  %606 = vmatpush1.msra.mxu0 0.0
  %607 = vmatprep.subr.mxu0 0.0
  %608 = vmatpush1.msra.mxu0 0.0
  %609 = vmatprep.subr.mxu0 0.0
  %610 = vmatpush1.msra.mxu0 0.0
  %611 = vmatprep.subr.mxu0 0.0
  %612 = vmatpush1.msra.mxu0 0.0
  %613 = vmatprep.subr.mxu0 0.0
  %614 = vmatpush1.msra.mxu0 0.0
  %615 = vmatprep.subr.mxu0 0.0
  %616 = vmatpush1.msra.mxu0 0.0
  %617 = vmatprep.subr.mxu0 0.0
  %618 = vmatpush1.msra.mxu0 0.0
  %619 = vmatprep.subr.mxu0 0.0
  %620 = vmatpush1.msra.mxu0 0.0
  %621 = vmatprep.subr.mxu0 0.0
  %622 = vmatpush1.msra.mxu0 0.0
  %623 = vmatprep.subr.mxu0 0.0
  %624 = vmatpush1.msra.mxu0 0.0
  %625 = vmatprep.subr.mxu0 0.0
  %626 = vmatpush1.msra.mxu0 0.0
  %627 = vmatprep.subr.mxu0 0.0
  %628 = vmatpush1.msra.mxu0 0.0
  %629 = vmatprep.subr.mxu0 0.0
  %630 = vmatpush1.msra.mxu0 0.0
  %631 = vmatprep.subr.mxu0 0.0
  %632 = vmatpush1.msra.mxu0 0.0
  %633 = vmatprep.subr.mxu0 0.0
  %634 = vmatpush1.msra.mxu0 0.0
  %635 = vmatprep.subr.mxu0 0.0
  %636 = vmatpush1.msra.mxu0 0.0
  %637 = vmatprep.mubr.f32.mxu0 0.0
  %638 = vmatmul.mubr.f32.gmra.mrb[0].mxu0 %v571
  %v639 = vpop.f32.mrb[0].mxu0
  %v640 = vadd.f32 %v35, %v639
  %v641 = vpop.f32.mrb[0].mxu0
  %642 = vdwg.mxu0
  %644 = vrot.lane.b32.xlu0 %v567, 96
  %v645 = vpop.permute.xlu0 %644
  %v646 = vsel %vm37, %v645, 0
  %648 = vmatprep.subr.mxu0 0.0
  %649 = vmatpush1.msra.mxu0 %v24
  %650 = vmatprep.subr.mxu0 0.0
  %651 = vmatpush1.msra.mxu0 %v25
  %652 = vmatprep.subr.mxu0 0.0
  %653 = vmatpush1.msra.mxu0 %v26
  %654 = vmatprep.subr.mxu0 0.0
  %655 = vmatpush1.msra.mxu0 %v27
  %656 = vmatprep.subr.mxu0 0.0
  %657 = vmatpush1.msra.mxu0 0.0
  %658 = vmatprep.subr.mxu0 0.0
  %659 = vmatpush1.msra.mxu0 0.0
  %660 = vmatprep.subr.mxu0 0.0
  %661 = vmatpush1.msra.mxu0 0.0
  %662 = vmatprep.subr.mxu0 0.0
  %663 = vmatpush1.msra.mxu0 0.0
  %664 = vmatprep.subr.mxu0 0.0
  %665 = vmatpush1.msra.mxu0 0.0
  %666 = vmatprep.subr.mxu0 0.0
  %667 = vmatpush1.msra.mxu0 0.0
  %668 = vmatprep.subr.mxu0 0.0
  %669 = vmatpush1.msra.mxu0 0.0
  %670 = vmatprep.subr.mxu0 0.0
  %671 = vmatpush1.msra.mxu0 0.0
  %672 = vmatprep.subr.mxu0 0.0
  %673 = vmatpush1.msra.mxu0 0.0
  %674 = vmatprep.subr.mxu0 0.0
  %675 = vmatpush1.msra.mxu0 0.0
  %676 = vmatprep.subr.mxu0 0.0
  %677 = vmatpush1.msra.mxu0 0.0
  %678 = vmatprep.subr.mxu0 0.0
  %679 = vmatpush1.msra.mxu0 0.0
  %680 = vmatprep.subr.mxu0 0.0
  %681 = vmatpush1.msra.mxu0 0.0
  %682 = vmatprep.subr.mxu0 0.0
  %683 = vmatpush1.msra.mxu0 0.0
  %684 = vmatprep.subr.mxu0 0.0
  %685 = vmatpush1.msra.mxu0 0.0
  %686 = vmatprep.subr.mxu0 0.0
  %687 = vmatpush1.msra.mxu0 0.0
  %688 = vmatprep.subr.mxu0 0.0
  %689 = vmatpush1.msra.mxu0 0.0
  %690 = vmatprep.subr.mxu0 0.0
  %691 = vmatpush1.msra.mxu0 0.0
  %692 = vmatprep.subr.mxu0 0.0
  %693 = vmatpush1.msra.mxu0 0.0
  %694 = vmatprep.subr.mxu0 0.0
  %695 = vmatpush1.msra.mxu0 0.0
  %696 = vmatprep.subr.mxu0 0.0
  %697 = vmatpush1.msra.mxu0 0.0
  %698 = vmatprep.subr.mxu0 0.0
  %699 = vmatpush1.msra.mxu0 0.0
  %700 = vmatprep.subr.mxu0 0.0
  %701 = vmatpush1.msra.mxu0 0.0
  %702 = vmatprep.subr.mxu0 0.0
  %703 = vmatpush1.msra.mxu0 0.0
  %704 = vmatprep.subr.mxu0 0.0
  %705 = vmatpush1.msra.mxu0 0.0
  %706 = vmatprep.subr.mxu0 0.0
  %707 = vmatpush1.msra.mxu0 0.0
  %708 = vmatprep.subr.mxu0 0.0
  %709 = vmatpush1.msra.mxu0 0.0
  %710 = vmatprep.subr.mxu0 0.0
  %711 = vmatpush1.msra.mxu0 0.0
  %712 = vmatprep.mubr.f32.mxu0 0.0
  %713 = vmatmul.mubr.f32.gmra.mrb[0].mxu0 %v646
  %v714 = vpop.f32.mrb[0].mxu0
  %v715 = vadd.f32 %v115, %v714
  %v716 = vpop.f32.mrb[0].mxu0
  %717 = vdwg.mxu0
  %v718 = vadd.f32 %v640, %v715
  %v719 = vxor.u32 %v718, 2147483648
  %v720 = vmul.f32 %v719, 1.442695
  %v721 = vpow.pop %v720
  %v722 = vadd.f32 %v721, 1.0
  %v723 = vrcp.pop %v722
  %v724 = vmul.f32 1.0, %v723
  %726 = vrot.lane.b32.xlu0 %v715, 64
  %v727 = vpop.permute.xlu0 %726
  %v729 = vmul.f32 %v724, %v727
  %731 = vrot.lane.b32.xlu0 %v729, 64
  %v732 = vpop.permute.xlu0 %731
  %v734 = vadd.f32 %v640, %v732
  %v735 = vtanh.pop %v734
  %v736 = vsub.f32 1.0, %v724
  %738 = vrot.lane.b32.xlu0 %v735, 96
  %v739 = vpop.permute.xlu0 %738
  %v741 = vmul.f32 %v736, %v739
  %v742 = vmul.f32 %v724, %v567
  %v743 = vadd.f32 %v741, %v742
  %s744 = scalar_lea.vmem %s0, 16
  %v745 = vld [vmem:[%s744] sm:$0xf]
  %v747 = vsel %vm37, %v745, 0
  %749 = vmatprep.subr.mxu0 0.0
  %750 = vmatpush1.msra.mxu0 %v20
  %751 = vmatprep.subr.mxu0 0.0
  %752 = vmatpush1.msra.mxu0 %v21
  %753 = vmatprep.subr.mxu0 0.0
  %754 = vmatpush1.msra.mxu0 %v22
  %755 = vmatprep.subr.mxu0 0.0
  %756 = vmatpush1.msra.mxu0 %v23
  %757 = vmatprep.subr.mxu0 0.0
  %758 = vmatpush1.msra.mxu0 0.0
  %759 = vmatprep.subr.mxu0 0.0
  %760 = vmatpush1.msra.mxu0 0.0
  %761 = vmatprep.subr.mxu0 0.0
  %762 = vmatpush1.msra.mxu0 0.0
  %763 = vmatprep.subr.mxu0 0.0
  %764 = vmatpush1.msra.mxu0 0.0
  %765 = vmatprep.subr.mxu0 0.0
  %766 = vmatpush1.msra.mxu0 0.0
  %767 = vmatprep.subr.mxu0 0.0
  %768 = vmatpush1.msra.mxu0 0.0
  %769 = vmatprep.subr.mxu0 0.0
  %770 = vmatpush1.msra.mxu0 0.0
  %771 = vmatprep.subr.mxu0 0.0
  %772 = vmatpush1.msra.mxu0 0.0
  %773 = vmatprep.subr.mxu0 0.0
  %774 = vmatpush1.msra.mxu0 0.0
  %775 = vmatprep.subr.mxu0 0.0
  %776 = vmatpush1.msra.mxu0 0.0
  %777 = vmatprep.subr.mxu0 0.0
  %778 = vmatpush1.msra.mxu0 0.0
  %779 = vmatprep.subr.mxu0 0.0
  %780 = vmatpush1.msra.mxu0 0.0
  %781 = vmatprep.subr.mxu0 0.0
  %782 = vmatpush1.msra.mxu0 0.0
  %783 = vmatprep.subr.mxu0 0.0
  %784 = vmatpush1.msra.mxu0 0.0
  %785 = vmatprep.subr.mxu0 0.0
  %786 = vmatpush1.msra.mxu0 0.0
  %787 = vmatprep.subr.mxu0 0.0
  %788 = vmatpush1.msra.mxu0 0.0
  %789 = vmatprep.subr.mxu0 0.0
  %790 = vmatpush1.msra.mxu0 0.0
  %791 = vmatprep.subr.mxu0 0.0
  %792 = vmatpush1.msra.mxu0 0.0
  %793 = vmatprep.subr.mxu0 0.0
  %794 = vmatpush1.msra.mxu0 0.0
  %795 = vmatprep.subr.mxu0 0.0
  %796 = vmatpush1.msra.mxu0 0.0
  %797 = vmatprep.subr.mxu0 0.0
  %798 = vmatpush1.msra.mxu0 0.0
  %799 = vmatprep.subr.mxu0 0.0
  %800 = vmatpush1.msra.mxu0 0.0
  %801 = vmatprep.subr.mxu0 0.0
  %802 = vmatpush1.msra.mxu0 0.0
  %803 = vmatprep.subr.mxu0 0.0
  %804 = vmatpush1.msra.mxu0 0.0
  %805 = vmatprep.subr.mxu0 0.0
  %806 = vmatpush1.msra.mxu0 0.0
  %807 = vmatprep.subr.mxu0 0.0
  %808 = vmatpush1.msra.mxu0 0.0
  %809 = vmatprep.subr.mxu0 0.0
  %810 = vmatpush1.msra.mxu0 0.0
  %811 = vmatprep.subr.mxu0 0.0
  %812 = vmatpush1.msra.mxu0 0.0
  %813 = vmatprep.mubr.f32.mxu0 0.0
  %814 = vmatmul.mubr.f32.gmra.mrb[0].mxu0 %v747
  %v815 = vpop.f32.mrb[0].mxu0
  %v816 = vadd.f32 %v35, %v815
  %v817 = vpop.f32.mrb[0].mxu0
  %818 = vdwg.mxu0
  %820 = vrot.lane.b32.xlu0 %v743, 96
  %v821 = vpop.permute.xlu0 %820
  %v822 = vsel %vm37, %v821, 0
  %824 = vmatprep.subr.mxu0 0.0
  %825 = vmatpush1.msra.mxu0 %v24
  %826 = vmatprep.subr.mxu0 0.0
  %827 = vmatpush1.msra.mxu0 %v25
  %828 = vmatprep.subr.mxu0 0.0
  %829 = vmatpush1.msra.mxu0 %v26
  %830 = vmatprep.subr.mxu0 0.0
  %831 = vmatpush1.msra.mxu0 %v27
  %832 = vmatprep.subr.mxu0 0.0
  %833 = vmatpush1.msra.mxu0 0.0
  %834 = vmatprep.subr.mxu0 0.0
  %835 = vmatpush1.msra.mxu0 0.0
  %836 = vmatprep.subr.mxu0 0.0
  %837 = vmatpush1.msra.mxu0 0.0
  %838 = vmatprep.subr.mxu0 0.0
  %839 = vmatpush1.msra.mxu0 0.0
  %840 = vmatprep.subr.mxu0 0.0
  %841 = vmatpush1.msra.mxu0 0.0
  %842 = vmatprep.subr.mxu0 0.0
  %843 = vmatpush1.msra.mxu0 0.0
  %844 = vmatprep.subr.mxu0 0.0
  %845 = vmatpush1.msra.mxu0 0.0
  %846 = vmatprep.subr.mxu0 0.0
  %847 = vmatpush1.msra.mxu0 0.0
  %848 = vmatprep.subr.mxu0 0.0
  %849 = vmatpush1.msra.mxu0 0.0
  %850 = vmatprep.subr.mxu0 0.0
  %851 = vmatpush1.msra.mxu0 0.0
  %852 = vmatprep.subr.mxu0 0.0
  %853 = vmatpush1.msra.mxu0 0.0
  %854 = vmatprep.subr.mxu0 0.0
  %855 = vmatpush1.msra.mxu0 0.0
  %856 = vmatprep.subr.mxu0 0.0
  %857 = vmatpush1.msra.mxu0 0.0
  %858 = vmatprep.subr.mxu0 0.0
  %859 = vmatpush1.msra.mxu0 0.0
  %860 = vmatprep.subr.mxu0 0.0
  %861 = vmatpush1.msra.mxu0 0.0
  %862 = vmatprep.subr.mxu0 0.0
  %863 = vmatpush1.msra.mxu0 0.0
  %864 = vmatprep.subr.mxu0 0.0
  %865 = vmatpush1.msra.mxu0 0.0
  %866 = vmatprep.subr.mxu0 0.0
  %867 = vmatpush1.msra.mxu0 0.0
  %868 = vmatprep.subr.mxu0 0.0
  %869 = vmatpush1.msra.mxu0 0.0
  %870 = vmatprep.subr.mxu0 0.0
  %871 = vmatpush1.msra.mxu0 0.0
  %872 = vmatprep.subr.mxu0 0.0
  %873 = vmatpush1.msra.mxu0 0.0
  %874 = vmatprep.subr.mxu0 0.0
  %875 = vmatpush1.msra.mxu0 0.0
  %876 = vmatprep.subr.mxu0 0.0
  %877 = vmatpush1.msra.mxu0 0.0
  %878 = vmatprep.subr.mxu0 0.0
  %879 = vmatpush1.msra.mxu0 0.0
  %880 = vmatprep.subr.mxu0 0.0
  %881 = vmatpush1.msra.mxu0 0.0
  %882 = vmatprep.subr.mxu0 0.0
  %883 = vmatpush1.msra.mxu0 0.0
  %884 = vmatprep.subr.mxu0 0.0
  %885 = vmatpush1.msra.mxu0 0.0
  %886 = vmatprep.subr.mxu0 0.0
  %887 = vmatpush1.msra.mxu0 0.0
  %888 = vmatprep.mubr.f32.mxu0 0.0
  %889 = vmatmul.mubr.f32.gmra.mrb[0].mxu0 %v822
  %v890 = vpop.f32.mrb[0].mxu0
  %v891 = vadd.f32 %v115, %v890
  %v892 = vpop.f32.mrb[0].mxu0
  %893 = vdwg.mxu0
  %v894 = vadd.f32 %v816, %v891
  %v895 = vxor.u32 %v894, 2147483648
  %v896 = vmul.f32 %v895, 1.442695
  %v897 = vpow.pop %v896
  %v898 = vadd.f32 %v897, 1.0
  %v899 = vrcp.pop %v898
  %v900 = vmul.f32 1.0, %v899
  %902 = vrot.lane.b32.xlu0 %v891, 64
  %v903 = vpop.permute.xlu0 %902
  %v905 = vmul.f32 %v900, %v903
  %907 = vrot.lane.b32.xlu0 %v905, 64
  %v908 = vpop.permute.xlu0 %907
  %v910 = vadd.f32 %v816, %v908
  %v911 = vtanh.pop %v910
  %v912 = vsub.f32 1.0, %v900
  %914 = vrot.lane.b32.xlu0 %v911, 96
  %v915 = vpop.permute.xlu0 %914
  %v917 = vmul.f32 %v912, %v915
  %v918 = vmul.f32 %v900, %v743
  %v919 = vadd.f32 %v917, %v918
  %s920 = scalar_lea.vmem %s0, 20
  %v921 = vld [vmem:[%s920] sm:$0xf]
  %v923 = vsel %vm37, %v921, 0
  %925 = vmatprep.subr.mxu0 0.0
  %926 = vmatpush1.msra.mxu0 %v20
  %927 = vmatprep.subr.mxu0 0.0
  %928 = vmatpush1.msra.mxu0 %v21
  %929 = vmatprep.subr.mxu0 0.0
  %930 = vmatpush1.msra.mxu0 %v22
  %931 = vmatprep.subr.mxu0 0.0
  %932 = vmatpush1.msra.mxu0 %v23
  %933 = vmatprep.subr.mxu0 0.0
  %934 = vmatpush1.msra.mxu0 0.0
  %935 = vmatprep.subr.mxu0 0.0
  %936 = vmatpush1.msra.mxu0 0.0
  %937 = vmatprep.subr.mxu0 0.0
  %938 = vmatpush1.msra.mxu0 0.0
  %939 = vmatprep.subr.mxu0 0.0
  %940 = vmatpush1.msra.mxu0 0.0
  %941 = vmatprep.subr.mxu0 0.0
  %942 = vmatpush1.msra.mxu0 0.0
  %943 = vmatprep.subr.mxu0 0.0
  %944 = vmatpush1.msra.mxu0 0.0
  %945 = vmatprep.subr.mxu0 0.0
  %946 = vmatpush1.msra.mxu0 0.0
  %947 = vmatprep.subr.mxu0 0.0
  %948 = vmatpush1.msra.mxu0 0.0
  %949 = vmatprep.subr.mxu0 0.0
  %950 = vmatpush1.msra.mxu0 0.0
  %951 = vmatprep.subr.mxu0 0.0
  %952 = vmatpush1.msra.mxu0 0.0
  %953 = vmatprep.subr.mxu0 0.0
  %954 = vmatpush1.msra.mxu0 0.0
  %955 = vmatprep.subr.mxu0 0.0
  %956 = vmatpush1.msra.mxu0 0.0
  %957 = vmatprep.subr.mxu0 0.0
  %958 = vmatpush1.msra.mxu0 0.0
  %959 = vmatprep.subr.mxu0 0.0
  %960 = vmatpush1.msra.mxu0 0.0
  %961 = vmatprep.subr.mxu0 0.0
  %962 = vmatpush1.msra.mxu0 0.0
  %963 = vmatprep.subr.mxu0 0.0
  %964 = vmatpush1.msra.mxu0 0.0
  %965 = vmatprep.subr.mxu0 0.0
  %966 = vmatpush1.msra.mxu0 0.0
  %967 = vmatprep.subr.mxu0 0.0
  %968 = vmatpush1.msra.mxu0 0.0
  %969 = vmatprep.subr.mxu0 0.0
  %970 = vmatpush1.msra.mxu0 0.0
  %971 = vmatprep.subr.mxu0 0.0
  %972 = vmatpush1.msra.mxu0 0.0
  %973 = vmatprep.subr.mxu0 0.0
  %974 = vmatpush1.msra.mxu0 0.0
  %975 = vmatprep.subr.mxu0 0.0
  %976 = vmatpush1.msra.mxu0 0.0
  %977 = vmatprep.subr.mxu0 0.0
  %978 = vmatpush1.msra.mxu0 0.0
  %979 = vmatprep.subr.mxu0 0.0
  %980 = vmatpush1.msra.mxu0 0.0
  %981 = vmatprep.subr.mxu0 0.0
  %982 = vmatpush1.msra.mxu0 0.0
  %983 = vmatprep.subr.mxu0 0.0
  %984 = vmatpush1.msra.mxu0 0.0
  %985 = vmatprep.subr.mxu0 0.0
  %986 = vmatpush1.msra.mxu0 0.0
  %987 = vmatprep.subr.mxu0 0.0
  %988 = vmatpush1.msra.mxu0 0.0
  %989 = vmatprep.mubr.f32.mxu0 0.0
  %990 = vmatmul.mubr.f32.gmra.mrb[0].mxu0 %v923
  %v991 = vpop.f32.mrb[0].mxu0
  %v992 = vadd.f32 %v35, %v991
  %v993 = vpop.f32.mrb[0].mxu0
  %994 = vdwg.mxu0
  %996 = vrot.lane.b32.xlu0 %v919, 96
  %v997 = vpop.permute.xlu0 %996
  %v998 = vsel %vm37, %v997, 0
  %1000 = vmatprep.subr.mxu0 0.0
  %1001 = vmatpush1.msra.mxu0 %v24
  %1002 = vmatprep.subr.mxu0 0.0
  %1003 = vmatpush1.msra.mxu0 %v25
  %1004 = vmatprep.subr.mxu0 0.0
  %1005 = vmatpush1.msra.mxu0 %v26
  %1006 = vmatprep.subr.mxu0 0.0
  %1007 = vmatpush1.msra.mxu0 %v27
  %1008 = vmatprep.subr.mxu0 0.0
  %1009 = vmatpush1.msra.mxu0 0.0
  %1010 = vmatprep.subr.mxu0 0.0
  %1011 = vmatpush1.msra.mxu0 0.0
  %1012 = vmatprep.subr.mxu0 0.0
  %1013 = vmatpush1.msra.mxu0 0.0
  %1014 = vmatprep.subr.mxu0 0.0
  %1015 = vmatpush1.msra.mxu0 0.0
  %1016 = vmatprep.subr.mxu0 0.0
  %1017 = vmatpush1.msra.mxu0 0.0
  %1018 = vmatprep.subr.mxu0 0.0
  %1019 = vmatpush1.msra.mxu0 0.0
  %1020 = vmatprep.subr.mxu0 0.0
  %1021 = vmatpush1.msra.mxu0 0.0
  %1022 = vmatprep.subr.mxu0 0.0
  %1023 = vmatpush1.msra.mxu0 0.0
  %1024 = vmatprep.subr.mxu0 0.0
  %1025 = vmatpush1.msra.mxu0 0.0
  %1026 = vmatprep.subr.mxu0 0.0
  %1027 = vmatpush1.msra.mxu0 0.0
  %1028 = vmatprep.subr.mxu0 0.0
  %1029 = vmatpush1.msra.mxu0 0.0
  %1030 = vmatprep.subr.mxu0 0.0
  %1031 = vmatpush1.msra.mxu0 0.0
  %1032 = vmatprep.subr.mxu0 0.0
  %1033 = vmatpush1.msra.mxu0 0.0
  %1034 = vmatprep.subr.mxu0 0.0
  %1035 = vmatpush1.msra.mxu0 0.0
  %1036 = vmatprep.subr.mxu0 0.0
  %1037 = vmatpush1.msra.mxu0 0.0
  %1038 = vmatprep.subr.mxu0 0.0
  %1039 = vmatpush1.msra.mxu0 0.0
  %1040 = vmatprep.subr.mxu0 0.0
  %1041 = vmatpush1.msra.mxu0 0.0
  %1042 = vmatprep.subr.mxu0 0.0
  %1043 = vmatpush1.msra.mxu0 0.0
  %1044 = vmatprep.subr.mxu0 0.0
  %1045 = vmatpush1.msra.mxu0 0.0
  %1046 = vmatprep.subr.mxu0 0.0
  %1047 = vmatpush1.msra.mxu0 0.0
  %1048 = vmatprep.subr.mxu0 0.0
  %1049 = vmatpush1.msra.mxu0 0.0
  %1050 = vmatprep.subr.mxu0 0.0
  %1051 = vmatpush1.msra.mxu0 0.0
  %1052 = vmatprep.subr.mxu0 0.0
  %1053 = vmatpush1.msra.mxu0 0.0
  %1054 = vmatprep.subr.mxu0 0.0
  %1055 = vmatpush1.msra.mxu0 0.0
  %1056 = vmatprep.subr.mxu0 0.0
  %1057 = vmatpush1.msra.mxu0 0.0
  %1058 = vmatprep.subr.mxu0 0.0
  %1059 = vmatpush1.msra.mxu0 0.0
  %1060 = vmatprep.subr.mxu0 0.0
  %1061 = vmatpush1.msra.mxu0 0.0
  %1062 = vmatprep.subr.mxu0 0.0
  %1063 = vmatpush1.msra.mxu0 0.0
  %1064 = vmatprep.mubr.f32.mxu0 0.0
  %1065 = vmatmul.mubr.f32.gmra.mrb[0].mxu0 %v998
  %v1066 = vpop.f32.mrb[0].mxu0
  %v1067 = vadd.f32 %v115, %v1066
  %v1068 = vpop.f32.mrb[0].mxu0
  %1069 = vdwg.mxu0
  %v1070 = vadd.f32 %v992, %v1067
  %v1071 = vxor.u32 %v1070, 2147483648
  %v1072 = vmul.f32 %v1071, 1.442695
  %v1073 = vpow.pop %v1072
  %v1074 = vadd.f32 %v1073, 1.0
  %v1075 = vrcp.pop %v1074
  %v1076 = vmul.f32 1.0, %v1075
  %1078 = vrot.lane.b32.xlu0 %v1067, 64
  %v1079 = vpop.permute.xlu0 %1078
  %v1081 = vmul.f32 %v1076, %v1079
  %1083 = vrot.lane.b32.xlu0 %v1081, 64
  %v1084 = vpop.permute.xlu0 %1083
  %v1086 = vadd.f32 %v992, %v1084
  %v1087 = vtanh.pop %v1086
  %v1088 = vsub.f32 1.0, %v1076
  %1090 = vrot.lane.b32.xlu0 %v1087, 96
  %v1091 = vpop.permute.xlu0 %1090
  %v1093 = vmul.f32 %v1088, %v1091
  %v1094 = vmul.f32 %v1076, %v919
  %v1095 = vadd.f32 %v1093, %v1094
  %s1096 = scalar_lea.vmem %s0, 24
  %v1097 = vld [vmem:[%s1096] sm:$0xf]
  %v1099 = vsel %vm37, %v1097, 0
  %1101 = vmatprep.subr.mxu0 0.0
  %1102 = vmatpush1.msra.mxu0 %v20
  %1103 = vmatprep.subr.mxu0 0.0
  %1104 = vmatpush1.msra.mxu0 %v21
  %1105 = vmatprep.subr.mxu0 0.0
  %1106 = vmatpush1.msra.mxu0 %v22
  %1107 = vmatprep.subr.mxu0 0.0
  %1108 = vmatpush1.msra.mxu0 %v23
  %1109 = vmatprep.subr.mxu0 0.0
  %1110 = vmatpush1.msra.mxu0 0.0
  %1111 = vmatprep.subr.mxu0 0.0
  %1112 = vmatpush1.msra.mxu0 0.0
  %1113 = vmatprep.subr.mxu0 0.0
  %1114 = vmatpush1.msra.mxu0 0.0
  %1115 = vmatprep.subr.mxu0 0.0
  %1116 = vmatpush1.msra.mxu0 0.0
  %1117 = vmatprep.subr.mxu0 0.0
  %1118 = vmatpush1.msra.mxu0 0.0
  %1119 = vmatprep.subr.mxu0 0.0
  %1120 = vmatpush1.msra.mxu0 0.0
  %1121 = vmatprep.subr.mxu0 0.0
  %1122 = vmatpush1.msra.mxu0 0.0
  %1123 = vmatprep.subr.mxu0 0.0
  %1124 = vmatpush1.msra.mxu0 0.0
  %1125 = vmatprep.subr.mxu0 0.0
  %1126 = vmatpush1.msra.mxu0 0.0
  %1127 = vmatprep.subr.mxu0 0.0
  %1128 = vmatpush1.msra.mxu0 0.0
  %1129 = vmatprep.subr.mxu0 0.0
  %1130 = vmatpush1.msra.mxu0 0.0
  %1131 = vmatprep.subr.mxu0 0.0
  %1132 = vmatpush1.msra.mxu0 0.0
  %1133 = vmatprep.subr.mxu0 0.0
  %1134 = vmatpush1.msra.mxu0 0.0
  %1135 = vmatprep.subr.mxu0 0.0
  %1136 = vmatpush1.msra.mxu0 0.0
  %1137 = vmatprep.subr.mxu0 0.0
  %1138 = vmatpush1.msra.mxu0 0.0
  %1139 = vmatprep.subr.mxu0 0.0
  %1140 = vmatpush1.msra.mxu0 0.0
  %1141 = vmatprep.subr.mxu0 0.0
  %1142 = vmatpush1.msra.mxu0 0.0
  %1143 = vmatprep.subr.mxu0 0.0
  %1144 = vmatpush1.msra.mxu0 0.0
  %1145 = vmatprep.subr.mxu0 0.0
  %1146 = vmatpush1.msra.mxu0 0.0
  %1147 = vmatprep.subr.mxu0 0.0
  %1148 = vmatpush1.msra.mxu0 0.0
  %1149 = vmatprep.subr.mxu0 0.0
  %1150 = vmatpush1.msra.mxu0 0.0
  %1151 = vmatprep.subr.mxu0 0.0
  %1152 = vmatpush1.msra.mxu0 0.0
  %1153 = vmatprep.subr.mxu0 0.0
  %1154 = vmatpush1.msra.mxu0 0.0
  %1155 = vmatprep.subr.mxu0 0.0
  %1156 = vmatpush1.msra.mxu0 0.0
  %1157 = vmatprep.subr.mxu0 0.0
  %1158 = vmatpush1.msra.mxu0 0.0
  %1159 = vmatprep.subr.mxu0 0.0
  %1160 = vmatpush1.msra.mxu0 0.0
  %1161 = vmatprep.subr.mxu0 0.0
  %1162 = vmatpush1.msra.mxu0 0.0
  %1163 = vmatprep.subr.mxu0 0.0
  %1164 = vmatpush1.msra.mxu0 0.0
  %1165 = vmatprep.mubr.f32.mxu0 0.0
  %1166 = vmatmul.mubr.f32.gmra.mrb[0].mxu0 %v1099
  %v1167 = vpop.f32.mrb[0].mxu0
  %v1168 = vadd.f32 %v35, %v1167
  %v1169 = vpop.f32.mrb[0].mxu0
  %1170 = vdwg.mxu0
  %1172 = vrot.lane.b32.xlu0 %v1095, 96
  %v1173 = vpop.permute.xlu0 %1172
  %v1174 = vsel %vm37, %v1173, 0
  %1176 = vmatprep.subr.mxu0 0.0
  %1177 = vmatpush1.msra.mxu0 %v24
  %1178 = vmatprep.subr.mxu0 0.0
  %1179 = vmatpush1.msra.mxu0 %v25
  %1180 = vmatprep.subr.mxu0 0.0
  %1181 = vmatpush1.msra.mxu0 %v26
  %1182 = vmatprep.subr.mxu0 0.0
  %1183 = vmatpush1.msra.mxu0 %v27
  %1184 = vmatprep.subr.mxu0 0.0
  %1185 = vmatpush1.msra.mxu0 0.0
  %1186 = vmatprep.subr.mxu0 0.0
  %1187 = vmatpush1.msra.mxu0 0.0
  %1188 = vmatprep.subr.mxu0 0.0
  %1189 = vmatpush1.msra.mxu0 0.0
  %1190 = vmatprep.subr.mxu0 0.0
  %1191 = vmatpush1.msra.mxu0 0.0
  %1192 = vmatprep.subr.mxu0 0.0
  %1193 = vmatpush1.msra.mxu0 0.0
  %1194 = vmatprep.subr.mxu0 0.0
  %1195 = vmatpush1.msra.mxu0 0.0
  %1196 = vmatprep.subr.mxu0 0.0
  %1197 = vmatpush1.msra.mxu0 0.0
  %1198 = vmatprep.subr.mxu0 0.0
  %1199 = vmatpush1.msra.mxu0 0.0
  %1200 = vmatprep.subr.mxu0 0.0
  %1201 = vmatpush1.msra.mxu0 0.0
  %1202 = vmatprep.subr.mxu0 0.0
  %1203 = vmatpush1.msra.mxu0 0.0
  %1204 = vmatprep.subr.mxu0 0.0
  %1205 = vmatpush1.msra.mxu0 0.0
  %1206 = vmatprep.subr.mxu0 0.0
  %1207 = vmatpush1.msra.mxu0 0.0
  %1208 = vmatprep.subr.mxu0 0.0
  %1209 = vmatpush1.msra.mxu0 0.0
  %1210 = vmatprep.subr.mxu0 0.0
  %1211 = vmatpush1.msra.mxu0 0.0
  %1212 = vmatprep.subr.mxu0 0.0
  %1213 = vmatpush1.msra.mxu0 0.0
  %1214 = vmatprep.subr.mxu0 0.0
  %1215 = vmatpush1.msra.mxu0 0.0
  %1216 = vmatprep.subr.mxu0 0.0
  %1217 = vmatpush1.msra.mxu0 0.0
  %1218 = vmatprep.subr.mxu0 0.0
  %1219 = vmatpush1.msra.mxu0 0.0
  %1220 = vmatprep.subr.mxu0 0.0
  %1221 = vmatpush1.msra.mxu0 0.0
  %1222 = vmatprep.subr.mxu0 0.0
  %1223 = vmatpush1.msra.mxu0 0.0
  %1224 = vmatprep.subr.mxu0 0.0
  %1225 = vmatpush1.msra.mxu0 0.0
  %1226 = vmatprep.subr.mxu0 0.0
  %1227 = vmatpush1.msra.mxu0 0.0
  %1228 = vmatprep.subr.mxu0 0.0
  %1229 = vmatpush1.msra.mxu0 0.0
  %1230 = vmatprep.subr.mxu0 0.0
  %1231 = vmatpush1.msra.mxu0 0.0
  %1232 = vmatprep.subr.mxu0 0.0
  %1233 = vmatpush1.msra.mxu0 0.0
  %1234 = vmatprep.subr.mxu0 0.0
  %1235 = vmatpush1.msra.mxu0 0.0
  %1236 = vmatprep.subr.mxu0 0.0
  %1237 = vmatpush1.msra.mxu0 0.0
  %1238 = vmatprep.subr.mxu0 0.0
  %1239 = vmatpush1.msra.mxu0 0.0
  %1240 = vmatprep.mubr.f32.mxu0 0.0
  %1241 = vmatmul.mubr.f32.gmra.mrb[0].mxu0 %v1174
  %v1242 = vpop.f32.mrb[0].mxu0
  %v1243 = vadd.f32 %v115, %v1242
  %v1244 = vpop.f32.mrb[0].mxu0
  %1245 = vdwg.mxu0
  %v1246 = vadd.f32 %v1168, %v1243
  %v1247 = vxor.u32 %v1246, 2147483648
  %v1248 = vmul.f32 %v1247, 1.442695
  %v1249 = vpow.pop %v1248
  %v1250 = vadd.f32 %v1249, 1.0
  %v1251 = vrcp.pop %v1250
  %v1252 = vmul.f32 1.0, %v1251
  %1254 = vrot.lane.b32.xlu0 %v1243, 64
  %v1255 = vpop.permute.xlu0 %1254
  %v1257 = vmul.f32 %v1252, %v1255
  %1259 = vrot.lane.b32.xlu0 %v1257, 64
  %v1260 = vpop.permute.xlu0 %1259
  %v1262 = vadd.f32 %v1168, %v1260
  %v1263 = vtanh.pop %v1262
  %v1264 = vsub.f32 1.0, %v1252
  %1266 = vrot.lane.b32.xlu0 %v1263, 96
  %v1267 = vpop.permute.xlu0 %1266
  %v1269 = vmul.f32 %v1264, %v1267
  %v1270 = vmul.f32 %v1252, %v1095
  %v1271 = vadd.f32 %v1269, %v1270
  %s1272 = scalar_lea.vmem %s0, 28
  %v1273 = vld [vmem:[%s1272] sm:$0xf]
  %v1275 = vsel %vm37, %v1273, 0
  %1277 = vmatprep.subr.mxu0 0.0
  %1278 = vmatpush1.msra.mxu0 %v20
  %1279 = vmatprep.subr.mxu0 0.0
  %1280 = vmatpush1.msra.mxu0 %v21
  %1281 = vmatprep.subr.mxu0 0.0
  %1282 = vmatpush1.msra.mxu0 %v22
  %1283 = vmatprep.subr.mxu0 0.0
  %1284 = vmatpush1.msra.mxu0 %v23
  %1285 = vmatprep.subr.mxu0 0.0
  %1286 = vmatpush1.msra.mxu0 0.0
  %1287 = vmatprep.subr.mxu0 0.0
  %1288 = vmatpush1.msra.mxu0 0.0
  %1289 = vmatprep.subr.mxu0 0.0
  %1290 = vmatpush1.msra.mxu0 0.0
  %1291 = vmatprep.subr.mxu0 0.0
  %1292 = vmatpush1.msra.mxu0 0.0
  %1293 = vmatprep.subr.mxu0 0.0
  %1294 = vmatpush1.msra.mxu0 0.0
  %1295 = vmatprep.subr.mxu0 0.0
  %1296 = vmatpush1.msra.mxu0 0.0
  %1297 = vmatprep.subr.mxu0 0.0
  %1298 = vmatpush1.msra.mxu0 0.0
  %1299 = vmatprep.subr.mxu0 0.0
  %1300 = vmatpush1.msra.mxu0 0.0
  %1301 = vmatprep.subr.mxu0 0.0
  %1302 = vmatpush1.msra.mxu0 0.0
  %1303 = vmatprep.subr.mxu0 0.0
  %1304 = vmatpush1.msra.mxu0 0.0
  %1305 = vmatprep.subr.mxu0 0.0
  %1306 = vmatpush1.msra.mxu0 0.0
  %1307 = vmatprep.subr.mxu0 0.0
  %1308 = vmatpush1.msra.mxu0 0.0
  %1309 = vmatprep.subr.mxu0 0.0
  %1310 = vmatpush1.msra.mxu0 0.0
  %1311 = vmatprep.subr.mxu0 0.0
  %1312 = vmatpush1.msra.mxu0 0.0
  %1313 = vmatprep.subr.mxu0 0.0
  %1314 = vmatpush1.msra.mxu0 0.0
  %1315 = vmatprep.subr.mxu0 0.0
  %1316 = vmatpush1.msra.mxu0 0.0
  %1317 = vmatprep.subr.mxu0 0.0
  %1318 = vmatpush1.msra.mxu0 0.0
  %1319 = vmatprep.subr.mxu0 0.0
  %1320 = vmatpush1.msra.mxu0 0.0
  %1321 = vmatprep.subr.mxu0 0.0
  %1322 = vmatpush1.msra.mxu0 0.0
  %1323 = vmatprep.subr.mxu0 0.0
  %1324 = vmatpush1.msra.mxu0 0.0
  %1325 = vmatprep.subr.mxu0 0.0
  %1326 = vmatpush1.msra.mxu0 0.0
  %1327 = vmatprep.subr.mxu0 0.0
  %1328 = vmatpush1.msra.mxu0 0.0
  %1329 = vmatprep.subr.mxu0 0.0
  %1330 = vmatpush1.msra.mxu0 0.0
  %1331 = vmatprep.subr.mxu0 0.0
  %1332 = vmatpush1.msra.mxu0 0.0
  %1333 = vmatprep.subr.mxu0 0.0
  %1334 = vmatpush1.msra.mxu0 0.0
  %1335 = vmatprep.subr.mxu0 0.0
  %1336 = vmatpush1.msra.mxu0 0.0
  %1337 = vmatprep.subr.mxu0 0.0
  %1338 = vmatpush1.msra.mxu0 0.0
  %1339 = vmatprep.subr.mxu0 0.0
  %1340 = vmatpush1.msra.mxu0 0.0
  %1341 = vmatprep.mubr.f32.mxu0 0.0
  %1342 = vmatmul.mubr.f32.gmra.mrb[0].mxu0 %v1275
  %v1343 = vpop.f32.mrb[0].mxu0
  %v1344 = vadd.f32 %v35, %v1343
  %v1345 = vpop.f32.mrb[0].mxu0
  %1346 = vdwg.mxu0
  %1348 = vrot.lane.b32.xlu0 %v1271, 96
  %v1349 = vpop.permute.xlu0 %1348
  %v1350 = vsel %vm37, %v1349, 0
  %1352 = vmatprep.subr.mxu0 0.0
  %1353 = vmatpush1.msra.mxu0 %v24
  %1354 = vmatprep.subr.mxu0 0.0
  %1355 = vmatpush1.msra.mxu0 %v25
  %1356 = vmatprep.subr.mxu0 0.0
  %1357 = vmatpush1.msra.mxu0 %v26
  %1358 = vmatprep.subr.mxu0 0.0
  %1359 = vmatpush1.msra.mxu0 %v27
  %1360 = vmatprep.subr.mxu0 0.0
  %1361 = vmatpush1.msra.mxu0 0.0
  %1362 = vmatprep.subr.mxu0 0.0
  %1363 = vmatpush1.msra.mxu0 0.0
  %1364 = vmatprep.subr.mxu0 0.0
  %1365 = vmatpush1.msra.mxu0 0.0
  %1366 = vmatprep.subr.mxu0 0.0
  %1367 = vmatpush1.msra.mxu0 0.0
  %1368 = vmatprep.subr.mxu0 0.0
  %1369 = vmatpush1.msra.mxu0 0.0
  %1370 = vmatprep.subr.mxu0 0.0
  %1371 = vmatpush1.msra.mxu0 0.0
  %1372 = vmatprep.subr.mxu0 0.0
  %1373 = vmatpush1.msra.mxu0 0.0
  %1374 = vmatprep.subr.mxu0 0.0
  %1375 = vmatpush1.msra.mxu0 0.0
  %1376 = vmatprep.subr.mxu0 0.0
  %1377 = vmatpush1.msra.mxu0 0.0
  %1378 = vmatprep.subr.mxu0 0.0
  %1379 = vmatpush1.msra.mxu0 0.0
  %1380 = vmatprep.subr.mxu0 0.0
  %1381 = vmatpush1.msra.mxu0 0.0
  %1382 = vmatprep.subr.mxu0 0.0
  %1383 = vmatpush1.msra.mxu0 0.0
  %1384 = vmatprep.subr.mxu0 0.0
  %1385 = vmatpush1.msra.mxu0 0.0
  %1386 = vmatprep.subr.mxu0 0.0
  %1387 = vmatpush1.msra.mxu0 0.0
  %1388 = vmatprep.subr.mxu0 0.0
  %1389 = vmatpush1.msra.mxu0 0.0
  %1390 = vmatprep.subr.mxu0 0.0
  %1391 = vmatpush1.msra.mxu0 0.0
  %1392 = vmatprep.subr.mxu0 0.0
  %1393 = vmatpush1.msra.mxu0 0.0
  %1394 = vmatprep.subr.mxu0 0.0
  %1395 = vmatpush1.msra.mxu0 0.0
  %1396 = vmatprep.subr.mxu0 0.0
  %1397 = vmatpush1.msra.mxu0 0.0
  %1398 = vmatprep.subr.mxu0 0.0
  %1399 = vmatpush1.msra.mxu0 0.0
  %1400 = vmatprep.subr.mxu0 0.0
  %1401 = vmatpush1.msra.mxu0 0.0
  %1402 = vmatprep.subr.mxu0 0.0
  %1403 = vmatpush1.msra.mxu0 0.0
  %1404 = vmatprep.subr.mxu0 0.0
  %1405 = vmatpush1.msra.mxu0 0.0
  %1406 = vmatprep.subr.mxu0 0.0
  %1407 = vmatpush1.msra.mxu0 0.0
  %1408 = vmatprep.subr.mxu0 0.0
  %1409 = vmatpush1.msra.mxu0 0.0
  %1410 = vmatprep.subr.mxu0 0.0
  %1411 = vmatpush1.msra.mxu0 0.0
  %1412 = vmatprep.subr.mxu0 0.0
  %1413 = vmatpush1.msra.mxu0 0.0
  %1414 = vmatprep.subr.mxu0 0.0
  %1415 = vmatpush1.msra.mxu0 0.0
  %1416 = vmatprep.mubr.f32.mxu0 0.0
  %1417 = vmatmul.mubr.f32.gmra.mrb[0].mxu0 %v1350
  %v1418 = vpop.f32.mrb[0].mxu0
  %v1419 = vadd.f32 %v115, %v1418
  %v1420 = vpop.f32.mrb[0].mxu0
  %1421 = vdwg.mxu0
  %v1422 = vadd.f32 %v1344, %v1419
  %v1423 = vxor.u32 %v1422, 2147483648
  %v1424 = vmul.f32 %v1423, 1.442695
  %v1425 = vpow.pop %v1424
  %v1426 = vadd.f32 %v1425, 1.0
  %v1427 = vrcp.pop %v1426
  %v1428 = vmul.f32 1.0, %v1427
  %1430 = vrot.lane.b32.xlu0 %v1419, 64
  %v1431 = vpop.permute.xlu0 %1430
  %v1433 = vmul.f32 %v1428, %v1431
  %1435 = vrot.lane.b32.xlu0 %v1433, 64
  %v1436 = vpop.permute.xlu0 %1435
  %v1438 = vadd.f32 %v1344, %v1436
  %v1439 = vtanh.pop %v1438
  %v1440 = vsub.f32 1.0, %v1428
  %1442 = vrot.lane.b32.xlu0 %v1439, 96
  %v1443 = vpop.permute.xlu0 %1442
  %v1445 = vmul.f32 %v1440, %v1443
  %v1446 = vmul.f32 %v1428, %v1271
  %v1447 = vadd.f32 %v1445, %v1446
  %1449 = vrot.lane.b32.xlu0 %v1447, 96
  %v1450 = vpop.permute.xlu0 %1449
  %vm1452 = vcmask 257024
  %1453 = vst.msk [vmem:[%s5] sm:$0xf] %vm1452, %v1450
  // Predicated region
  $region22: #{encoder_decoder_forward.3} parent=0 // pred_check
    _
  $region23: #{encoder_decoder_forward.3} parent=0 // pred_check_branch
    %1455 = sbr.rel (0) target = $region25
  $region24: #{encoder_decoder_forward.3} parent=0 // pred_region
    _
  $region25: #{encoder_decoder_forward.3} parent=0 // pred_fallthru
    _
  // Predicated region
  $region26: #{encoder_decoder_forward.3} parent=0 // pred_check
    _
  $region27: #{encoder_decoder_forward.3} parent=0 // pred_check_branch
    %1457 = sbr.rel (0) target = $region29
  $region28: #{encoder_decoder_forward.3} parent=0 // pred_region
    _
  $region29: #{encoder_decoder_forward.3} parent=0 // pred_fallthru
    _

// kernel: encoder_decoder_forward.4
$region0: #{encoder_decoder_forward.4}
  #allocation0 [shape = 'u32[]', space=smem, size = 0x4, offset = 0x4, fixed_abs, tag = 'smem constant byte address 0x4 - core index']
  #allocation1 [shape = 'u32[144,128]{1,0:T(1,128)}', space=vmem, size = 0x12000, scoped, tag = 'internal scratch']
  %s0 = inlined_call_operand.vmem [shape: f32[8,4,32], index: 0, kind: input, shape index: {}]
  %s1 = inlined_call_operand.vmem [shape: f32[4,32], index: 1, kind: input, shape index: {}]
  %s2 = inlined_call_operand.vmem [shape: f32[32,96], index: 2, kind: input, shape index: {}]
  %s3 = inlined_call_operand.vmem [shape: f32[32,96], index: 3, kind: input, shape index: {}]
  %s4 = inlined_call_operand.vmem [shape: f32[32,96], index: 4, kind: input, shape index: {}]
  %s5 = inlined_call_operand.vmem [shape: f32[1,96], index: 5, kind: input, shape index: {}]
  %s6 = inlined_call_operand.vmem [shape: f32[1,96], index: 6, kind: input, shape index: {}]
  %s7 = inlined_call_operand.vmem [shape: f32[8,4,32], index: 7, kind: output, shape index: {}]
  %s8 = sld [smem:[#allocation0]]
  $region38: #{encoder_decoder_forward.4} parent=0
    _
  %s10 = ssub.s32 1, %s8
  %s11 = scalar_select 0, %s10, %s8
  // Predicated region
  $region2: #{encoder_decoder_forward.4} parent=0 // pred_check
    _
  $region3: #{encoder_decoder_forward.4} parent=0 // pred_check_branch
    %13 = sbr.rel (0) target = $region5
  $region4: #{encoder_decoder_forward.4} parent=0 // pred_region
    _
  $region5: #{encoder_decoder_forward.4} parent=0 // pred_fallthru
    _
  // Predicated region
  $region6: #{encoder_decoder_forward.4} parent=0 // pred_check
    _
  $region7: #{encoder_decoder_forward.4} parent=0 // pred_check_branch
    %15 = sbr.rel (0) target = $region9
  $region8: #{encoder_decoder_forward.4} parent=0 // pred_region
    _
  $region9: #{encoder_decoder_forward.4} parent=0 // pred_fallthru
    _
  // Predicated region
  $region10: #{encoder_decoder_forward.4} parent=0 // pred_check
    _
  $region11: #{encoder_decoder_forward.4} parent=0 // pred_check_branch
    %17 = sbr.rel (0) target = $region13
  $region12: #{encoder_decoder_forward.4} parent=0 // pred_region
    _
  $region13: #{encoder_decoder_forward.4} parent=0 // pred_fallthru
    _
  // Predicated region
  $region14: #{encoder_decoder_forward.4} parent=0 // pred_check
    _
  $region15: #{encoder_decoder_forward.4} parent=0 // pred_check_branch
    %19 = sbr.rel (0) target = $region17
  $region16: #{encoder_decoder_forward.4} parent=0 // pred_region
    _
  $region17: #{encoder_decoder_forward.4} parent=0 // pred_fallthru
    _
  // Predicated region
  $region18: #{encoder_decoder_forward.4} parent=0 // pred_check
    _
  $region19: #{encoder_decoder_forward.4} parent=0 // pred_check_branch
    %21 = sbr.rel (0) target = $region21
  $region20: #{encoder_decoder_forward.4} parent=0 // pred_region
    _
  $region21: #{encoder_decoder_forward.4} parent=0 // pred_fallthru
    _
  // Predicated region
  $region22: #{encoder_decoder_forward.4} parent=0 // pred_check
    _
  $region23: #{encoder_decoder_forward.4} parent=0 // pred_check_branch
    %23 = sbr.rel (0) target = $region25
  $region24: #{encoder_decoder_forward.4} parent=0 // pred_region
    _
  $region25: #{encoder_decoder_forward.4} parent=0 // pred_fallthru
    _
  // Predicated region
  $region26: #{encoder_decoder_forward.4} parent=0 // pred_check
    _
  $region27: #{encoder_decoder_forward.4} parent=0 // pred_check_branch
    %25 = sbr.rel (0) target = $region29
  $region28: #{encoder_decoder_forward.4} parent=0 // pred_region
    _
  $region29: #{encoder_decoder_forward.4} parent=0 // pred_fallthru
    _
  %v26 = vld [vmem:[%s2] sm:$0xff]
  %v27 = vld [vmem:[%s2 + $0x8] sm:$0xff]
  %v28 = vld [vmem:[%s2 + $0x10] sm:$0xff]
  %v29 = vld [vmem:[%s2 + $0x18] sm:$0xff]
  %v30 = vld [vmem:[%s4] sm:$0xff]
  %v31 = vld [vmem:[%s4 + $0x8] sm:$0xff]
  %v32 = vld [vmem:[%s4 + $0x10] sm:$0xff]
  %v33 = vld [vmem:[%s4 + $0x18] sm:$0xff]
  %v34 = vld [vmem:[%s6] sm:$0x1]
  %v35 = vld [vmem:[%s1] sm:$0xf]
  %v36 = vld [vmem:[%s3] sm:$0xff]
  %v37 = vld [vmem:[%s3 + $0x8] sm:$0xff]
  %v38 = vld [vmem:[%s3 + $0x10] sm:$0xff]
  %v39 = vld [vmem:[%s3 + $0x18] sm:$0xff]
  %v40 = vld [vmem:[%s5] sm:$0x1]
  %v42 = vlaneseq
  %v43 = vshrl.u32 %v42, 7
  %v44 = vsub.s32 0, %v43
  %v45 = vrot.slane %v40, %v44
  %vm47 = vcmask 261120
  %v49 = vsel %vm47, %v35, 0
  %51 = vmatprep.subr.mxu0 0.0
  %52 = vmatpush1.msra.mxu0 %v36
  %53 = vmatprep.subr.mxu0 0.0
  %54 = vmatpush1.msra.mxu0 %v37
  %55 = vmatprep.subr.mxu0 0.0
  %56 = vmatpush1.msra.mxu0 %v38
  %57 = vmatprep.subr.mxu0 0.0
  %58 = vmatpush1.msra.mxu0 %v39
  %59 = vmatprep.subr.mxu0 0.0
  %60 = vmatpush1.msra.mxu0 0.0
  %61 = vmatprep.subr.mxu0 0.0
  %62 = vmatpush1.msra.mxu0 0.0
  %63 = vmatprep.subr.mxu0 0.0
  %64 = vmatpush1.msra.mxu0 0.0
  %65 = vmatprep.subr.mxu0 0.0
  %66 = vmatpush1.msra.mxu0 0.0
  %67 = vmatprep.subr.mxu0 0.0
  %68 = vmatpush1.msra.mxu0 0.0
  %69 = vmatprep.subr.mxu0 0.0
  %70 = vmatpush1.msra.mxu0 0.0
  %71 = vmatprep.subr.mxu0 0.0
  %72 = vmatpush1.msra.mxu0 0.0
  %73 = vmatprep.subr.mxu0 0.0
  %74 = vmatpush1.msra.mxu0 0.0
  %75 = vmatprep.subr.mxu0 0.0
  %76 = vmatpush1.msra.mxu0 0.0
  %77 = vmatprep.subr.mxu0 0.0
  %78 = vmatpush1.msra.mxu0 0.0
  %79 = vmatprep.subr.mxu0 0.0
  %80 = vmatpush1.msra.mxu0 0.0
  %81 = vmatprep.subr.mxu0 0.0
  %82 = vmatpush1.msra.mxu0 0.0
  %83 = vmatprep.subr.mxu0 0.0
  %84 = vmatpush1.msra.mxu0 0.0
  %85 = vmatprep.subr.mxu0 0.0
  %86 = vmatpush1.msra.mxu0 0.0
  %87 = vmatprep.subr.mxu0 0.0
  %88 = vmatpush1.msra.mxu0 0.0
  %89 = vmatprep.subr.mxu0 0.0
  %90 = vmatpush1.msra.mxu0 0.0
  %91 = vmatprep.subr.mxu0 0.0
  %92 = vmatpush1.msra.mxu0 0.0
  %93 = vmatprep.subr.mxu0 0.0
  %94 = vmatpush1.msra.mxu0 0.0
  %95 = vmatprep.subr.mxu0 0.0
  %96 = vmatpush1.msra.mxu0 0.0
  %97 = vmatprep.subr.mxu0 0.0
  %98 = vmatpush1.msra.mxu0 0.0
  %99 = vmatprep.subr.mxu0 0.0
  %100 = vmatpush1.msra.mxu0 0.0
  %101 = vmatprep.subr.mxu0 0.0
  %102 = vmatpush1.msra.mxu0 0.0
  %103 = vmatprep.subr.mxu0 0.0
  %104 = vmatpush1.msra.mxu0 0.0
  %105 = vmatprep.subr.mxu0 0.0
  %106 = vmatpush1.msra.mxu0 0.0
  %107 = vmatprep.subr.mxu0 0.0
  %108 = vmatpush1.msra.mxu0 0.0
  %109 = vmatprep.subr.mxu0 0.0
  %110 = vmatpush1.msra.mxu0 0.0
  %111 = vmatprep.subr.mxu0 0.0
  %112 = vmatpush1.msra.mxu0 0.0
  %113 = vmatprep.subr.mxu0 0.0
  %114 = vmatpush1.msra.mxu0 0.0
  %115 = vmatprep.mubr.f32.mxu0 0.0
  %116 = vmatmul.mubr.f32.gmra.mrb[0].mxu0 %v49
  %v117 = vpop.f32.mrb[0].mxu0
  %v118 = vadd.f32 %v45, %v117
  %v119 = vpop.f32.mrb[0].mxu0
  %120 = vdwg.mxu0
  %v121 = vld [vmem:[%s0] sm:$0xf]
  %v123 = vsel %vm47, %v121, 0
  %125 = vmatprep.subr.mxu0 0.0
  %126 = vmatpush1.msra.mxu0 %v26
  %127 = vmatprep.subr.mxu0 0.0
  %128 = vmatpush1.msra.mxu0 %v27
  %129 = vmatprep.subr.mxu0 0.0
  %130 = vmatpush1.msra.mxu0 %v28
  %131 = vmatprep.subr.mxu0 0.0
  %132 = vmatpush1.msra.mxu0 %v29
  %133 = vmatprep.subr.mxu0 0.0
  %134 = vmatpush1.msra.mxu0 0.0
  %135 = vmatprep.subr.mxu0 0.0
  %136 = vmatpush1.msra.mxu0 0.0
  %137 = vmatprep.subr.mxu0 0.0
  %138 = vmatpush1.msra.mxu0 0.0
  %139 = vmatprep.subr.mxu0 0.0
  %140 = vmatpush1.msra.mxu0 0.0
  %141 = vmatprep.subr.mxu0 0.0
  %142 = vmatpush1.msra.mxu0 0.0
  %143 = vmatprep.subr.mxu0 0.0
  %144 = vmatpush1.msra.mxu0 0.0
  %145 = vmatprep.subr.mxu0 0.0
  %146 = vmatpush1.msra.mxu0 0.0
  %147 = vmatprep.subr.mxu0 0.0
  %148 = vmatpush1.msra.mxu0 0.0
  %149 = vmatprep.subr.mxu0 0.0
  %150 = vmatpush1.msra.mxu0 0.0
  %151 = vmatprep.subr.mxu0 0.0
  %152 = vmatpush1.msra.mxu0 0.0
  %153 = vmatprep.subr.mxu0 0.0
  %154 = vmatpush1.msra.mxu0 0.0
  %155 = vmatprep.subr.mxu0 0.0
  %156 = vmatpush1.msra.mxu0 0.0
  %157 = vmatprep.subr.mxu0 0.0
  %158 = vmatpush1.msra.mxu0 0.0
  %159 = vmatprep.subr.mxu0 0.0
  %160 = vmatpush1.msra.mxu0 0.0
  %161 = vmatprep.subr.mxu0 0.0
  %162 = vmatpush1.msra.mxu0 0.0
  %163 = vmatprep.subr.mxu0 0.0
  %164 = vmatpush1.msra.mxu0 0.0
  %165 = vmatprep.subr.mxu0 0.0
  %166 = vmatpush1.msra.mxu0 0.0
  %167 = vmatprep.subr.mxu0 0.0
  %168 = vmatpush1.msra.mxu0 0.0
  %169 = vmatprep.subr.mxu0 0.0
  %170 = vmatpush1.msra.mxu0 0.0
  %171 = vmatprep.subr.mxu0 0.0
  %172 = vmatpush1.msra.mxu0 0.0
  %173 = vmatprep.subr.mxu0 0.0
  %174 = vmatpush1.msra.mxu0 0.0
  %175 = vmatprep.subr.mxu0 0.0
  %176 = vmatpush1.msra.mxu0 0.0
  %177 = vmatprep.subr.mxu0 0.0
  %178 = vmatpush1.msra.mxu0 0.0
  %179 = vmatprep.subr.mxu0 0.0
  %180 = vmatpush1.msra.mxu0 0.0
  %181 = vmatprep.subr.mxu0 0.0
  %182 = vmatpush1.msra.mxu0 0.0
  %183 = vmatprep.subr.mxu0 0.0
  %184 = vmatpush1.msra.mxu0 0.0
  %185 = vmatprep.subr.mxu0 0.0
  %186 = vmatpush1.msra.mxu0 0.0
  %187 = vmatprep.subr.mxu0 0.0
  %188 = vmatpush1.msra.mxu0 0.0
  %189 = vmatprep.mubr.f32.mxu0 0.0
  %190 = vmatmul.mubr.f32.gmra.mrb[0].mxu0 %v123
  %v191 = vpop.f32.mrb[0].mxu0
  %v192 = vadd.f32 %v118, %v191
  %v193 = vpop.f32.mrb[0].mxu0
  %194 = vdwg.mxu0
  %v196 = vlaneseq
  %v197 = vshrl.u32 %v196, 7
  %v198 = vsub.s32 0, %v197
  %v199 = vrot.slane %v34, %v198
  %201 = vmatprep.subr.mxu0 0.0
  %202 = vmatpush1.msra.mxu0 %v30
  %203 = vmatprep.subr.mxu0 0.0
  %204 = vmatpush1.msra.mxu0 %v31
  %205 = vmatprep.subr.mxu0 0.0
  %206 = vmatpush1.msra.mxu0 %v32
  %207 = vmatprep.subr.mxu0 0.0
  %208 = vmatpush1.msra.mxu0 %v33
  %209 = vmatprep.subr.mxu0 0.0
  %210 = vmatpush1.msra.mxu0 0.0
  %211 = vmatprep.subr.mxu0 0.0
  %212 = vmatpush1.msra.mxu0 0.0
  %213 = vmatprep.subr.mxu0 0.0
  %214 = vmatpush1.msra.mxu0 0.0
  %215 = vmatprep.subr.mxu0 0.0
  %216 = vmatpush1.msra.mxu0 0.0
  %217 = vmatprep.subr.mxu0 0.0
  %218 = vmatpush1.msra.mxu0 0.0
  %219 = vmatprep.subr.mxu0 0.0
  %220 = vmatpush1.msra.mxu0 0.0
  %221 = vmatprep.subr.mxu0 0.0
  %222 = vmatpush1.msra.mxu0 0.0
  %223 = vmatprep.subr.mxu0 0.0
  %224 = vmatpush1.msra.mxu0 0.0
  %225 = vmatprep.subr.mxu0 0.0
  %226 = vmatpush1.msra.mxu0 0.0
  %227 = vmatprep.subr.mxu0 0.0
  %228 = vmatpush1.msra.mxu0 0.0
  %229 = vmatprep.subr.mxu0 0.0
  %230 = vmatpush1.msra.mxu0 0.0
  %231 = vmatprep.subr.mxu0 0.0
  %232 = vmatpush1.msra.mxu0 0.0
  %233 = vmatprep.subr.mxu0 0.0
  %234 = vmatpush1.msra.mxu0 0.0
  %235 = vmatprep.subr.mxu0 0.0
  %236 = vmatpush1.msra.mxu0 0.0
  %237 = vmatprep.subr.mxu0 0.0
  %238 = vmatpush1.msra.mxu0 0.0
  %239 = vmatprep.subr.mxu0 0.0
  %240 = vmatpush1.msra.mxu0 0.0
  %241 = vmatprep.subr.mxu0 0.0
  %242 = vmatpush1.msra.mxu0 0.0
  %243 = vmatprep.subr.mxu0 0.0
  %244 = vmatpush1.msra.mxu0 0.0
  %245 = vmatprep.subr.mxu0 0.0
  %246 = vmatpush1.msra.mxu0 0.0
  %247 = vmatprep.subr.mxu0 0.0
  %248 = vmatpush1.msra.mxu0 0.0
  %249 = vmatprep.subr.mxu0 0.0
  %250 = vmatpush1.msra.mxu0 0.0
  %251 = vmatprep.subr.mxu0 0.0
  %252 = vmatpush1.msra.mxu0 0.0
  %253 = vmatprep.subr.mxu0 0.0
  %254 = vmatpush1.msra.mxu0 0.0
  %255 = vmatprep.subr.mxu0 0.0
  %256 = vmatpush1.msra.mxu0 0.0
  %257 = vmatprep.subr.mxu0 0.0
  %258 = vmatpush1.msra.mxu0 0.0
  %259 = vmatprep.subr.mxu0 0.0
  %260 = vmatpush1.msra.mxu0 0.0
  %261 = vmatprep.subr.mxu0 0.0
  %262 = vmatpush1.msra.mxu0 0.0
  %263 = vmatprep.subr.mxu0 0.0
  %264 = vmatpush1.msra.mxu0 0.0
  %265 = vmatprep.mubr.f32.mxu0 0.0
  %266 = vmatmul.mubr.f32.gmra.mrb[0].mxu0 %v49
  %v267 = vpop.f32.mrb[0].mxu0
  %v268 = vadd.f32 %v199, %v267
  %v269 = vpop.f32.mrb[0].mxu0
  %270 = vdwg.mxu0
  %v271 = vadd.f32 %v192, %v268
  %v272 = vxor.u32 %v271, 2147483648
  %v273 = vmul.f32 %v272, 1.442695
  %v274 = vpow.pop %v273
  %v275 = vadd.f32 %v274, 1.0
  %v276 = vrcp.pop %v275
  %v277 = vmul.f32 1.0, %v276
  %279 = vrot.lane.b32.xlu0 %v268, 64
  %v280 = vpop.permute.xlu0 %279
  %v282 = vmul.f32 %v277, %v280
  %284 = vrot.lane.b32.xlu0 %v282, 64
  %v285 = vpop.permute.xlu0 %284
  %v287 = vadd.f32 %v192, %v285
  %v288 = vtanh.pop %v287
  %v289 = vsub.f32 1.0, %v277
  %291 = vrot.lane.b32.xlu0 %v288, 96
  %v292 = vpop.permute.xlu0 %291
  %v294 = vmul.f32 %v289, %v292
  %295 = vrot.lane.b32.xlu0 %v35, 32
  %v296 = vpop.permute.xlu0 %295
  %v298 = vmul.f32 %v277, %v296
  %v299 = vadd.f32 %v294, %v298
  %301 = vrot.lane.b32.xlu0 %v299, 96
  %v302 = vpop.permute.xlu0 %301
  %vm304 = vcmask 257024
  %305 = vst.msk [vmem:[%s7] sm:$0xf] %vm304, %v302
  %s306 = scalar_lea.vmem %s0, 4
  %v307 = vld [vmem:[%s306] sm:$0xf]
  %v309 = vsel %vm47, %v307, 0
  %311 = vmatprep.subr.mxu0 0.0
  %312 = vmatpush1.msra.mxu0 %v26
  %313 = vmatprep.subr.mxu0 0.0
  %314 = vmatpush1.msra.mxu0 %v27
  %315 = vmatprep.subr.mxu0 0.0
  %316 = vmatpush1.msra.mxu0 %v28
  %317 = vmatprep.subr.mxu0 0.0
  %318 = vmatpush1.msra.mxu0 %v29
  %319 = vmatprep.subr.mxu0 0.0
  %320 = vmatpush1.msra.mxu0 0.0
  %321 = vmatprep.subr.mxu0 0.0
  %322 = vmatpush1.msra.mxu0 0.0
  %323 = vmatprep.subr.mxu0 0.0
  %324 = vmatpush1.msra.mxu0 0.0
  %325 = vmatprep.subr.mxu0 0.0
  %326 = vmatpush1.msra.mxu0 0.0
  %327 = vmatprep.subr.mxu0 0.0
  %328 = vmatpush1.msra.mxu0 0.0
  %329 = vmatprep.subr.mxu0 0.0
  %330 = vmatpush1.msra.mxu0 0.0
  %331 = vmatprep.subr.mxu0 0.0
  %332 = vmatpush1.msra.mxu0 0.0
  %333 = vmatprep.subr.mxu0 0.0
  %334 = vmatpush1.msra.mxu0 0.0
  %335 = vmatprep.subr.mxu0 0.0
  %336 = vmatpush1.msra.mxu0 0.0
  %337 = vmatprep.subr.mxu0 0.0
  %338 = vmatpush1.msra.mxu0 0.0
  %339 = vmatprep.subr.mxu0 0.0
  %340 = vmatpush1.msra.mxu0 0.0
  %341 = vmatprep.subr.mxu0 0.0
  %342 = vmatpush1.msra.mxu0 0.0
  %343 = vmatprep.subr.mxu0 0.0
  %344 = vmatpush1.msra.mxu0 0.0
  %345 = vmatprep.subr.mxu0 0.0
  %346 = vmatpush1.msra.mxu0 0.0
  %347 = vmatprep.subr.mxu0 0.0
  %348 = vmatpush1.msra.mxu0 0.0
  %349 = vmatprep.subr.mxu0 0.0
  %350 = vmatpush1.msra.mxu0 0.0
  %351 = vmatprep.subr.mxu0 0.0
  %352 = vmatpush1.msra.mxu0 0.0
  %353 = vmatprep.subr.mxu0 0.0
  %354 = vmatpush1.msra.mxu0 0.0
  %355 = vmatprep.subr.mxu0 0.0
  %356 = vmatpush1.msra.mxu0 0.0
  %357 = vmatprep.subr.mxu0 0.0
  %358 = vmatpush1.msra.mxu0 0.0
  %359 = vmatprep.subr.mxu0 0.0
  %360 = vmatpush1.msra.mxu0 0.0
  %361 = vmatprep.subr.mxu0 0.0
  %362 = vmatpush1.msra.mxu0 0.0
  %363 = vmatprep.subr.mxu0 0.0
  %364 = vmatpush1.msra.mxu0 0.0
  %365 = vmatprep.subr.mxu0 0.0
  %366 = vmatpush1.msra.mxu0 0.0
  %367 = vmatprep.subr.mxu0 0.0
  %368 = vmatpush1.msra.mxu0 0.0
  %369 = vmatprep.subr.mxu0 0.0
  %370 = vmatpush1.msra.mxu0 0.0
  %371 = vmatprep.subr.mxu0 0.0
  %372 = vmatpush1.msra.mxu0 0.0
  %373 = vmatprep.subr.mxu0 0.0
  %374 = vmatpush1.msra.mxu0 0.0
  %375 = vmatprep.mubr.f32.mxu0 0.0
  %376 = vmatmul.mubr.f32.gmra.mrb[0].mxu0 %v309
  %v377 = vpop.f32.mrb[0].mxu0
  %v378 = vadd.f32 %v118, %v377
  %v379 = vpop.f32.mrb[0].mxu0
  %380 = vdwg.mxu0
  %v381 = vsel %vm47, %v302, 0
  %383 = vmatprep.subr.mxu0 0.0
  %384 = vmatpush1.msra.mxu0 %v30
  %385 = vmatprep.subr.mxu0 0.0
  %386 = vmatpush1.msra.mxu0 %v31
  %387 = vmatprep.subr.mxu0 0.0
  %388 = vmatpush1.msra.mxu0 %v32
  %389 = vmatprep.subr.mxu0 0.0
  %390 = vmatpush1.msra.mxu0 %v33
  %391 = vmatprep.subr.mxu0 0.0
  %392 = vmatpush1.msra.mxu0 0.0
  %393 = vmatprep.subr.mxu0 0.0
  %394 = vmatpush1.msra.mxu0 0.0
  %395 = vmatprep.subr.mxu0 0.0
  %396 = vmatpush1.msra.mxu0 0.0
  %397 = vmatprep.subr.mxu0 0.0
  %398 = vmatpush1.msra.mxu0 0.0
  %399 = vmatprep.subr.mxu0 0.0
  %400 = vmatpush1.msra.mxu0 0.0
  %401 = vmatprep.subr.mxu0 0.0
  %402 = vmatpush1.msra.mxu0 0.0
  %403 = vmatprep.subr.mxu0 0.0
  %404 = vmatpush1.msra.mxu0 0.0
  %405 = vmatprep.subr.mxu0 0.0
  %406 = vmatpush1.msra.mxu0 0.0
  %407 = vmatprep.subr.mxu0 0.0
  %408 = vmatpush1.msra.mxu0 0.0
  %409 = vmatprep.subr.mxu0 0.0
  %410 = vmatpush1.msra.mxu0 0.0
  %411 = vmatprep.subr.mxu0 0.0
  %412 = vmatpush1.msra.mxu0 0.0
  %413 = vmatprep.subr.mxu0 0.0
  %414 = vmatpush1.msra.mxu0 0.0
  %415 = vmatprep.subr.mxu0 0.0
  %416 = vmatpush1.msra.mxu0 0.0
  %417 = vmatprep.subr.mxu0 0.0
  %418 = vmatpush1.msra.mxu0 0.0
  %419 = vmatprep.subr.mxu0 0.0
  %420 = vmatpush1.msra.mxu0 0.0
  %421 = vmatprep.subr.mxu0 0.0
  %422 = vmatpush1.msra.mxu0 0.0
  %423 = vmatprep.subr.mxu0 0.0
  %424 = vmatpush1.msra.mxu0 0.0
  %425 = vmatprep.subr.mxu0 0.0
  %426 = vmatpush1.msra.mxu0 0.0
  %427 = vmatprep.subr.mxu0 0.0
  %428 = vmatpush1.msra.mxu0 0.0
  %429 = vmatprep.subr.mxu0 0.0
  %430 = vmatpush1.msra.mxu0 0.0
  %431 = vmatprep.subr.mxu0 0.0
  %432 = vmatpush1.msra.mxu0 0.0
  %433 = vmatprep.subr.mxu0 0.0
  %434 = vmatpush1.msra.mxu0 0.0
  %435 = vmatprep.subr.mxu0 0.0
  %436 = vmatpush1.msra.mxu0 0.0
  %437 = vmatprep.subr.mxu0 0.0
  %438 = vmatpush1.msra.mxu0 0.0
  %439 = vmatprep.subr.mxu0 0.0
  %440 = vmatpush1.msra.mxu0 0.0
  %441 = vmatprep.subr.mxu0 0.0
  %442 = vmatpush1.msra.mxu0 0.0
  %443 = vmatprep.subr.mxu0 0.0
  %444 = vmatpush1.msra.mxu0 0.0
  %445 = vmatprep.subr.mxu0 0.0
  %446 = vmatpush1.msra.mxu0 0.0
  %447 = vmatprep.mubr.f32.mxu0 0.0
  %448 = vmatmul.mubr.f32.gmra.mrb[0].mxu0 %v381
  %v449 = vpop.f32.mrb[0].mxu0
  %v450 = vadd.f32 %v199, %v449
  %v451 = vpop.f32.mrb[0].mxu0
  %452 = vdwg.mxu0
  %v453 = vadd.f32 %v378, %v450
  %v454 = vxor.u32 %v453, 2147483648
  %v455 = vmul.f32 %v454, 1.442695
  %v456 = vpow.pop %v455
  %v457 = vadd.f32 %v456, 1.0
  %v458 = vrcp.pop %v457
  %v459 = vmul.f32 1.0, %v458
  %461 = vrot.lane.b32.xlu0 %v450, 64
  %v462 = vpop.permute.xlu0 %461
  %v464 = vmul.f32 %v459, %v462
  %466 = vrot.lane.b32.xlu0 %v464, 64
  %v467 = vpop.permute.xlu0 %466
  %v469 = vadd.f32 %v378, %v467
  %v470 = vtanh.pop %v469
  %v471 = vsub.f32 1.0, %v459
  %473 = vrot.lane.b32.xlu0 %v470, 96
  %v474 = vpop.permute.xlu0 %473
  %v476 = vmul.f32 %v471, %v474
  %v477 = vmul.f32 %v459, %v299
  %v478 = vadd.f32 %v476, %v477
  %480 = vrot.lane.b32.xlu0 %v478, 96
  %v481 = vpop.permute.xlu0 %480
  %s483 = scalar_lea.vmem %s7, 4
  %484 = vst.msk [vmem:[%s483] sm:$0xf] %vm304, %v481
  %s485 = scalar_lea.vmem %s0, 8
  %v486 = vld [vmem:[%s485] sm:$0xf]
  %v488 = vsel %vm47, %v486, 0
  %490 = vmatprep.subr.mxu0 0.0
  %491 = vmatpush1.msra.mxu0 %v26
  %492 = vmatprep.subr.mxu0 0.0
  %493 = vmatpush1.msra.mxu0 %v27
  %494 = vmatprep.subr.mxu0 0.0
  %495 = vmatpush1.msra.mxu0 %v28
  %496 = vmatprep.subr.mxu0 0.0
  %497 = vmatpush1.msra.mxu0 %v29
  %498 = vmatprep.subr.mxu0 0.0
  %499 = vmatpush1.msra.mxu0 0.0
  %500 = vmatprep.subr.mxu0 0.0
  %501 = vmatpush1.msra.mxu0 0.0
  %502 = vmatprep.subr.mxu0 0.0
  %503 = vmatpush1.msra.mxu0 0.0
  %504 = vmatprep.subr.mxu0 0.0
  %505 = vmatpush1.msra.mxu0 0.0
  %506 = vmatprep.subr.mxu0 0.0
  %507 = vmatpush1.msra.mxu0 0.0
  %508 = vmatprep.subr.mxu0 0.0
  %509 = vmatpush1.msra.mxu0 0.0
  %510 = vmatprep.subr.mxu0 0.0
  %511 = vmatpush1.msra.mxu0 0.0
  %512 = vmatprep.subr.mxu0 0.0
  %513 = vmatpush1.msra.mxu0 0.0
  %514 = vmatprep.subr.mxu0 0.0
  %515 = vmatpush1.msra.mxu0 0.0
  %516 = vmatprep.subr.mxu0 0.0
  %517 = vmatpush1.msra.mxu0 0.0
  %518 = vmatprep.subr.mxu0 0.0
  %519 = vmatpush1.msra.mxu0 0.0
  %520 = vmatprep.subr.mxu0 0.0
  %521 = vmatpush1.msra.mxu0 0.0
  %522 = vmatprep.subr.mxu0 0.0
  %523 = vmatpush1.msra.mxu0 0.0
  %524 = vmatprep.subr.mxu0 0.0
  %525 = vmatpush1.msra.mxu0 0.0
  %526 = vmatprep.subr.mxu0 0.0
  %527 = vmatpush1.msra.mxu0 0.0
  %528 = vmatprep.subr.mxu0 0.0
  %529 = vmatpush1.msra.mxu0 0.0
  %530 = vmatprep.subr.mxu0 0.0
  %531 = vmatpush1.msra.mxu0 0.0
  %532 = vmatprep.subr.mxu0 0.0
  %533 = vmatpush1.msra.mxu0 0.0
  %534 = vmatprep.subr.mxu0 0.0
  %535 = vmatpush1.msra.mxu0 0.0
  %536 = vmatprep.subr.mxu0 0.0
  %537 = vmatpush1.msra.mxu0 0.0
  %538 = vmatprep.subr.mxu0 0.0
  %539 = vmatpush1.msra.mxu0 0.0
  %540 = vmatprep.subr.mxu0 0.0
  %541 = vmatpush1.msra.mxu0 0.0
  %542 = vmatprep.subr.mxu0 0.0
  %543 = vmatpush1.msra.mxu0 0.0
  %544 = vmatprep.subr.mxu0 0.0
  %545 = vmatpush1.msra.mxu0 0.0
  %546 = vmatprep.subr.mxu0 0.0
  %547 = vmatpush1.msra.mxu0 0.0
  %548 = vmatprep.subr.mxu0 0.0
  %549 = vmatpush1.msra.mxu0 0.0
  %550 = vmatprep.subr.mxu0 0.0
  %551 = vmatpush1.msra.mxu0 0.0
  %552 = vmatprep.subr.mxu0 0.0
  %553 = vmatpush1.msra.mxu0 0.0
  %554 = vmatprep.mubr.f32.mxu0 0.0
  %555 = vmatmul.mubr.f32.gmra.mrb[0].mxu0 %v488
  %v556 = vpop.f32.mrb[0].mxu0
  %v557 = vadd.f32 %v118, %v556
  %v558 = vpop.f32.mrb[0].mxu0
  %559 = vdwg.mxu0
  %v560 = vsel %vm47, %v481, 0
  %562 = vmatprep.subr.mxu0 0.0
  %563 = vmatpush1.msra.mxu0 %v30
  %564 = vmatprep.subr.mxu0 0.0
  %565 = vmatpush1.msra.mxu0 %v31
  %566 = vmatprep.subr.mxu0 0.0
  %567 = vmatpush1.msra.mxu0 %v32
  %568 = vmatprep.subr.mxu0 0.0
  %569 = vmatpush1.msra.mxu0 %v33
  %570 = vmatprep.subr.mxu0 0.0
  %571 = vmatpush1.msra.mxu0 0.0
  %572 = vmatprep.subr.mxu0 0.0
  %573 = vmatpush1.msra.mxu0 0.0
  %574 = vmatprep.subr.mxu0 0.0
  %575 = vmatpush1.msra.mxu0 0.0
  %576 = vmatprep.subr.mxu0 0.0
  %577 = vmatpush1.msra.mxu0 0.0
  %578 = vmatprep.subr.mxu0 0.0
  %579 = vmatpush1.msra.mxu0 0.0
  %580 = vmatprep.subr.mxu0 0.0
  %581 = vmatpush1.msra.mxu0 0.0
  %582 = vmatprep.subr.mxu0 0.0
  %583 = vmatpush1.msra.mxu0 0.0
  %584 = vmatprep.subr.mxu0 0.0
  %585 = vmatpush1.msra.mxu0 0.0
  %586 = vmatprep.subr.mxu0 0.0
  %587 = vmatpush1.msra.mxu0 0.0
  %588 = vmatprep.subr.mxu0 0.0
  %589 = vmatpush1.msra.mxu0 0.0
  %590 = vmatprep.subr.mxu0 0.0
  %591 = vmatpush1.msra.mxu0 0.0
  %592 = vmatprep.subr.mxu0 0.0
  %593 = vmatpush1.msra.mxu0 0.0
  %594 = vmatprep.subr.mxu0 0.0
  %595 = vmatpush1.msra.mxu0 0.0
  %596 = vmatprep.subr.mxu0 0.0
  %597 = vmatpush1.msra.mxu0 0.0
  %598 = vmatprep.subr.mxu0 0.0
  %599 = vmatpush1.msra.mxu0 0.0
  %600 = vmatprep.subr.mxu0 0.0
  %601 = vmatpush1.msra.mxu0 0.0
  %602 = vmatprep.subr.mxu0 0.0
  %603 = vmatpush1.msra.mxu0 0.0
  %604 = vmatprep.subr.mxu0 0.0
  %605 = vmatpush1.msra.mxu0 0.0
  %606 = vmatprep.subr.mxu0 0.0
  %607 = vmatpush1.msra.mxu0 0.0
  %608 = vmatprep.subr.mxu0 0.0
  %609 = vmatpush1.msra.mxu0 0.0
  %610 = vmatprep.subr.mxu0 0.0
  %611 = vmatpush1.msra.mxu0 0.0
  %612 = vmatprep.subr.mxu0 0.0
  %613 = vmatpush1.msra.mxu0 0.0
  %614 = vmatprep.subr.mxu0 0.0
  %615 = vmatpush1.msra.mxu0 0.0
  %616 = vmatprep.subr.mxu0 0.0
  %617 = vmatpush1.msra.mxu0 0.0
  %618 = vmatprep.subr.mxu0 0.0
  %619 = vmatpush1.msra.mxu0 0.0
  %620 = vmatprep.subr.mxu0 0.0
  %621 = vmatpush1.msra.mxu0 0.0
  %622 = vmatprep.subr.mxu0 0.0
  %623 = vmatpush1.msra.mxu0 0.0
  %624 = vmatprep.subr.mxu0 0.0
  %625 = vmatpush1.msra.mxu0 0.0
  %626 = vmatprep.mubr.f32.mxu0 0.0
  %627 = vmatmul.mubr.f32.gmra.mrb[0].mxu0 %v560
  %v628 = vpop.f32.mrb[0].mxu0
  %v629 = vadd.f32 %v199, %v628
  %v630 = vpop.f32.mrb[0].mxu0
  %631 = vdwg.mxu0
  %v632 = vadd.f32 %v557, %v629
  %v633 = vxor.u32 %v632, 2147483648
  %v634 = vmul.f32 %v633, 1.442695
  %v635 = vpow.pop %v634
  %v636 = vadd.f32 %v635, 1.0
  %v637 = vrcp.pop %v636
  %v638 = vmul.f32 1.0, %v637
  %640 = vrot.lane.b32.xlu0 %v629, 64
  %v641 = vpop.permute.xlu0 %640
  %v643 = vmul.f32 %v638, %v641
  %645 = vrot.lane.b32.xlu0 %v643, 64
  %v646 = vpop.permute.xlu0 %645
  %v648 = vadd.f32 %v557, %v646
  %v649 = vtanh.pop %v648
  %v650 = vsub.f32 1.0, %v638
  %652 = vrot.lane.b32.xlu0 %v649, 96
  %v653 = vpop.permute.xlu0 %652
  %v655 = vmul.f32 %v650, %v653
  %v656 = vmul.f32 %v638, %v478
  %v657 = vadd.f32 %v655, %v656
  %659 = vrot.lane.b32.xlu0 %v657, 96
  %v660 = vpop.permute.xlu0 %659
  %s662 = scalar_lea.vmem %s7, 8
  %663 = vst.msk [vmem:[%s662] sm:$0xf] %vm304, %v660
  %s664 = scalar_lea.vmem %s0, 12
  %v665 = vld [vmem:[%s664] sm:$0xf]
  %v667 = vsel %vm47, %v665, 0
  %669 = vmatprep.subr.mxu0 0.0
  %670 = vmatpush1.msra.mxu0 %v26
  %671 = vmatprep.subr.mxu0 0.0
  %672 = vmatpush1.msra.mxu0 %v27
  %673 = vmatprep.subr.mxu0 0.0
  %674 = vmatpush1.msra.mxu0 %v28
  %675 = vmatprep.subr.mxu0 0.0
  %676 = vmatpush1.msra.mxu0 %v29
  %677 = vmatprep.subr.mxu0 0.0
  %678 = vmatpush1.msra.mxu0 0.0
  %679 = vmatprep.subr.mxu0 0.0
  %680 = vmatpush1.msra.mxu0 0.0
  %681 = vmatprep.subr.mxu0 0.0
  %682 = vmatpush1.msra.mxu0 0.0
  %683 = vmatprep.subr.mxu0 0.0
  %684 = vmatpush1.msra.mxu0 0.0
  %685 = vmatprep.subr.mxu0 0.0
  %686 = vmatpush1.msra.mxu0 0.0
  %687 = vmatprep.subr.mxu0 0.0
  %688 = vmatpush1.msra.mxu0 0.0
  %689 = vmatprep.subr.mxu0 0.0
  %690 = vmatpush1.msra.mxu0 0.0
  %691 = vmatprep.subr.mxu0 0.0
  %692 = vmatpush1.msra.mxu0 0.0
  %693 = vmatprep.subr.mxu0 0.0
  %694 = vmatpush1.msra.mxu0 0.0
  %695 = vmatprep.subr.mxu0 0.0
  %696 = vmatpush1.msra.mxu0 0.0
  %697 = vmatprep.subr.mxu0 0.0
  %698 = vmatpush1.msra.mxu0 0.0
  %699 = vmatprep.subr.mxu0 0.0
  %700 = vmatpush1.msra.mxu0 0.0
  %701 = vmatprep.subr.mxu0 0.0
  %702 = vmatpush1.msra.mxu0 0.0
  %703 = vmatprep.subr.mxu0 0.0
  %704 = vmatpush1.msra.mxu0 0.0
  %705 = vmatprep.subr.mxu0 0.0
  %706 = vmatpush1.msra.mxu0 0.0
  %707 = vmatprep.subr.mxu0 0.0
  %708 = vmatpush1.msra.mxu0 0.0
  %709 = vmatprep.subr.mxu0 0.0
  %710 = vmatpush1.msra.mxu0 0.0
  %711 = vmatprep.subr.mxu0 0.0
  %712 = vmatpush1.msra.mxu0 0.0
  %713 = vmatprep.subr.mxu0 0.0
  %714 = vmatpush1.msra.mxu0 0.0
  %715 = vmatprep.subr.mxu0 0.0
  %716 = vmatpush1.msra.mxu0 0.0
  %717 = vmatprep.subr.mxu0 0.0
  %718 = vmatpush1.msra.mxu0 0.0
  %719 = vmatprep.subr.mxu0 0.0
  %720 = vmatpush1.msra.mxu0 0.0
  %721 = vmatprep.subr.mxu0 0.0
  %722 = vmatpush1.msra.mxu0 0.0
  %723 = vmatprep.subr.mxu0 0.0
  %724 = vmatpush1.msra.mxu0 0.0
  %725 = vmatprep.subr.mxu0 0.0
  %726 = vmatpush1.msra.mxu0 0.0
  %727 = vmatprep.subr.mxu0 0.0
  %728 = vmatpush1.msra.mxu0 0.0
  %729 = vmatprep.subr.mxu0 0.0
  %730 = vmatpush1.msra.mxu0 0.0
  %731 = vmatprep.subr.mxu0 0.0
  %732 = vmatpush1.msra.mxu0 0.0
  %733 = vmatprep.mubr.f32.mxu0 0.0
  %734 = vmatmul.mubr.f32.gmra.mrb[0].mxu0 %v667
  %v735 = vpop.f32.mrb[0].mxu0
  %v736 = vadd.f32 %v118, %v735
  %v737 = vpop.f32.mrb[0].mxu0
  %738 = vdwg.mxu0
  %v739 = vsel %vm47, %v660, 0
  %741 = vmatprep.subr.mxu0 0.0
  %742 = vmatpush1.msra.mxu0 %v30
  %743 = vmatprep.subr.mxu0 0.0
  %744 = vmatpush1.msra.mxu0 %v31
  %745 = vmatprep.subr.mxu0 0.0
  %746 = vmatpush1.msra.mxu0 %v32
  %747 = vmatprep.subr.mxu0 0.0
  %748 = vmatpush1.msra.mxu0 %v33
  %749 = vmatprep.subr.mxu0 0.0
  %750 = vmatpush1.msra.mxu0 0.0
  %751 = vmatprep.subr.mxu0 0.0
  %752 = vmatpush1.msra.mxu0 0.0
  %753 = vmatprep.subr.mxu0 0.0
  %754 = vmatpush1.msra.mxu0 0.0
  %755 = vmatprep.subr.mxu0 0.0
  %756 = vmatpush1.msra.mxu0 0.0
  %757 = vmatprep.subr.mxu0 0.0
  %758 = vmatpush1.msra.mxu0 0.0
  %759 = vmatprep.subr.mxu0 0.0
  %760 = vmatpush1.msra.mxu0 0.0
  %761 = vmatprep.subr.mxu0 0.0
  %762 = vmatpush1.msra.mxu0 0.0
  %763 = vmatprep.subr.mxu0 0.0
  %764 = vmatpush1.msra.mxu0 0.0
  %765 = vmatprep.subr.mxu0 0.0
  %766 = vmatpush1.msra.mxu0 0.0
  %767 = vmatprep.subr.mxu0 0.0
  %768 = vmatpush1.msra.mxu0 0.0
  %769 = vmatprep.subr.mxu0 0.0
  %770 = vmatpush1.msra.mxu0 0.0
  %771 = vmatprep.subr.mxu0 0.0
  %772 = vmatpush1.msra.mxu0 0.0
  %773 = vmatprep.subr.mxu0 0.0
  %774 = vmatpush1.msra.mxu0 0.0
  %775 = vmatprep.subr.mxu0 0.0
  %776 = vmatpush1.msra.mxu0 0.0
  %777 = vmatprep.subr.mxu0 0.0
  %778 = vmatpush1.msra.mxu0 0.0
  %779 = vmatprep.subr.mxu0 0.0
  %780 = vmatpush1.msra.mxu0 0.0
  %781 = vmatprep.subr.mxu0 0.0
  %782 = vmatpush1.msra.mxu0 0.0
  %783 = vmatprep.subr.mxu0 0.0
  %784 = vmatpush1.msra.mxu0 0.0
  %785 = vmatprep.subr.mxu0 0.0
  %786 = vmatpush1.msra.mxu0 0.0
  %787 = vmatprep.subr.mxu0 0.0
  %788 = vmatpush1.msra.mxu0 0.0
  %789 = vmatprep.subr.mxu0 0.0
  %790 = vmatpush1.msra.mxu0 0.0
  %791 = vmatprep.subr.mxu0 0.0
  %792 = vmatpush1.msra.mxu0 0.0
  %793 = vmatprep.subr.mxu0 0.0
  %794 = vmatpush1.msra.mxu0 0.0
  %795 = vmatprep.subr.mxu0 0.0
  %796 = vmatpush1.msra.mxu0 0.0
  %797 = vmatprep.subr.mxu0 0.0
  %798 = vmatpush1.msra.mxu0 0.0
  %799 = vmatprep.subr.mxu0 0.0
  %800 = vmatpush1.msra.mxu0 0.0
  %801 = vmatprep.subr.mxu0 0.0
  %802 = vmatpush1.msra.mxu0 0.0
  %803 = vmatprep.subr.mxu0 0.0
  %804 = vmatpush1.msra.mxu0 0.0
  %805 = vmatprep.mubr.f32.mxu0 0.0
  %806 = vmatmul.mubr.f32.gmra.mrb[0].mxu0 %v739
  %v807 = vpop.f32.mrb[0].mxu0
  %v808 = vadd.f32 %v199, %v807
  %v809 = vpop.f32.mrb[0].mxu0
  %810 = vdwg.mxu0
  %v811 = vadd.f32 %v736, %v808
  %v812 = vxor.u32 %v811, 2147483648
  %v813 = vmul.f32 %v812, 1.442695
  %v814 = vpow.pop %v813
  %v815 = vadd.f32 %v814, 1.0
  %v816 = vrcp.pop %v815
  %v817 = vmul.f32 1.0, %v816
  %819 = vrot.lane.b32.xlu0 %v808, 64
  %v820 = vpop.permute.xlu0 %819
  %v822 = vmul.f32 %v817, %v820
  %824 = vrot.lane.b32.xlu0 %v822, 64
  %v825 = vpop.permute.xlu0 %824
  %v827 = vadd.f32 %v736, %v825
  %v828 = vtanh.pop %v827
  %v829 = vsub.f32 1.0, %v817
  %831 = vrot.lane.b32.xlu0 %v828, 96
  %v832 = vpop.permute.xlu0 %831
  %v834 = vmul.f32 %v829, %v832
  %v835 = vmul.f32 %v817, %v657
  %v836 = vadd.f32 %v834, %v835
  %838 = vrot.lane.b32.xlu0 %v836, 96
  %v839 = vpop.permute.xlu0 %838
  %s841 = scalar_lea.vmem %s7, 12
  %842 = vst.msk [vmem:[%s841] sm:$0xf] %vm304, %v839
  %s843 = scalar_lea.vmem %s0, 16
  %v844 = vld [vmem:[%s843] sm:$0xf]
  %v846 = vsel %vm47, %v844, 0
  %848 = vmatprep.subr.mxu0 0.0
  %849 = vmatpush1.msra.mxu0 %v26
  %850 = vmatprep.subr.mxu0 0.0
  %851 = vmatpush1.msra.mxu0 %v27
  %852 = vmatprep.subr.mxu0 0.0
  %853 = vmatpush1.msra.mxu0 %v28
  %854 = vmatprep.subr.mxu0 0.0
  %855 = vmatpush1.msra.mxu0 %v29
  %856 = vmatprep.subr.mxu0 0.0
  %857 = vmatpush1.msra.mxu0 0.0
  %858 = vmatprep.subr.mxu0 0.0
  %859 = vmatpush1.msra.mxu0 0.0
  %860 = vmatprep.subr.mxu0 0.0
  %861 = vmatpush1.msra.mxu0 0.0
  %862 = vmatprep.subr.mxu0 0.0
  %863 = vmatpush1.msra.mxu0 0.0
  %864 = vmatprep.subr.mxu0 0.0
  %865 = vmatpush1.msra.mxu0 0.0
  %866 = vmatprep.subr.mxu0 0.0
  %867 = vmatpush1.msra.mxu0 0.0
  %868 = vmatprep.subr.mxu0 0.0
  %869 = vmatpush1.msra.mxu0 0.0
  %870 = vmatprep.subr.mxu0 0.0
  %871 = vmatpush1.msra.mxu0 0.0
  %872 = vmatprep.subr.mxu0 0.0
  %873 = vmatpush1.msra.mxu0 0.0
  %874 = vmatprep.subr.mxu0 0.0
  %875 = vmatpush1.msra.mxu0 0.0
  %876 = vmatprep.subr.mxu0 0.0
  %877 = vmatpush1.msra.mxu0 0.0
  %878 = vmatprep.subr.mxu0 0.0
  %879 = vmatpush1.msra.mxu0 0.0
  %880 = vmatprep.subr.mxu0 0.0
  %881 = vmatpush1.msra.mxu0 0.0
  %882 = vmatprep.subr.mxu0 0.0
  %883 = vmatpush1.msra.mxu0 0.0
  %884 = vmatprep.subr.mxu0 0.0
  %885 = vmatpush1.msra.mxu0 0.0
  %886 = vmatprep.subr.mxu0 0.0
  %887 = vmatpush1.msra.mxu0 0.0
  %888 = vmatprep.subr.mxu0 0.0
  %889 = vmatpush1.msra.mxu0 0.0
  %890 = vmatprep.subr.mxu0 0.0
  %891 = vmatpush1.msra.mxu0 0.0
  %892 = vmatprep.subr.mxu0 0.0
  %893 = vmatpush1.msra.mxu0 0.0
  %894 = vmatprep.subr.mxu0 0.0
  %895 = vmatpush1.msra.mxu0 0.0
  %896 = vmatprep.subr.mxu0 0.0
  %897 = vmatpush1.msra.mxu0 0.0
  %898 = vmatprep.subr.mxu0 0.0
  %899 = vmatpush1.msra.mxu0 0.0
  %900 = vmatprep.subr.mxu0 0.0
  %901 = vmatpush1.msra.mxu0 0.0
  %902 = vmatprep.subr.mxu0 0.0
  %903 = vmatpush1.msra.mxu0 0.0
  %904 = vmatprep.subr.mxu0 0.0
  %905 = vmatpush1.msra.mxu0 0.0
  %906 = vmatprep.subr.mxu0 0.0
  %907 = vmatpush1.msra.mxu0 0.0
  %908 = vmatprep.subr.mxu0 0.0
  %909 = vmatpush1.msra.mxu0 0.0
  %910 = vmatprep.subr.mxu0 0.0
  %911 = vmatpush1.msra.mxu0 0.0
  %912 = vmatprep.mubr.f32.mxu0 0.0
  %913 = vmatmul.mubr.f32.gmra.mrb[0].mxu0 %v846
  %v914 = vpop.f32.mrb[0].mxu0
  %v915 = vadd.f32 %v118, %v914
  %v916 = vpop.f32.mrb[0].mxu0
  %917 = vdwg.mxu0
  %v918 = vsel %vm47, %v839, 0
  %920 = vmatprep.subr.mxu0 0.0
  %921 = vmatpush1.msra.mxu0 %v30
  %922 = vmatprep.subr.mxu0 0.0
  %923 = vmatpush1.msra.mxu0 %v31
  %924 = vmatprep.subr.mxu0 0.0
  %925 = vmatpush1.msra.mxu0 %v32
  %926 = vmatprep.subr.mxu0 0.0
  %927 = vmatpush1.msra.mxu0 %v33
  %928 = vmatprep.subr.mxu0 0.0
  %929 = vmatpush1.msra.mxu0 0.0
  %930 = vmatprep.subr.mxu0 0.0
  %931 = vmatpush1.msra.mxu0 0.0
  %932 = vmatprep.subr.mxu0 0.0
  %933 = vmatpush1.msra.mxu0 0.0
  %934 = vmatprep.subr.mxu0 0.0
  %935 = vmatpush1.msra.mxu0 0.0
  %936 = vmatprep.subr.mxu0 0.0
  %937 = vmatpush1.msra.mxu0 0.0
  %938 = vmatprep.subr.mxu0 0.0
  %939 = vmatpush1.msra.mxu0 0.0
  %940 = vmatprep.subr.mxu0 0.0
  %941 = vmatpush1.msra.mxu0 0.0
  %942 = vmatprep.subr.mxu0 0.0
  %943 = vmatpush1.msra.mxu0 0.0
  %944 = vmatprep.subr.mxu0 0.0
  %945 = vmatpush1.msra.mxu0 0.0
  %946 = vmatprep.subr.mxu0 0.0
  %947 = vmatpush1.msra.mxu0 0.0
  %948 = vmatprep.subr.mxu0 0.0
  %949 = vmatpush1.msra.mxu0 0.0
  %950 = vmatprep.subr.mxu0 0.0
  %951 = vmatpush1.msra.mxu0 0.0
  %952 = vmatprep.subr.mxu0 0.0
  %953 = vmatpush1.msra.mxu0 0.0
  %954 = vmatprep.subr.mxu0 0.0
  %955 = vmatpush1.msra.mxu0 0.0
  %956 = vmatprep.subr.mxu0 0.0
  %957 = vmatpush1.msra.mxu0 0.0
  %958 = vmatprep.subr.mxu0 0.0
  %959 = vmatpush1.msra.mxu0 0.0
  %960 = vmatprep.subr.mxu0 0.0
  %961 = vmatpush1.msra.mxu0 0.0
  %962 = vmatprep.subr.mxu0 0.0
  %963 = vmatpush1.msra.mxu0 0.0
  %964 = vmatprep.subr.mxu0 0.0
  %965 = vmatpush1.msra.mxu0 0.0
  %966 = vmatprep.subr.mxu0 0.0
  %967 = vmatpush1.msra.mxu0 0.0
  %968 = vmatprep.subr.mxu0 0.0
  %969 = vmatpush1.msra.mxu0 0.0
  %970 = vmatprep.subr.mxu0 0.0
  %971 = vmatpush1.msra.mxu0 0.0
  %972 = vmatprep.subr.mxu0 0.0
  %973 = vmatpush1.msra.mxu0 0.0
  %974 = vmatprep.subr.mxu0 0.0
  %975 = vmatpush1.msra.mxu0 0.0
  %976 = vmatprep.subr.mxu0 0.0
  %977 = vmatpush1.msra.mxu0 0.0
  %978 = vmatprep.subr.mxu0 0.0
  %979 = vmatpush1.msra.mxu0 0.0
  %980 = vmatprep.subr.mxu0 0.0
  %981 = vmatpush1.msra.mxu0 0.0
  %982 = vmatprep.subr.mxu0 0.0
  %983 = vmatpush1.msra.mxu0 0.0
  %984 = vmatprep.mubr.f32.mxu0 0.0
  %985 = vmatmul.mubr.f32.gmra.mrb[0].mxu0 %v918
  %v986 = vpop.f32.mrb[0].mxu0
  %v987 = vadd.f32 %v199, %v986
  %v988 = vpop.f32.mrb[0].mxu0
  %989 = vdwg.mxu0
  %v990 = vadd.f32 %v915, %v987
  %v991 = vxor.u32 %v990, 2147483648
  %v992 = vmul.f32 %v991, 1.442695
  %v993 = vpow.pop %v992
  %v994 = vadd.f32 %v993, 1.0
  %v995 = vrcp.pop %v994
  %v996 = vmul.f32 1.0, %v995
  %998 = vrot.lane.b32.xlu0 %v987, 64
  %v999 = vpop.permute.xlu0 %998
  %v1001 = vmul.f32 %v996, %v999
  %1003 = vrot.lane.b32.xlu0 %v1001, 64
  %v1004 = vpop.permute.xlu0 %1003
  %v1006 = vadd.f32 %v915, %v1004
  %v1007 = vtanh.pop %v1006
  %v1008 = vsub.f32 1.0, %v996
  %1010 = vrot.lane.b32.xlu0 %v1007, 96
  %v1011 = vpop.permute.xlu0 %1010
  %v1013 = vmul.f32 %v1008, %v1011
  %v1014 = vmul.f32 %v996, %v836
  %v1015 = vadd.f32 %v1013, %v1014
  %1017 = vrot.lane.b32.xlu0 %v1015, 96
  %v1018 = vpop.permute.xlu0 %1017
  %s1020 = scalar_lea.vmem %s7, 16
  %1021 = vst.msk [vmem:[%s1020] sm:$0xf] %vm304, %v1018
  %s1022 = scalar_lea.vmem %s0, 20
  %v1023 = vld [vmem:[%s1022] sm:$0xf]
  %v1025 = vsel %vm47, %v1023, 0
  %1027 = vmatprep.subr.mxu0 0.0
  %1028 = vmatpush1.msra.mxu0 %v26
  %1029 = vmatprep.subr.mxu0 0.0
  %1030 = vmatpush1.msra.mxu0 %v27
  %1031 = vmatprep.subr.mxu0 0.0
  %1032 = vmatpush1.msra.mxu0 %v28
  %1033 = vmatprep.subr.mxu0 0.0
  %1034 = vmatpush1.msra.mxu0 %v29
  %1035 = vmatprep.subr.mxu0 0.0
  %1036 = vmatpush1.msra.mxu0 0.0
  %1037 = vmatprep.subr.mxu0 0.0
  %1038 = vmatpush1.msra.mxu0 0.0
  %1039 = vmatprep.subr.mxu0 0.0
  %1040 = vmatpush1.msra.mxu0 0.0
  %1041 = vmatprep.subr.mxu0 0.0
  %1042 = vmatpush1.msra.mxu0 0.0
  %1043 = vmatprep.subr.mxu0 0.0
  %1044 = vmatpush1.msra.mxu0 0.0
  %1045 = vmatprep.subr.mxu0 0.0
  %1046 = vmatpush1.msra.mxu0 0.0
  %1047 = vmatprep.subr.mxu0 0.0
  %1048 = vmatpush1.msra.mxu0 0.0
  %1049 = vmatprep.subr.mxu0 0.0
  %1050 = vmatpush1.msra.mxu0 0.0
  %1051 = vmatprep.subr.mxu0 0.0
  %1052 = vmatpush1.msra.mxu0 0.0
  %1053 = vmatprep.subr.mxu0 0.0
  %1054 = vmatpush1.msra.mxu0 0.0
  %1055 = vmatprep.subr.mxu0 0.0
  %1056 = vmatpush1.msra.mxu0 0.0
  %1057 = vmatprep.subr.mxu0 0.0
  %1058 = vmatpush1.msra.mxu0 0.0
  %1059 = vmatprep.subr.mxu0 0.0
  %1060 = vmatpush1.msra.mxu0 0.0
  %1061 = vmatprep.subr.mxu0 0.0
  %1062 = vmatpush1.msra.mxu0 0.0
  %1063 = vmatprep.subr.mxu0 0.0
  %1064 = vmatpush1.msra.mxu0 0.0
  %1065 = vmatprep.subr.mxu0 0.0
  %1066 = vmatpush1.msra.mxu0 0.0
  %1067 = vmatprep.subr.mxu0 0.0
  %1068 = vmatpush1.msra.mxu0 0.0
  %1069 = vmatprep.subr.mxu0 0.0
  %1070 = vmatpush1.msra.mxu0 0.0
  %1071 = vmatprep.subr.mxu0 0.0
  %1072 = vmatpush1.msra.mxu0 0.0
  %1073 = vmatprep.subr.mxu0 0.0
  %1074 = vmatpush1.msra.mxu0 0.0
  %1075 = vmatprep.subr.mxu0 0.0
  %1076 = vmatpush1.msra.mxu0 0.0
  %1077 = vmatprep.subr.mxu0 0.0
  %1078 = vmatpush1.msra.mxu0 0.0
  %1079 = vmatprep.subr.mxu0 0.0
  %1080 = vmatpush1.msra.mxu0 0.0
  %1081 = vmatprep.subr.mxu0 0.0
  %1082 = vmatpush1.msra.mxu0 0.0
  %1083 = vmatprep.subr.mxu0 0.0
  %1084 = vmatpush1.msra.mxu0 0.0
  %1085 = vmatprep.subr.mxu0 0.0
  %1086 = vmatpush1.msra.mxu0 0.0
  %1087 = vmatprep.subr.mxu0 0.0
  %1088 = vmatpush1.msra.mxu0 0.0
  %1089 = vmatprep.subr.mxu0 0.0
  %1090 = vmatpush1.msra.mxu0 0.0
  %1091 = vmatprep.mubr.f32.mxu0 0.0
  %1092 = vmatmul.mubr.f32.gmra.mrb[0].mxu0 %v1025
  %v1093 = vpop.f32.mrb[0].mxu0
  %v1094 = vadd.f32 %v118, %v1093
  %v1095 = vpop.f32.mrb[0].mxu0
  %1096 = vdwg.mxu0
  %v1097 = vsel %vm47, %v1018, 0
  %1099 = vmatprep.subr.mxu0 0.0
  %1100 = vmatpush1.msra.mxu0 %v30
  %1101 = vmatprep.subr.mxu0 0.0
  %1102 = vmatpush1.msra.mxu0 %v31
  %1103 = vmatprep.subr.mxu0 0.0
  %1104 = vmatpush1.msra.mxu0 %v32
  %1105 = vmatprep.subr.mxu0 0.0
  %1106 = vmatpush1.msra.mxu0 %v33
  %1107 = vmatprep.subr.mxu0 0.0
  %1108 = vmatpush1.msra.mxu0 0.0
  %1109 = vmatprep.subr.mxu0 0.0
  %1110 = vmatpush1.msra.mxu0 0.0
  %1111 = vmatprep.subr.mxu0 0.0
  %1112 = vmatpush1.msra.mxu0 0.0
  %1113 = vmatprep.subr.mxu0 0.0
  %1114 = vmatpush1.msra.mxu0 0.0
  %1115 = vmatprep.subr.mxu0 0.0
  %1116 = vmatpush1.msra.mxu0 0.0
  %1117 = vmatprep.subr.mxu0 0.0
  %1118 = vmatpush1.msra.mxu0 0.0
  %1119 = vmatprep.subr.mxu0 0.0
  %1120 = vmatpush1.msra.mxu0 0.0
  %1121 = vmatprep.subr.mxu0 0.0
  %1122 = vmatpush1.msra.mxu0 0.0
  %1123 = vmatprep.subr.mxu0 0.0
  %1124 = vmatpush1.msra.mxu0 0.0
  %1125 = vmatprep.subr.mxu0 0.0
  %1126 = vmatpush1.msra.mxu0 0.0
  %1127 = vmatprep.subr.mxu0 0.0
  %1128 = vmatpush1.msra.mxu0 0.0
  %1129 = vmatprep.subr.mxu0 0.0
  %1130 = vmatpush1.msra.mxu0 0.0
  %1131 = vmatprep.subr.mxu0 0.0
  %1132 = vmatpush1.msra.mxu0 0.0
  %1133 = vmatprep.subr.mxu0 0.0
  %1134 = vmatpush1.msra.mxu0 0.0
  %1135 = vmatprep.subr.mxu0 0.0
  %1136 = vmatpush1.msra.mxu0 0.0
  %1137 = vmatprep.subr.mxu0 0.0
  %1138 = vmatpush1.msra.mxu0 0.0
  %1139 = vmatprep.subr.mxu0 0.0
  %1140 = vmatpush1.msra.mxu0 0.0
  %1141 = vmatprep.subr.mxu0 0.0
  %1142 = vmatpush1.msra.mxu0 0.0
  %1143 = vmatprep.subr.mxu0 0.0
  %1144 = vmatpush1.msra.mxu0 0.0
  %1145 = vmatprep.subr.mxu0 0.0
  %1146 = vmatpush1.msra.mxu0 0.0
  %1147 = vmatprep.subr.mxu0 0.0
  %1148 = vmatpush1.msra.mxu0 0.0
  %1149 = vmatprep.subr.mxu0 0.0
  %1150 = vmatpush1.msra.mxu0 0.0
  %1151 = vmatprep.subr.mxu0 0.0
  %1152 = vmatpush1.msra.mxu0 0.0
  %1153 = vmatprep.subr.mxu0 0.0
  %1154 = vmatpush1.msra.mxu0 0.0
  %1155 = vmatprep.subr.mxu0 0.0
  %1156 = vmatpush1.msra.mxu0 0.0
  %1157 = vmatprep.subr.mxu0 0.0
  %1158 = vmatpush1.msra.mxu0 0.0
  %1159 = vmatprep.subr.mxu0 0.0
  %1160 = vmatpush1.msra.mxu0 0.0
  %1161 = vmatprep.subr.mxu0 0.0
  %1162 = vmatpush1.msra.mxu0 0.0
  %1163 = vmatprep.mubr.f32.mxu0 0.0
  %1164 = vmatmul.mubr.f32.gmra.mrb[0].mxu0 %v1097
  %v1165 = vpop.f32.mrb[0].mxu0
  %v1166 = vadd.f32 %v199, %v1165
  %v1167 = vpop.f32.mrb[0].mxu0
  %1168 = vdwg.mxu0
  %v1169 = vadd.f32 %v1094, %v1166
  %v1170 = vxor.u32 %v1169, 2147483648
  %v1171 = vmul.f32 %v1170, 1.442695
  %v1172 = vpow.pop %v1171
  %v1173 = vadd.f32 %v1172, 1.0
  %v1174 = vrcp.pop %v1173
  %v1175 = vmul.f32 1.0, %v1174
  %1177 = vrot.lane.b32.xlu0 %v1166, 64
  %v1178 = vpop.permute.xlu0 %1177
  %v1180 = vmul.f32 %v1175, %v1178
  %1182 = vrot.lane.b32.xlu0 %v1180, 64
  %v1183 = vpop.permute.xlu0 %1182
  %v1185 = vadd.f32 %v1094, %v1183
  %v1186 = vtanh.pop %v1185
  %v1187 = vsub.f32 1.0, %v1175
  %1189 = vrot.lane.b32.xlu0 %v1186, 96
  %v1190 = vpop.permute.xlu0 %1189
  %v1192 = vmul.f32 %v1187, %v1190
  %v1193 = vmul.f32 %v1175, %v1015
  %v1194 = vadd.f32 %v1192, %v1193
  %1196 = vrot.lane.b32.xlu0 %v1194, 96
  %v1197 = vpop.permute.xlu0 %1196
  %s1199 = scalar_lea.vmem %s7, 20
  %1200 = vst.msk [vmem:[%s1199] sm:$0xf] %vm304, %v1197
  %s1201 = scalar_lea.vmem %s0, 24
  %v1202 = vld [vmem:[%s1201] sm:$0xf]
  %v1204 = vsel %vm47, %v1202, 0
  %1206 = vmatprep.subr.mxu0 0.0
  %1207 = vmatpush1.msra.mxu0 %v26
  %1208 = vmatprep.subr.mxu0 0.0
  %1209 = vmatpush1.msra.mxu0 %v27
  %1210 = vmatprep.subr.mxu0 0.0
  %1211 = vmatpush1.msra.mxu0 %v28
  %1212 = vmatprep.subr.mxu0 0.0
  %1213 = vmatpush1.msra.mxu0 %v29
  %1214 = vmatprep.subr.mxu0 0.0
  %1215 = vmatpush1.msra.mxu0 0.0
  %1216 = vmatprep.subr.mxu0 0.0
  %1217 = vmatpush1.msra.mxu0 0.0
  %1218 = vmatprep.subr.mxu0 0.0
  %1219 = vmatpush1.msra.mxu0 0.0
  %1220 = vmatprep.subr.mxu0 0.0
  %1221 = vmatpush1.msra.mxu0 0.0
  %1222 = vmatprep.subr.mxu0 0.0
  %1223 = vmatpush1.msra.mxu0 0.0
  %1224 = vmatprep.subr.mxu0 0.0
  %1225 = vmatpush1.msra.mxu0 0.0
  %1226 = vmatprep.subr.mxu0 0.0
  %1227 = vmatpush1.msra.mxu0 0.0
  %1228 = vmatprep.subr.mxu0 0.0
  %1229 = vmatpush1.msra.mxu0 0.0
  %1230 = vmatprep.subr.mxu0 0.0
  %1231 = vmatpush1.msra.mxu0 0.0
  %1232 = vmatprep.subr.mxu0 0.0
  %1233 = vmatpush1.msra.mxu0 0.0
  %1234 = vmatprep.subr.mxu0 0.0
  %1235 = vmatpush1.msra.mxu0 0.0
  %1236 = vmatprep.subr.mxu0 0.0
  %1237 = vmatpush1.msra.mxu0 0.0
  %1238 = vmatprep.subr.mxu0 0.0
  %1239 = vmatpush1.msra.mxu0 0.0
  %1240 = vmatprep.subr.mxu0 0.0
  %1241 = vmatpush1.msra.mxu0 0.0
  %1242 = vmatprep.subr.mxu0 0.0
  %1243 = vmatpush1.msra.mxu0 0.0
  %1244 = vmatprep.subr.mxu0 0.0
  %1245 = vmatpush1.msra.mxu0 0.0
  %1246 = vmatprep.subr.mxu0 0.0
  %1247 = vmatpush1.msra.mxu0 0.0
  %1248 = vmatprep.subr.mxu0 0.0
  %1249 = vmatpush1.msra.mxu0 0.0
  %1250 = vmatprep.subr.mxu0 0.0
  %1251 = vmatpush1.msra.mxu0 0.0
  %1252 = vmatprep.subr.mxu0 0.0
  %1253 = vmatpush1.msra.mxu0 0.0
  %1254 = vmatprep.subr.mxu0 0.0
  %1255 = vmatpush1.msra.mxu0 0.0
  %1256 = vmatprep.subr.mxu0 0.0
  %1257 = vmatpush1.msra.mxu0 0.0
  %1258 = vmatprep.subr.mxu0 0.0
  %1259 = vmatpush1.msra.mxu0 0.0
  %1260 = vmatprep.subr.mxu0 0.0
  %1261 = vmatpush1.msra.mxu0 0.0
  %1262 = vmatprep.subr.mxu0 0.0
  %1263 = vmatpush1.msra.mxu0 0.0
  %1264 = vmatprep.subr.mxu0 0.0
  %1265 = vmatpush1.msra.mxu0 0.0
  %1266 = vmatprep.subr.mxu0 0.0
  %1267 = vmatpush1.msra.mxu0 0.0
  %1268 = vmatprep.subr.mxu0 0.0
  %1269 = vmatpush1.msra.mxu0 0.0
  %1270 = vmatprep.mubr.f32.mxu0 0.0
  %1271 = vmatmul.mubr.f32.gmra.mrb[0].mxu0 %v1204
  %v1272 = vpop.f32.mrb[0].mxu0
  %v1273 = vadd.f32 %v118, %v1272
  %v1274 = vpop.f32.mrb[0].mxu0
  %1275 = vdwg.mxu0
  %v1276 = vsel %vm47, %v1197, 0
  %1278 = vmatprep.subr.mxu0 0.0
  %1279 = vmatpush1.msra.mxu0 %v30
  %1280 = vmatprep.subr.mxu0 0.0
  %1281 = vmatpush1.msra.mxu0 %v31
  %1282 = vmatprep.subr.mxu0 0.0
  %1283 = vmatpush1.msra.mxu0 %v32
  %1284 = vmatprep.subr.mxu0 0.0
  %1285 = vmatpush1.msra.mxu0 %v33
  %1286 = vmatprep.subr.mxu0 0.0
  %1287 = vmatpush1.msra.mxu0 0.0
  %1288 = vmatprep.subr.mxu0 0.0
  %1289 = vmatpush1.msra.mxu0 0.0
  %1290 = vmatprep.subr.mxu0 0.0
  %1291 = vmatpush1.msra.mxu0 0.0
  %1292 = vmatprep.subr.mxu0 0.0
  %1293 = vmatpush1.msra.mxu0 0.0
  %1294 = vmatprep.subr.mxu0 0.0
  %1295 = vmatpush1.msra.mxu0 0.0
  %1296 = vmatprep.subr.mxu0 0.0
  %1297 = vmatpush1.msra.mxu0 0.0
  %1298 = vmatprep.subr.mxu0 0.0
  %1299 = vmatpush1.msra.mxu0 0.0
  %1300 = vmatprep.subr.mxu0 0.0
  %1301 = vmatpush1.msra.mxu0 0.0
  %1302 = vmatprep.subr.mxu0 0.0
  %1303 = vmatpush1.msra.mxu0 0.0
  %1304 = vmatprep.subr.mxu0 0.0
  %1305 = vmatpush1.msra.mxu0 0.0
  %1306 = vmatprep.subr.mxu0 0.0
  %1307 = vmatpush1.msra.mxu0 0.0
  %1308 = vmatprep.subr.mxu0 0.0
  %1309 = vmatpush1.msra.mxu0 0.0
  %1310 = vmatprep.subr.mxu0 0.0
  %1311 = vmatpush1.msra.mxu0 0.0
  %1312 = vmatprep.subr.mxu0 0.0
  %1313 = vmatpush1.msra.mxu0 0.0
  %1314 = vmatprep.subr.mxu0 0.0
  %1315 = vmatpush1.msra.mxu0 0.0
  %1316 = vmatprep.subr.mxu0 0.0
  %1317 = vmatpush1.msra.mxu0 0.0
  %1318 = vmatprep.subr.mxu0 0.0
  %1319 = vmatpush1.msra.mxu0 0.0
  %1320 = vmatprep.subr.mxu0 0.0
  %1321 = vmatpush1.msra.mxu0 0.0
  %1322 = vmatprep.subr.mxu0 0.0
  %1323 = vmatpush1.msra.mxu0 0.0
  %1324 = vmatprep.subr.mxu0 0.0
  %1325 = vmatpush1.msra.mxu0 0.0
  %1326 = vmatprep.subr.mxu0 0.0
  %1327 = vmatpush1.msra.mxu0 0.0
  %1328 = vmatprep.subr.mxu0 0.0
  %1329 = vmatpush1.msra.mxu0 0.0
  %1330 = vmatprep.subr.mxu0 0.0
  %1331 = vmatpush1.msra.mxu0 0.0
  %1332 = vmatprep.subr.mxu0 0.0
  %1333 = vmatpush1.msra.mxu0 0.0
  %1334 = vmatprep.subr.mxu0 0.0
  %1335 = vmatpush1.msra.mxu0 0.0
  %1336 = vmatprep.subr.mxu0 0.0
  %1337 = vmatpush1.msra.mxu0 0.0
  %1338 = vmatprep.subr.mxu0 0.0
  %1339 = vmatpush1.msra.mxu0 0.0
  %1340 = vmatprep.subr.mxu0 0.0
  %1341 = vmatpush1.msra.mxu0 0.0
  %1342 = vmatprep.mubr.f32.mxu0 0.0
  %1343 = vmatmul.mubr.f32.gmra.mrb[0].mxu0 %v1276
  %v1344 = vpop.f32.mrb[0].mxu0
  %v1345 = vadd.f32 %v199, %v1344
  %v1346 = vpop.f32.mrb[0].mxu0
  %1347 = vdwg.mxu0
  %v1348 = vadd.f32 %v1273, %v1345
  %v1349 = vxor.u32 %v1348, 2147483648
  %v1350 = vmul.f32 %v1349, 1.442695
  %v1351 = vpow.pop %v1350
  %v1352 = vadd.f32 %v1351, 1.0
  %v1353 = vrcp.pop %v1352
  %v1354 = vmul.f32 1.0, %v1353
  %1356 = vrot.lane.b32.xlu0 %v1345, 64
  %v1357 = vpop.permute.xlu0 %1356
  %v1359 = vmul.f32 %v1354, %v1357
  %1361 = vrot.lane.b32.xlu0 %v1359, 64
  %v1362 = vpop.permute.xlu0 %1361
  %v1364 = vadd.f32 %v1273, %v1362
  %v1365 = vtanh.pop %v1364
  %v1366 = vsub.f32 1.0, %v1354
  %1368 = vrot.lane.b32.xlu0 %v1365, 96
  %v1369 = vpop.permute.xlu0 %1368
  %v1371 = vmul.f32 %v1366, %v1369
  %v1372 = vmul.f32 %v1354, %v1194
  %v1373 = vadd.f32 %v1371, %v1372
  %1375 = vrot.lane.b32.xlu0 %v1373, 96
  %v1376 = vpop.permute.xlu0 %1375
  %s1378 = scalar_lea.vmem %s7, 24
  %1379 = vst.msk [vmem:[%s1378] sm:$0xf] %vm304, %v1376
  %s1380 = scalar_lea.vmem %s0, 28
  %v1381 = vld [vmem:[%s1380] sm:$0xf]
  %v1383 = vsel %vm47, %v1381, 0
  %1385 = vmatprep.subr.mxu0 0.0
  %1386 = vmatpush1.msra.mxu0 %v26
  %1387 = vmatprep.subr.mxu0 0.0
  %1388 = vmatpush1.msra.mxu0 %v27
  %1389 = vmatprep.subr.mxu0 0.0
  %1390 = vmatpush1.msra.mxu0 %v28
  %1391 = vmatprep.subr.mxu0 0.0
  %1392 = vmatpush1.msra.mxu0 %v29
  %1393 = vmatprep.subr.mxu0 0.0
  %1394 = vmatpush1.msra.mxu0 0.0
  %1395 = vmatprep.subr.mxu0 0.0
  %1396 = vmatpush1.msra.mxu0 0.0
  %1397 = vmatprep.subr.mxu0 0.0
  %1398 = vmatpush1.msra.mxu0 0.0
  %1399 = vmatprep.subr.mxu0 0.0
  %1400 = vmatpush1.msra.mxu0 0.0
  %1401 = vmatprep.subr.mxu0 0.0
  %1402 = vmatpush1.msra.mxu0 0.0
  %1403 = vmatprep.subr.mxu0 0.0
  %1404 = vmatpush1.msra.mxu0 0.0
  %1405 = vmatprep.subr.mxu0 0.0
  %1406 = vmatpush1.msra.mxu0 0.0
  %1407 = vmatprep.subr.mxu0 0.0
  %1408 = vmatpush1.msra.mxu0 0.0
  %1409 = vmatprep.subr.mxu0 0.0
  %1410 = vmatpush1.msra.mxu0 0.0
  %1411 = vmatprep.subr.mxu0 0.0
  %1412 = vmatpush1.msra.mxu0 0.0
  %1413 = vmatprep.subr.mxu0 0.0
  %1414 = vmatpush1.msra.mxu0 0.0
  %1415 = vmatprep.subr.mxu0 0.0
  %1416 = vmatpush1.msra.mxu0 0.0
  %1417 = vmatprep.subr.mxu0 0.0
  %1418 = vmatpush1.msra.mxu0 0.0
  %1419 = vmatprep.subr.mxu0 0.0
  %1420 = vmatpush1.msra.mxu0 0.0
  %1421 = vmatprep.subr.mxu0 0.0
  %1422 = vmatpush1.msra.mxu0 0.0
  %1423 = vmatprep.subr.mxu0 0.0
  %1424 = vmatpush1.msra.mxu0 0.0
  %1425 = vmatprep.subr.mxu0 0.0
  %1426 = vmatpush1.msra.mxu0 0.0
  %1427 = vmatprep.subr.mxu0 0.0
  %1428 = vmatpush1.msra.mxu0 0.0
  %1429 = vmatprep.subr.mxu0 0.0
  %1430 = vmatpush1.msra.mxu0 0.0
  %1431 = vmatprep.subr.mxu0 0.0
  %1432 = vmatpush1.msra.mxu0 0.0
  %1433 = vmatprep.subr.mxu0 0.0
  %1434 = vmatpush1.msra.mxu0 0.0
  %1435 = vmatprep.subr.mxu0 0.0
  %1436 = vmatpush1.msra.mxu0 0.0
  %1437 = vmatprep.subr.mxu0 0.0
  %1438 = vmatpush1.msra.mxu0 0.0
  %1439 = vmatprep.subr.mxu0 0.0
  %1440 = vmatpush1.msra.mxu0 0.0
  %1441 = vmatprep.subr.mxu0 0.0
  %1442 = vmatpush1.msra.mxu0 0.0
  %1443 = vmatprep.subr.mxu0 0.0
  %1444 = vmatpush1.msra.mxu0 0.0
  %1445 = vmatprep.subr.mxu0 0.0
  %1446 = vmatpush1.msra.mxu0 0.0
  %1447 = vmatprep.subr.mxu0 0.0
  %1448 = vmatpush1.msra.mxu0 0.0
  %1449 = vmatprep.mubr.f32.mxu0 0.0
  %1450 = vmatmul.mubr.f32.gmra.mrb[0].mxu0 %v1383
  %v1451 = vpop.f32.mrb[0].mxu0
  %v1452 = vadd.f32 %v118, %v1451
  %v1453 = vpop.f32.mrb[0].mxu0
  %1454 = vdwg.mxu0
  %v1455 = vsel %vm47, %v1376, 0
  %1457 = vmatprep.subr.mxu0 0.0
  %1458 = vmatpush1.msra.mxu0 %v30
  %1459 = vmatprep.subr.mxu0 0.0
  %1460 = vmatpush1.msra.mxu0 %v31
  %1461 = vmatprep.subr.mxu0 0.0
  %1462 = vmatpush1.msra.mxu0 %v32
  %1463 = vmatprep.subr.mxu0 0.0
  %1464 = vmatpush1.msra.mxu0 %v33
  %1465 = vmatprep.subr.mxu0 0.0
  %1466 = vmatpush1.msra.mxu0 0.0
  %1467 = vmatprep.subr.mxu0 0.0
  %1468 = vmatpush1.msra.mxu0 0.0
  %1469 = vmatprep.subr.mxu0 0.0
  %1470 = vmatpush1.msra.mxu0 0.0
  %1471 = vmatprep.subr.mxu0 0.0
  %1472 = vmatpush1.msra.mxu0 0.0
  %1473 = vmatprep.subr.mxu0 0.0
  %1474 = vmatpush1.msra.mxu0 0.0
  %1475 = vmatprep.subr.mxu0 0.0
  %1476 = vmatpush1.msra.mxu0 0.0
  %1477 = vmatprep.subr.mxu0 0.0
  %1478 = vmatpush1.msra.mxu0 0.0
  %1479 = vmatprep.subr.mxu0 0.0
  %1480 = vmatpush1.msra.mxu0 0.0
  %1481 = vmatprep.subr.mxu0 0.0
  %1482 = vmatpush1.msra.mxu0 0.0
  %1483 = vmatprep.subr.mxu0 0.0
  %1484 = vmatpush1.msra.mxu0 0.0
  %1485 = vmatprep.subr.mxu0 0.0
  %1486 = vmatpush1.msra.mxu0 0.0
  %1487 = vmatprep.subr.mxu0 0.0
  %1488 = vmatpush1.msra.mxu0 0.0
  %1489 = vmatprep.subr.mxu0 0.0
  %1490 = vmatpush1.msra.mxu0 0.0
  %1491 = vmatprep.subr.mxu0 0.0
  %1492 = vmatpush1.msra.mxu0 0.0
  %1493 = vmatprep.subr.mxu0 0.0
  %1494 = vmatpush1.msra.mxu0 0.0
  %1495 = vmatprep.subr.mxu0 0.0
  %1496 = vmatpush1.msra.mxu0 0.0
  %1497 = vmatprep.subr.mxu0 0.0
  %1498 = vmatpush1.msra.mxu0 0.0
  %1499 = vmatprep.subr.mxu0 0.0
  %1500 = vmatpush1.msra.mxu0 0.0
  %1501 = vmatprep.subr.mxu0 0.0
  %1502 = vmatpush1.msra.mxu0 0.0
  %1503 = vmatprep.subr.mxu0 0.0
  %1504 = vmatpush1.msra.mxu0 0.0
  %1505 = vmatprep.subr.mxu0 0.0
  %1506 = vmatpush1.msra.mxu0 0.0
  %1507 = vmatprep.subr.mxu0 0.0
  %1508 = vmatpush1.msra.mxu0 0.0
  %1509 = vmatprep.subr.mxu0 0.0
  %1510 = vmatpush1.msra.mxu0 0.0
  %1511 = vmatprep.subr.mxu0 0.0
  %1512 = vmatpush1.msra.mxu0 0.0
  %1513 = vmatprep.subr.mxu0 0.0
  %1514 = vmatpush1.msra.mxu0 0.0
  %1515 = vmatprep.subr.mxu0 0.0
  %1516 = vmatpush1.msra.mxu0 0.0
  %1517 = vmatprep.subr.mxu0 0.0
  %1518 = vmatpush1.msra.mxu0 0.0
  %1519 = vmatprep.subr.mxu0 0.0
  %1520 = vmatpush1.msra.mxu0 0.0
  %1521 = vmatprep.mubr.f32.mxu0 0.0
  %1522 = vmatmul.mubr.f32.gmra.mrb[0].mxu0 %v1455
  %v1523 = vpop.f32.mrb[0].mxu0
  %v1524 = vadd.f32 %v199, %v1523
  %v1525 = vpop.f32.mrb[0].mxu0
  %1526 = vdwg.mxu0
  %v1527 = vadd.f32 %v1452, %v1524
  %v1528 = vxor.u32 %v1527, 2147483648
  %v1529 = vmul.f32 %v1528, 1.442695
  %v1530 = vpow.pop %v1529
  %v1531 = vadd.f32 %v1530, 1.0
  %v1532 = vrcp.pop %v1531
  %v1533 = vmul.f32 1.0, %v1532
  %1535 = vrot.lane.b32.xlu0 %v1524, 64
  %v1536 = vpop.permute.xlu0 %1535
  %v1538 = vmul.f32 %v1533, %v1536
  %1540 = vrot.lane.b32.xlu0 %v1538, 64
  %v1541 = vpop.permute.xlu0 %1540
  %v1543 = vadd.f32 %v1452, %v1541
  %v1544 = vtanh.pop %v1543
  %v1545 = vsub.f32 1.0, %v1533
  %1547 = vrot.lane.b32.xlu0 %v1544, 96
  %v1548 = vpop.permute.xlu0 %1547
  %v1550 = vmul.f32 %v1545, %v1548
  %v1551 = vmul.f32 %v1533, %v1373
  %v1552 = vadd.f32 %v1550, %v1551
  %1554 = vrot.lane.b32.xlu0 %v1552, 96
  %v1555 = vpop.permute.xlu0 %1554
  %s1557 = scalar_lea.vmem %s7, 28
  %1558 = vst.msk [vmem:[%s1557] sm:$0xf] %vm304, %v1555
  // Predicated region
  $region30: #{encoder_decoder_forward.4} parent=0 // pred_check
    _
  $region31: #{encoder_decoder_forward.4} parent=0 // pred_check_branch
    %1560 = sbr.rel (0) target = $region33
  $region32: #{encoder_decoder_forward.4} parent=0 // pred_region
    _
  $region33: #{encoder_decoder_forward.4} parent=0 // pred_fallthru
    _
  // Predicated region
  $region34: #{encoder_decoder_forward.4} parent=0 // pred_check
    _
  $region35: #{encoder_decoder_forward.4} parent=0 // pred_check_branch
    %1562 = sbr.rel (0) target = $region37
  $region36: #{encoder_decoder_forward.4} parent=0 // pred_region
    _
  $region37: #{encoder_decoder_forward.4} parent=0 // pred_fallthru
    _

</llo_original>
